<compile_context>
chip_gen: v5e
topology: v5e:2x2
jax: 0.10.0
libtpu: 0.0.40
codegen_flags: <defaults>
</compile_context>

<pallas_src>
import functools

import jax
import jax.numpy as jnp
from jax import lax
from jax.experimental import pallas as pl
from jax.experimental.pallas import tpu as pltpu

_VMEM_LIMIT = 32 * 1024 * 1024  # conservative across v5e / v6e / v7x


def _pick_tile_m(m, cap=512):
    """Largest multiple-of-8 tile <= cap that divides m (else the full dim)."""
    for t in (cap, 256, 128, 64, 32, 16, 8):
        if t <= m and m % t == 0:
            return t
    return m


# -----------------------------------------------------------------------------
# Kernel 1: conv1 (1x1) + BN + ReLU, output written grouped as (scale, M, width)
# so the fused branch kernel can index branches with clean BlockSpecs (no
# XLA-side channel slicing).
# -----------------------------------------------------------------------------
def _conv1_kernel(x_ref, w_ref, s_ref, b_ref, o_ref, *, groups):
    x = x_ref[...].astype(jnp.bfloat16)                       # (TM, Cin)
    for j in range(groups):                                   # static unroll
        y = jnp.dot(x, w_ref[j], preferred_element_type=jnp.float32)
        o_ref[j] = jnp.maximum(y * s_ref[j] + b_ref[j], 0.0)  # f32 epilogue


def conv1_grouped(x_nhwc, w_g, s_g, b_g):
    N, H, W, cin = x_nhwc.shape
    groups, _, gw = w_g.shape
    M = N * H * W
    xf = x_nhwc.reshape(M, cin)
    TM = _pick_tile_m(M)
    kern = functools.partial(_conv1_kernel, groups=groups)
    return pl.pallas_call(
        kern,
        out_shape=jax.ShapeDtypeStruct((groups, M, gw), jnp.float32),
        grid=(M // TM,),
        in_specs=[
            pl.BlockSpec((TM, cin), lambda m: (m, 0)),
            pl.BlockSpec((groups, cin, gw), lambda m: (0, 0, 0)),
            pl.BlockSpec((groups, 1, gw), lambda m: (0, 0, 0)),
            pl.BlockSpec((groups, 1, gw), lambda m: (0, 0, 0)),
        ],
        out_specs=pl.BlockSpec((groups, TM, gw), lambda m: (0, m, 0)),
        compiler_params=pltpu.CompilerParams(
            dimension_semantics=("parallel",),
            vmem_limit_bytes=_VMEM_LIMIT),
    )(xf, w_g, s_g, b_g)


# -----------------------------------------------------------------------------
# Kernel 2 (fused branch): for each (batch n, branch i):
#     x_in = spx_i (+ carry)                    [carry = previous branch output]
#     y    = ReLU(BN_i(conv3x3_i(x_in)))
#     out  = ReLU( dw3x3+BN folded into 9 pointwise taps (x: y) + bias )
# Halo handled with a zeroed VMEM scratch (no wrapper-side jnp.pad).
# -----------------------------------------------------------------------------
def _branch_kernel(spx_ref, wconv_ref, s_ref, b_ref, wcf_ref, bcf_ref,
                   o_ref, pad_sc, carry_sc, *, H, W, C, stype):
    i = pl.program_id(1)
    HW = H * W
    COL = 8  # sublane-aligned column offset of the interior inside pad_sc

    # Zero the halo scratch: the untouched border supplies the "padding=1" taps.
    pad_sc[...] = jnp.zeros_like(pad_sc)

    spx = spx_ref[0, 0]                                        # (H, W, C) f32
    if stype == "stage":
        x_in = spx
    else:
        @pl.when(i == 0)
        def _init_carry():
            carry_sc[...] = jnp.zeros_like(carry_sc)
        x_in = spx + carry_sc[...]

    def conv3x3_from_pad(tap_weight):
        # 9 shifted MXU matmuls accumulated in f32 (aligned slices only).
        # TODO(synk): for larger `width` an im2col (HW, 9C) single matmul or a
        # pltpu.roll formulation would raise MXU utilization further.
        acc = jnp.zeros((HW, C), jnp.float32)
        for ky in range(3):
            for kx in range(3):
                tap = pad_sc[ky:ky + H, COL - 1 + kx:COL - 1 + kx + W, :]
                tap = tap.reshape(HW, C).astype(jnp.bfloat16)
                acc = acc + jnp.dot(tap, tap_weight(ky * 3 + kx),
                                    preferred_element_type=jnp.float32)
        return acc

    # convs[i] : 3x3 conv -> BN -> ReLU
    pad_sc[1:H + 1, COL:COL + W, :] = x_in
    y = jnp.maximum(conv3x3_from_pad(lambda k: wconv_ref[0, k])
                    * s_ref[0] + b_ref[0], 0.0)                # (HW, C) f32

    # Context_Flow : depthwise 3x3 + BN folded into the 1x1 pointwise, -> ReLU
    pad_sc[1:H + 1, COL:COL + W, :] = y.reshape(H, W, C)
    z = jnp.maximum(conv3x3_from_pad(lambda k: wcf_ref[k]) + bcf_ref[...], 0.0)

    res = z.reshape(H, W, C)
    o_ref[0, 0] = res
    if stype != "stage":
        carry_sc[...] = res                                    # feeds branch i+1


def fused_branches(spx_g, wconvs, bns_s, bns_b, wcf, bcf, *, N, H, W, width, stype):
    nums = spx_g.shape[0]
    spx5 = spx_g.reshape(nums, N, H, W, width)                 # metadata reshape
    kern = functools.partial(_branch_kernel, H=H, W=W, C=width, stype=stype)
    return pl.pallas_call(
        kern,
        out_shape=jax.ShapeDtypeStruct((nums, N, H, W, width), jnp.float32),
        grid=(N, nums),
        in_specs=[
            pl.BlockSpec((1, 1, H, W, width), lambda n, i: (i, n, 0, 0, 0)),
            pl.BlockSpec((1, 9, width, width), lambda n, i: (i, 0, 0, 0)),
            pl.BlockSpec((1, 1, width), lambda n, i: (i, 0, 0)),
            pl.BlockSpec((1, 1, width), lambda n, i: (i, 0, 0)),
            pl.BlockSpec((9, width, width), lambda n, i: (0, 0, 0)),
            pl.BlockSpec((1, width), lambda n, i: (0, 0)),
        ],
        out_specs=pl.BlockSpec((1, 1, H, W, width), lambda n, i: (i, n, 0, 0, 0)),
        scratch_shapes=[
            pltpu.VMEM((H + 2, W + 16, width), jnp.float32),   # halo scratch
            pltpu.VMEM((H, W, width), jnp.float32),            # branch carry
        ],
        compiler_params=pltpu.CompilerParams(
            dimension_semantics=("parallel", "arbitrary"),
            vmem_limit_bytes=_VMEM_LIMIT),
    )(spx5, wconvs, bns_s, bns_b, wcf, bcf)


# -----------------------------------------------------------------------------
# Kernel 3: conv3 (1x1 over concatenated branches) + BN + ReLU.
# Consumes the grouped (nums, M, width) layout directly (no concatenate).
# -----------------------------------------------------------------------------
def _conv3_kernel(x_ref, w_ref, s_ref, b_ref, o_ref, *, nums):
    acc = jnp.zeros(o_ref.shape, jnp.float32)
    for j in range(nums):                                      # static unroll
        acc = acc + jnp.dot(x_ref[j].astype(jnp.bfloat16), w_ref[j],
                            preferred_element_type=jnp.float32)
    o_ref[...] = jnp.maximum(acc * s_ref[...] + b_ref[...], 0.0)


def conv3_from_groups(x_g, w_g, s, b):
    nums, M, gw = x_g.shape
    planes = w_g.shape[-1]
    TM = _pick_tile_m(M)
    kern = functools.partial(_conv3_kernel, nums=nums)
    return pl.pallas_call(
        kern,
        out_shape=jax.ShapeDtypeStruct((M, planes), jnp.float32),
        grid=(M // TM,),
        in_specs=[
            pl.BlockSpec((nums, TM, gw), lambda m: (0, m, 0)),
            pl.BlockSpec((nums, gw, planes), lambda m: (0, 0, 0)),
            pl.BlockSpec((1, planes), lambda m: (0, 0)),
            pl.BlockSpec((1, planes), lambda m: (0, 0)),
        ],
        out_specs=pl.BlockSpec((TM, planes), lambda m: (m, 0)),
        compiler_params=pltpu.CompilerParams(
            dimension_semantics=("parallel",),
            vmem_limit_bytes=_VMEM_LIMIT),
    )(x_g, w_g, s.reshape(1, planes), b.reshape(1, planes))


# -----------------------------------------------------------------------------
# Parameters (deterministic, synthetic); BN folded to (scale, bias).
# -----------------------------------------------------------------------------
def _folded_bn(c, idx):
    eps = 1e-5
    a = jnp.arange(c, dtype=jnp.float32)
    gamma = 1.0 + 0.1 * jnp.cos(0.37 * a + idx)
    beta = 0.1 * jnp.sin(0.53 * a + 0.7 * idx)
    mean = 0.05 * jnp.sin(0.29 * a + idx)
    var = 1.0 + 0.1 * jnp.cos(0.41 * a + idx) ** 2
    s = gamma / jnp.sqrt(var + eps)
    b = beta - mean * s
    return s, b


def init_raw_params(key, inplanes, planes, width, scale):
    nums = 1 if scale == 1 else scale
    keys = jax.random.split(key, 4 + nums)

    def w(k, shape):
        return 0.2 * jax.random.normal(k, shape, jnp.float32)

    return {
        "conv1_w": w(keys[0], (inplanes, width * scale)),          # 1x1: Cin x Cout
        "bn1": _folded_bn(width * scale, 0),
        "convs_w": [w(keys[1 + i], (3, 3, width, width)) for i in range(nums)],  # HWIO
        "bns": [_folded_bn(width, 1 + i) for i in range(nums)],
        "cf_dw_w": w(keys[1 + nums], (3, 3, 1, width)),            # depthwise HWIO
        "cf_bn": _folded_bn(width, 17),
        "cf_pw_w": w(keys[2 + nums], (width, width)),
        "conv3_w": w(keys[3 + nums], (width * scale, planes)),
        "bn3": _folded_bn(planes, 29),
    }


def prep_kernel_params(raw, width, scale):
    """Fold BN + depthwise into kernel-friendly (mostly bf16) weight layouts."""
    nums = 1 if scale == 1 else scale
    inplanes = raw["conv1_w"].shape[0]

    w1 = raw["conv1_w"].reshape(inplanes, scale, width).transpose(1, 0, 2)
    s1, b1 = raw["bn1"]

    wconvs = jnp.stack([raw["convs_w"][i].reshape(9, width, width)
                        for i in range(nums)])
    bns_s = jnp.stack([raw["bns"][i][0] for i in range(nums)]).reshape(nums, 1, width)
    bns_b = jnp.stack([raw["bns"][i][1] for i in range(nums)]).reshape(nums, 1, width)

    # Context_Flow fusion:  (dw3x3 -> BN -> 1x1) == 9 combined (C,C) taps + bias.
    dw = raw["cf_dw_w"].reshape(9, width)
    s_cf, b_cf = raw["cf_bn"]
    pw = raw["cf_pw_w"]
    wcf = (dw * s_cf[None, :])[:, :, None] * pw[None, :, :]        # (9, C, C)
    bcf = (b_cf @ pw).reshape(1, width)

    s3, b3 = raw["bn3"]
    return {
        "w1": w1.astype(jnp.bfloat16),
        "s1": s1.reshape(scale, 1, width), "b1": b1.reshape(scale, 1, width),
        "wconvs": wconvs.astype(jnp.bfloat16),
        "bns_s": bns_s, "bns_b": bns_b,
        "wcf": wcf.astype(jnp.bfloat16), "bcf": bcf,
        "w3": raw["conv3_w"].reshape(nums, width, -1).astype(jnp.bfloat16),
        "s3": s3, "b3": b3,
    }


# -----------------------------------------------------------------------------
# MS_Coder forward (NCHW in / NCHW out).  stride=1 / k_size=3 (module defaults).
# -----------------------------------------------------------------------------
def ms_coder_forward(x_nchw, kp, *, width, scale, stype="normal"):
    N, _, H, W = x_nchw.shape
    x = jnp.transpose(x_nchw, (0, 2, 3, 1)).astype(jnp.float32)    # -> NHWC

    out1 = conv1_grouped(x, kp["w1"], kp["s1"], kp["b1"])          # (scale, M, width)
    br = fused_branches(out1, kp["wconvs"], kp["bns_s"], kp["bns_b"],
                        kp["wcf"], kp["bcf"],
                        N=N, H=H, W=W, width=width, stype=stype)   # (nums,N,H,W,width)
    nums = br.shape[0]
    out = conv3_from_groups(br.reshape(nums, N * H * W, width),
                            kp["w3"], kp["s3"], kp["b3"])          # (M, planes)
    planes = kp["w3"].shape[-1]
    return jnp.transpose(out.reshape(N, H, W, planes), (0, 3, 1, 2))


# -----------------------------------------------------------------------------
# Pure-JAX f32 reference (same folded-BN semantics) for verification.
# -----------------------------------------------------------------------------
def reference_forward(x_nchw, raw, width, scale, stype="normal"):
    x = jnp.transpose(x_nchw, (0, 2, 3, 1)).astype(jnp.float32)
    dn = ("NHWC", "HWIO", "NHWC")

    def bn(y, sb):
        s, b = sb
        return y * s + b

    out = jnp.maximum(bn(jnp.einsum("nhwc,cd->nhwd", x, raw["conv1_w"]), raw["bn1"]), 0.0)
    nums = 1 if scale == 1 else scale
    sp = None
    collected = []
    for i in range(nums):
        spx_i = out[..., i * width:(i + 1) * width]
        sp = spx_i if (i == 0 or stype == "stage") else sp + spx_i
        sp = lax.conv_general_dilated(sp, raw["convs_w"][i], (1, 1),
                                      ((1, 1), (1, 1)), dimension_numbers=dn)
        sp = jnp.maximum(bn(sp, raw["bns"][i]), 0.0)
        y = lax.conv_general_dilated(sp, raw["cf_dw_w"], (1, 1), ((1, 1), (1, 1)),
                                     dimension_numbers=dn, feature_group_count=width)
        y = bn(y, raw["cf_bn"])
        sp = jnp.maximum(jnp.einsum("nhwc,cd->nhwd", y, raw["cf_pw_w"]), 0.0)
        collected.append(sp)
    out = jnp.concatenate(collected, axis=-1)
    out = jnp.maximum(bn(jnp.einsum("nhwc,cd->nhwd", out, raw["conv3_w"]), raw["bn3"]), 0.0)
    return jnp.transpose(out, (0, 3, 1, 2))


if __name__ == "__main__":
    inplanes, planes, width, scale = 8, 16, 8, 4
    N, H, W = 2, 8, 8

    key = jax.random.PRNGKey(0)
    kx_, kp_ = jax.random.split(key)
    x = jax.random.normal(kx_, (N, inplanes, H, W), jnp.float32)   # NCHW like PyTorch

    raw = init_raw_params(kp_, inplanes, planes, width, scale)
    kparams = prep_kernel_params(raw, width, scale)

    fwd = jax.jit(functools.partial(ms_coder_forward, width=width, scale=scale,
                                    stype="normal"))
    out = jax.block_until_ready(fwd(x, kparams))

    assert out.shape == (N, planes, H, W), out.shape
    assert bool(jnp.all(jnp.isfinite(out)))
    assert bool(jnp.all(out >= 0.0))  # final ReLU

    ref = reference_forward(x, raw, width, scale, stype="normal")
    err = float(jnp.max(jnp.abs(out - ref)))
    tol = 0.05 + 0.05 * float(jnp.max(jnp.abs(ref)))  # bf16 MXU operands vs f32 ref
    assert err <= tol, (err, tol)

    print("KERNEL_OK")
</pallas_src>

<mosaic_0001>
module attributes {stable_mosaic.version = 11 : i64} {
  func.func @_conv1_kernel(%arg0: i32, %arg1: memref<128x8xf32, #tpu.memory_space<vmem>>, %arg2: memref<4x8x8xbf16, #tpu.memory_space<vmem>>, %arg3: memref<4x1x8xf32, #tpu.memory_space<vmem>>, %arg4: memref<4x1x8xf32, #tpu.memory_space<vmem>>, %arg5: memref<4x128x8xf32, #tpu.memory_space<vmem>>) attributes {dimension_semantics = [#tpu.dimension_semantics<parallel>], iteration_bounds = array<i64: 1>, scalar_prefetch = 0 : i64, scratch_operands = 0 : i64, tpu.core_type = #tpu.core_type<tc>, window_params = [{transform_indices = @transform_0, window_bounds = array<i64: 128, 8>}, {pipeline_mode = #tpu.pipeline_mode<synchronous>, transform_indices = @transform_1, window_bounds = array<i64: 4, 8, 8>}, {pipeline_mode = #tpu.pipeline_mode<synchronous>, transform_indices = @transform_2, window_bounds = array<i64: 4, 1, 8>}, {pipeline_mode = #tpu.pipeline_mode<synchronous>, transform_indices = @transform_3, window_bounds = array<i64: 4, 1, 8>}, {transform_indices = @transform_4, window_bounds = array<i64: 4, 128, 8>}]} {
    %c0 = arith.constant 0 : index
    %c0_0 = arith.constant 0 : index
    %0 = vector.load %arg1[%c0, %c0_0] : memref<128x8xf32, #tpu.memory_space<vmem>>, vector<128x8xf32>
    %1 = arith.truncf %0 : vector<128x8xf32> to vector<128x8xbf16>
    %c0_1 = arith.constant 0 : index
    %c0_2 = arith.constant 0 : index
    %c0_3 = arith.constant 0 : index
    %2 = vector.load %arg2[%c0_1, %c0_2, %c0_3] : memref<4x8x8xbf16, #tpu.memory_space<vmem>>, vector<1x8x8xbf16>
    %3 = vector.shape_cast %2 : vector<1x8x8xbf16> to vector<8x8xbf16>
    %cst = arith.constant dense<0.000000e+00> : vector<128x8xf32>
    %4 = tpu.matmul %1, %3, %cst {dimension_numbers = #tpu.dot_dimension_numbers<[1], [0], [0], [1], [0, 0, 1, 1], [], []>} : vector<128x8xbf16>, vector<8x8xbf16>, vector<128x8xf32> -> vector<128x8xf32>
    %c0_4 = arith.constant 0 : index
    %c0_5 = arith.constant 0 : index
    %c0_6 = arith.constant 0 : index
    %5 = vector.load %arg3[%c0_4, %c0_5, %c0_6] : memref<4x1x8xf32, #tpu.memory_space<vmem>>, vector<1x1x8xf32>
    %6 = vector.shape_cast %5 : vector<1x1x8xf32> to vector<1x8xf32>
    %7 = vector.broadcast %6 : vector<1x8xf32> to vector<128x8xf32>
    %8 = arith.mulf %4, %7 : vector<128x8xf32>
    %c0_7 = arith.constant 0 : index
    %c0_8 = arith.constant 0 : index
    %c0_9 = arith.constant 0 : index
    %9 = vector.load %arg4[%c0_7, %c0_8, %c0_9] : memref<4x1x8xf32, #tpu.memory_space<vmem>>, vector<1x1x8xf32>
    %10 = vector.shape_cast %9 : vector<1x1x8xf32> to vector<1x8xf32>
    %11 = vector.broadcast %10 : vector<1x8xf32> to vector<128x8xf32>
    %12 = arith.addf %8, %11 : vector<128x8xf32>
    %cst_10 = arith.constant 0.000000e+00 : f32
    %13 = vector.broadcast %cst_10 : f32 to vector<128x8xf32>
    %14 = arith.maximumf %12, %13 : vector<128x8xf32>
    %c0_11 = arith.constant 0 : index
    %c0_12 = arith.constant 0 : index
    %c0_13 = arith.constant 0 : index
    %15 = vector.load %arg5[%c0_11, %c0_12, %c0_13] : memref<4x128x8xf32, #tpu.memory_space<vmem>>, vector<1x128x8xf32>
    %16 = vector.shape_cast %15 : vector<1x128x8xf32> to vector<128x8xf32>
    %17 = vector.shape_cast %14 : vector<128x8xf32> to vector<1x128x8xf32>
    tpu.vector_store %arg5[%c0_11, %c0_12, %c0_13], %17 {strides = array<i32>} : memref<4x128x8xf32, #tpu.memory_space<vmem>>, vector<1x128x8xf32>,
    %c1 = arith.constant 1 : index
    %c0_14 = arith.constant 0 : index
    %c0_15 = arith.constant 0 : index
    %18 = vector.load %arg2[%c1, %c0_14, %c0_15] : memref<4x8x8xbf16, #tpu.memory_space<vmem>>, vector<1x8x8xbf16>
    %19 = vector.shape_cast %18 : vector<1x8x8xbf16> to vector<8x8xbf16>
    %cst_16 = arith.constant dense<0.000000e+00> : vector<128x8xf32>
    %20 = tpu.matmul %1, %19, %cst_16 {dimension_numbers = #tpu.dot_dimension_numbers<[1], [0], [0], [1], [0, 0, 1, 1], [], []>} : vector<128x8xbf16>, vector<8x8xbf16>, vector<128x8xf32> -> vector<128x8xf32>
    %c1_17 = arith.constant 1 : index
    %c0_18 = arith.constant 0 : index
    %c0_19 = arith.constant 0 : index
    %21 = vector.load %arg3[%c1_17, %c0_18, %c0_19] : memref<4x1x8xf32, #tpu.memory_space<vmem>>, vector<1x1x8xf32>
    %22 = vector.shape_cast %21 : vector<1x1x8xf32> to vector<1x8xf32>
    %23 = vector.broadcast %22 : vector<1x8xf32> to vector<128x8xf32>
    %24 = arith.mulf %20, %23 : vector<128x8xf32>
    %c1_20 = arith.constant 1 : index
    %c0_21 = arith.constant 0 : index
    %c0_22 = arith.constant 0 : index
    %25 = vector.load %arg4[%c1_20, %c0_21, %c0_22] : memref<4x1x8xf32, #tpu.memory_space<vmem>>, vector<1x1x8xf32>
    %26 = vector.shape_cast %25 : vector<1x1x8xf32> to vector<1x8xf32>
    %27 = vector.broadcast %26 : vector<1x8xf32> to vector<128x8xf32>
    %28 = arith.addf %24, %27 : vector<128x8xf32>
    %cst_23 = arith.constant 0.000000e+00 : f32
    %29 = vector.broadcast %cst_23 : f32 to vector<128x8xf32>
    %30 = arith.maximumf %28, %29 : vector<128x8xf32>
    %c1_24 = arith.constant 1 : index
    %c0_25 = arith.constant 0 : index
    %c0_26 = arith.constant 0 : index
    %31 = vector.load %arg5[%c1_24, %c0_25, %c0_26] : memref<4x128x8xf32, #tpu.memory_space<vmem>>, vector<1x128x8xf32>
    %32 = vector.shape_cast %31 : vector<1x128x8xf32> to vector<128x8xf32>
    %33 = vector.shape_cast %30 : vector<128x8xf32> to vector<1x128x8xf32>
    tpu.vector_store %arg5[%c1_24, %c0_25, %c0_26], %33 {strides = array<i32>} : memref<4x128x8xf32, #tpu.memory_space<vmem>>, vector<1x128x8xf32>,
    %c2 = arith.constant 2 : index
    %c0_27 = arith.constant 0 : index
    %c0_28 = arith.constant 0 : index
    %34 = vector.load %arg2[%c2, %c0_27, %c0_28] : memref<4x8x8xbf16, #tpu.memory_space<vmem>>, vector<1x8x8xbf16>
    %35 = vector.shape_cast %34 : vector<1x8x8xbf16> to vector<8x8xbf16>
    %cst_29 = arith.constant dense<0.000000e+00> : vector<128x8xf32>
    %36 = tpu.matmul %1, %35, %cst_29 {dimension_numbers = #tpu.dot_dimension_numbers<[1], [0], [0], [1], [0, 0, 1, 1], [], []>} : vector<128x8xbf16>, vector<8x8xbf16>, vector<128x8xf32> -> vector<128x8xf32>
    %c2_30 = arith.constant 2 : index
    %c0_31 = arith.constant 0 : index
    %c0_32 = arith.constant 0 : index
    %37 = vector.load %arg3[%c2_30, %c0_31, %c0_32] : memref<4x1x8xf32, #tpu.memory_space<vmem>>, vector<1x1x8xf32>
    %38 = vector.shape_cast %37 : vector<1x1x8xf32> to vector<1x8xf32>
    %39 = vector.broadcast %38 : vector<1x8xf32> to vector<128x8xf32>
    %40 = arith.mulf %36, %39 : vector<128x8xf32>
    %c2_33 = arith.constant 2 : index
    %c0_34 = arith.constant 0 : index
    %c0_35 = arith.constant 0 : index
    %41 = vector.load %arg4[%c2_33, %c0_34, %c0_35] : memref<4x1x8xf32, #tpu.memory_space<vmem>>, vector<1x1x8xf32>
    %42 = vector.shape_cast %41 : vector<1x1x8xf32> to vector<1x8xf32>
    %43 = vector.broadcast %42 : vector<1x8xf32> to vector<128x8xf32>
    %44 = arith.addf %40, %43 : vector<128x8xf32>
    %cst_36 = arith.constant 0.000000e+00 : f32
    %45 = vector.broadcast %cst_36 : f32 to vector<128x8xf32>
    %46 = arith.maximumf %44, %45 : vector<128x8xf32>
    %c2_37 = arith.constant 2 : index
    %c0_38 = arith.constant 0 : index
    %c0_39 = arith.constant 0 : index
    %47 = vector.load %arg5[%c2_37, %c0_38, %c0_39] : memref<4x128x8xf32, #tpu.memory_space<vmem>>, vector<1x128x8xf32>
    %48 = vector.shape_cast %47 : vector<1x128x8xf32> to vector<128x8xf32>
    %49 = vector.shape_cast %46 : vector<128x8xf32> to vector<1x128x8xf32>
    tpu.vector_store %arg5[%c2_37, %c0_38, %c0_39], %49 {strides = array<i32>} : memref<4x128x8xf32, #tpu.memory_space<vmem>>, vector<1x128x8xf32>,
    %c3 = arith.constant 3 : index
    %c0_40 = arith.constant 0 : index
    %c0_41 = arith.constant 0 : index
    %50 = vector.load %arg2[%c3, %c0_40, %c0_41] : memref<4x8x8xbf16, #tpu.memory_space<vmem>>, vector<1x8x8xbf16>
    %51 = vector.shape_cast %50 : vector<1x8x8xbf16> to vector<8x8xbf16>
    %cst_42 = arith.constant dense<0.000000e+00> : vector<128x8xf32>
    %52 = tpu.matmul %1, %51, %cst_42 {dimension_numbers = #tpu.dot_dimension_numbers<[1], [0], [0], [1], [0, 0, 1, 1], [], []>} : vector<128x8xbf16>, vector<8x8xbf16>, vector<128x8xf32> -> vector<128x8xf32>
    %c3_43 = arith.constant 3 : index
    %c0_44 = arith.constant 0 : index
    %c0_45 = arith.constant 0 : index
    %53 = vector.load %arg3[%c3_43, %c0_44, %c0_45] : memref<4x1x8xf32, #tpu.memory_space<vmem>>, vector<1x1x8xf32>
    %54 = vector.shape_cast %53 : vector<1x1x8xf32> to vector<1x8xf32>
    %55 = vector.broadcast %54 : vector<1x8xf32> to vector<128x8xf32>
    %56 = arith.mulf %52, %55 : vector<128x8xf32>
    %c3_46 = arith.constant 3 : index
    %c0_47 = arith.constant 0 : index
    %c0_48 = arith.constant 0 : index
    %57 = vector.load %arg4[%c3_46, %c0_47, %c0_48] : memref<4x1x8xf32, #tpu.memory_space<vmem>>, vector<1x1x8xf32>
    %58 = vector.shape_cast %57 : vector<1x1x8xf32> to vector<1x8xf32>
    %59 = vector.broadcast %58 : vector<1x8xf32> to vector<128x8xf32>
    %60 = arith.addf %56, %59 : vector<128x8xf32>
    %cst_49 = arith.constant 0.000000e+00 : f32
    %61 = vector.broadcast %cst_49 : f32 to vector<128x8xf32>
    %62 = arith.maximumf %60, %61 : vector<128x8xf32>
    %c3_50 = arith.constant 3 : index
    %c0_51 = arith.constant 0 : index
    %c0_52 = arith.constant 0 : index
    %63 = vector.load %arg5[%c3_50, %c0_51, %c0_52] : memref<4x128x8xf32, #tpu.memory_space<vmem>>, vector<1x128x8xf32>
    %64 = vector.shape_cast %63 : vector<1x128x8xf32> to vector<128x8xf32>
    %65 = vector.shape_cast %62 : vector<128x8xf32> to vector<1x128x8xf32>
    tpu.vector_store %arg5[%c3_50, %c0_51, %c0_52], %65 {strides = array<i32>} : memref<4x128x8xf32, #tpu.memory_space<vmem>>, vector<1x128x8xf32>,
    return
  }
  func.func @transform_0(%arg0: i32) -> (i32, i32) {
    %c0_i32 = arith.constant 0 : i32
    %c0_i32_0 = arith.constant 0 : i32
    return %arg0, %c0_i32 : i32, i32
  }
  func.func @transform_1(%arg0: i32) -> (i32, i32, i32) {
    %c0_i32 = arith.constant 0 : i32
    %c0_i32_0 = arith.constant 0 : i32
    %c0_i32_1 = arith.constant 0 : i32
    %c0_i32_2 = arith.constant 0 : i32
    return %c0_i32, %c0_i32_0, %c0_i32_1 : i32, i32, i32
  }
  func.func @transform_2(%arg0: i32) -> (i32, i32, i32) {
    %c0_i32 = arith.constant 0 : i32
    %c0_i32_0 = arith.constant 0 : i32
    %c0_i32_1 = arith.constant 0 : i32
    %c0_i32_2 = arith.constant 0 : i32
    return %c0_i32, %c0_i32_0, %c0_i32_1 : i32, i32, i32
  }
  func.func @transform_3(%arg0: i32) -> (i32, i32, i32) {
    %c0_i32 = arith.constant 0 : i32
    %c0_i32_0 = arith.constant 0 : i32
    %c0_i32_1 = arith.constant 0 : i32
    %c0_i32_2 = arith.constant 0 : i32
    return %c0_i32, %c0_i32_0, %c0_i32_1 : i32, i32, i32
  }
  func.func @transform_4(%arg0: i32) -> (i32, i32, i32) {
    %c0_i32 = arith.constant 0 : i32
    %c0_i32_0 = arith.constant 0 : i32
    %c0_i32_1 = arith.constant 0 : i32
    return %c0_i32, %arg0, %c0_i32_0 : i32, i32, i32
  }
}

module attributes {stable_mosaic.version = 11 : i64} {
  func.func @_conv3_kernel(%arg0: i32, %arg1: memref<4x128x8xf32, #tpu.memory_space<vmem>>, %arg2: memref<4x8x16xbf16, #tpu.memory_space<vmem>>, %arg3: memref<1x16xf32, #tpu.memory_space<vmem>>, %arg4: memref<1x16xf32, #tpu.memory_space<vmem>>, %arg5: memref<128x16xf32, #tpu.memory_space<vmem>>) attributes {dimension_semantics = [#tpu.dimension_semantics<parallel>], iteration_bounds = array<i64: 1>, scalar_prefetch = 0 : i64, scratch_operands = 0 : i64, tpu.core_type = #tpu.core_type<tc>, window_params = [{transform_indices = @transform_0, window_bounds = array<i64: 4, 128, 8>}, {pipeline_mode = #tpu.pipeline_mode<synchronous>, transform_indices = @transform_1, window_bounds = array<i64: 4, 8, 16>}, {pipeline_mode = #tpu.pipeline_mode<synchronous>, transform_indices = @transform_2, window_bounds = array<i64: 1, 16>}, {pipeline_mode = #tpu.pipeline_mode<synchronous>, transform_indices = @transform_3, window_bounds = array<i64: 1, 16>}, {transform_indices = @transform_4, window_bounds = array<i64: 128, 16>}]} {
    %cst = arith.constant 0.000000e+00 : f32
    %0 = vector.broadcast %cst : f32 to vector<128x16xf32>
    %c0 = arith.constant 0 : index
    %c0_0 = arith.constant 0 : index
    %c0_1 = arith.constant 0 : index
    %1 = vector.load %arg1[%c0, %c0_0, %c0_1] : memref<4x128x8xf32, #tpu.memory_space<vmem>>, vector<1x128x8xf32>
    %2 = vector.shape_cast %1 : vector<1x128x8xf32> to vector<128x8xf32>
    %3 = arith.truncf %2 : vector<128x8xf32> to vector<128x8xbf16>
    %c0_2 = arith.constant 0 : index
    %c0_3 = arith.constant 0 : index
    %c0_4 = arith.constant 0 : index
    %4 = vector.load %arg2[%c0_2, %c0_3, %c0_4] : memref<4x8x16xbf16, #tpu.memory_space<vmem>>, vector<1x8x16xbf16>
    %5 = vector.shape_cast %4 : vector<1x8x16xbf16> to vector<8x16xbf16>
    %cst_5 = arith.constant dense<0.000000e+00> : vector<128x16xf32>
    %6 = tpu.matmul %3, %5, %cst_5 {dimension_numbers = #tpu.dot_dimension_numbers<[1], [0], [0], [1], [0, 0, 1, 1], [], []>} : vector<128x8xbf16>, vector<8x16xbf16>, vector<128x16xf32> -> vector<128x16xf32>
    %7 = arith.addf %0, %6 : vector<128x16xf32>
    %c1 = arith.constant 1 : index
    %c0_6 = arith.constant 0 : index
    %c0_7 = arith.constant 0 : index
    %8 = vector.load %arg1[%c1, %c0_6, %c0_7] : memref<4x128x8xf32, #tpu.memory_space<vmem>>, vector<1x128x8xf32>
    %9 = vector.shape_cast %8 : vector<1x128x8xf32> to vector<128x8xf32>
    %10 = arith.truncf %9 : vector<128x8xf32> to vector<128x8xbf16>
    %c1_8 = arith.constant 1 : index
    %c0_9 = arith.constant 0 : index
    %c0_10 = arith.constant 0 : index
    %11 = vector.load %arg2[%c1_8, %c0_9, %c0_10] : memref<4x8x16xbf16, #tpu.memory_space<vmem>>, vector<1x8x16xbf16>
    %12 = vector.shape_cast %11 : vector<1x8x16xbf16> to vector<8x16xbf16>
    %cst_11 = arith.constant dense<0.000000e+00> : vector<128x16xf32>
    %13 = tpu.matmul %10, %12, %cst_11 {dimension_numbers = #tpu.dot_dimension_numbers<[1], [0], [0], [1], [0, 0, 1, 1], [], []>} : vector<128x8xbf16>, vector<8x16xbf16>, vector<128x16xf32> -> vector<128x16xf32>
    %14 = arith.addf %7, %13 : vector<128x16xf32>
    %c2 = arith.constant 2 : index
    %c0_12 = arith.constant 0 : index
    %c0_13 = arith.constant 0 : index
    %15 = vector.load %arg1[%c2, %c0_12, %c0_13] : memref<4x128x8xf32, #tpu.memory_space<vmem>>, vector<1x128x8xf32>
    %16 = vector.shape_cast %15 : vector<1x128x8xf32> to vector<128x8xf32>
    %17 = arith.truncf %16 : vector<128x8xf32> to vector<128x8xbf16>
    %c2_14 = arith.constant 2 : index
    %c0_15 = arith.constant 0 : index
    %c0_16 = arith.constant 0 : index
    %18 = vector.load %arg2[%c2_14, %c0_15, %c0_16] : memref<4x8x16xbf16, #tpu.memory_space<vmem>>, vector<1x8x16xbf16>
    %19 = vector.shape_cast %18 : vector<1x8x16xbf16> to vector<8x16xbf16>
    %cst_17 = arith.constant dense<0.000000e+00> : vector<128x16xf32>
    %20 = tpu.matmul %17, %19, %cst_17 {dimension_numbers = #tpu.dot_dimension_numbers<[1], [0], [0], [1], [0, 0, 1, 1], [], []>} : vector<128x8xbf16>, vector<8x16xbf16>, vector<128x16xf32> -> vector<128x16xf32>
    %21 = arith.addf %14, %20 : vector<128x16xf32>
    %c3 = arith.constant 3 : index
    %c0_18 = arith.constant 0 : index
    %c0_19 = arith.constant 0 : index
    %22 = vector.load %arg1[%c3, %c0_18, %c0_19] : memref<4x128x8xf32, #tpu.memory_space<vmem>>, vector<1x128x8xf32>
    %23 = vector.shape_cast %22 : vector<1x128x8xf32> to vector<128x8xf32>
    %24 = arith.truncf %23 : vector<128x8xf32> to vector<128x8xbf16>
    %c3_20 = arith.constant 3 : index
    %c0_21 = arith.constant 0 : index
    %c0_22 = arith.constant 0 : index
    %25 = vector.load %arg2[%c3_20, %c0_21, %c0_22] : memref<4x8x16xbf16, #tpu.memory_space<vmem>>, vector<1x8x16xbf16>
    %26 = vector.shape_cast %25 : vector<1x8x16xbf16> to vector<8x16xbf16>
    %cst_23 = arith.constant dense<0.000000e+00> : vector<128x16xf32>
    %27 = tpu.matmul %24, %26, %cst_23 {dimension_numbers = #tpu.dot_dimension_numbers<[1], [0], [0], [1], [0, 0, 1, 1], [], []>} : vector<128x8xbf16>, vector<8x16xbf16>, vector<128x16xf32> -> vector<128x16xf32>
    %28 = arith.addf %21, %27 : vector<128x16xf32>
    %c0_24 = arith.constant 0 : index
    %c0_25 = arith.constant 0 : index
    %29 = vector.load %arg3[%c0_24, %c0_25] : memref<1x16xf32, #tpu.memory_space<vmem>>, vector<1x16xf32>
    %30 = vector.broadcast %29 : vector<1x16xf32> to vector<128x16xf32>
    %31 = arith.mulf %28, %30 : vector<128x16xf32>
    %c0_26 = arith.constant 0 : index
    %c0_27 = arith.constant 0 : index
    %32 = vector.load %arg4[%c0_26, %c0_27] : memref<1x16xf32, #tpu.memory_space<vmem>>, vector<1x16xf32>
    %33 = vector.broadcast %32 : vector<1x16xf32> to vector<128x16xf32>
    %34 = arith.addf %31, %33 : vector<128x16xf32>
    %cst_28 = arith.constant 0.000000e+00 : f32
    %35 = vector.broadcast %cst_28 : f32 to vector<128x16xf32>
    %36 = arith.maximumf %34, %35 : vector<128x16xf32>
    %c0_29 = arith.constant 0 : index
    %c0_30 = arith.constant 0 : index
    %37 = vector.load %arg5[%c0_29, %c0_30] : memref<128x16xf32, #tpu.memory_space<vmem>>, vector<128x16xf32>
    tpu.vector_store %arg5[%c0_29, %c0_30], %36 {strides = array<i32>} : memref<128x16xf32, #tpu.memory_space<vmem>>, vector<128x16xf32>,
    return
  }
  func.func @transform_0(%arg0: i32) -> (i32, i32, i32) {
    %c0_i32 = arith.constant 0 : i32
    %c0_i32_0 = arith.constant 0 : i32
    %c0_i32_1 = arith.constant 0 : i32
    return %c0_i32, %arg0, %c0_i32_0 : i32, i32, i32
  }
  func.func @transform_1(%arg0: i32) -> (i32, i32, i32) {
    %c0_i32 = arith.constant 0 : i32
    %c0_i32_0 = arith.constant 0 : i32
    %c0_i32_1 = arith.constant 0 : i32
    %c0_i32_2 = arith.constant 0 : i32
    return %c0_i32, %c0_i32_0, %c0_i32_1 : i32, i32, i32
  }
  func.func @transform_2(%arg0: i32) -> (i32, i32) {
    %c0_i32 = arith.constant 0 : i32
    %c0_i32_0 = arith.constant 0 : i32
    %c0_i32_1 = arith.constant 0 : i32
    return %c0_i32, %c0_i32_0 : i32, i32
  }
  func.func @transform_3(%arg0: i32) -> (i32, i32) {
    %c0_i32 = arith.constant 0 : i32
    %c0_i32_0 = arith.constant 0 : i32
    %c0_i32_1 = arith.constant 0 : i32
    return %c0_i32, %c0_i32_0 : i32, i32
  }
  func.func @transform_4(%arg0: i32) -> (i32, i32) {
    %c0_i32 = arith.constant 0 : i32
    %c0_i32_0 = arith.constant 0 : i32
    return %arg0, %c0_i32 : i32, i32
  }
}

module attributes {stable_mosaic.version = 11 : i64} {
  func.func @_branch_kernel(%arg0: i32, %arg1: i32, %arg2: memref<1x1x8x8x8xf32, #tpu.memory_space<vmem>>, %arg3: memref<1x9x8x8xbf16, #tpu.memory_space<vmem>>, %arg4: memref<1x1x8xf32, #tpu.memory_space<vmem>>, %arg5: memref<1x1x8xf32, #tpu.memory_space<vmem>>, %arg6: memref<9x8x8xbf16, #tpu.memory_space<vmem>>, %arg7: memref<1x8xf32, #tpu.memory_space<vmem>>, %arg8: memref<1x1x8x8x8xf32, #tpu.memory_space<vmem>>, %arg9: memref<10x24x8xf32, #tpu.memory_space<vmem>>, %arg10: memref<8x8x8xf32, #tpu.memory_space<vmem>>) attributes {dimension_semantics = [#tpu.dimension_semantics<parallel>, #tpu.dimension_semantics<arbitrary>], iteration_bounds = array<i64: 2, 4>, scalar_prefetch = 0 : i64, scratch_operands = 2 : i64, tpu.core_type = #tpu.core_type<tc>, window_params = [{transform_indices = @transform_0, window_bounds = array<i64: 1, 1, 8, 8, 8>}, {transform_indices = @transform_1, window_bounds = array<i64: 1, 9, 8, 8>}, {transform_indices = @transform_2, window_bounds = array<i64: 1, 1, 8>}, {transform_indices = @transform_3, window_bounds = array<i64: 1, 1, 8>}, {pipeline_mode = #tpu.pipeline_mode<synchronous>, transform_indices = @transform_4, window_bounds = array<i64: 9, 8, 8>}, {pipeline_mode = #tpu.pipeline_mode<synchronous>, transform_indices = @transform_5, window_bounds = array<i64: 1, 8>}, {transform_indices = @transform_6, window_bounds = array<i64: 1, 1, 8, 8, 8>}]} {
    %cst = arith.constant 0.000000e+00 : f32
    %0 = vector.broadcast %cst : f32 to vector<10x24x8xf32>
    %c0 = arith.constant 0 : index
    %c0_0 = arith.constant 0 : index
    %c0_1 = arith.constant 0 : index
    %1 = vector.load %arg9[%c0, %c0_0, %c0_1] : memref<10x24x8xf32, #tpu.memory_space<vmem>>, vector<10x24x8xf32>
    tpu.vector_store %arg9[%c0, %c0_0, %c0_1], %0 {strides = array<i32>} : memref<10x24x8xf32, #tpu.memory_space<vmem>>, vector<10x24x8xf32>,
    %c0_2 = arith.constant 0 : index
    %c0_3 = arith.constant 0 : index
    %c0_4 = arith.constant 0 : index
    %c0_5 = arith.constant 0 : index
    %c0_6 = arith.constant 0 : index
    %2 = vector.load %arg2[%c0_2, %c0_3, %c0_4, %c0_5, %c0_6] : memref<1x1x8x8x8xf32, #tpu.memory_space<vmem>>, vector<1x1x8x8x8xf32>
    %3 = vector.shape_cast %2 : vector<1x1x8x8x8xf32> to vector<8x8x8xf32>
    %c0_i32 = arith.constant 0 : i32
    %4 = arith.cmpi eq, %arg1, %c0_i32 : i32
    %5 = arith.extui %4 : i1 to i32
    %c0_i32_7 = arith.constant 0 : i32
    %6 = arith.cmpi ne, %5, %c0_i32_7 : i32
    scf.if %6 {
      %cst_163 = arith.constant 0.000000e+00 : f32
      %160 = vector.broadcast %cst_163 : f32 to vector<8x8x8xf32>
      %c0_164 = arith.constant 0 : index
      %c0_165 = arith.constant 0 : index
      %c0_166 = arith.constant 0 : index
      %161 = vector.load %arg10[%c0_164, %c0_165, %c0_166] : memref<8x8x8xf32, #tpu.memory_space<vmem>>, vector<8x8x8xf32>
      tpu.vector_store %arg10[%c0_164, %c0_165, %c0_166], %160 {strides = array<i32>} : memref<8x8x8xf32, #tpu.memory_space<vmem>>, vector<8x8x8xf32>,
    } else {
    }
    %c0_8 = arith.constant 0 : index
    %c0_9 = arith.constant 0 : index
    %c0_10 = arith.constant 0 : index
    %7 = vector.load %arg10[%c0_8, %c0_9, %c0_10] : memref<8x8x8xf32, #tpu.memory_space<vmem>>, vector<8x8x8xf32>
    %8 = arith.addf %3, %7 : vector<8x8x8xf32>
    %c1 = arith.constant 1 : index
    %c8 = arith.constant 8 : index
    %c0_11 = arith.constant 0 : index
    %9 = vector.load %arg9[%c1, %c8, %c0_11] : memref<10x24x8xf32, #tpu.memory_space<vmem>>, vector<8x8x8xf32>
    tpu.vector_store %arg9[%c1, %c8, %c0_11], %8 {strides = array<i32>} : memref<10x24x8xf32, #tpu.memory_space<vmem>>, vector<8x8x8xf32>,
    %cst_12 = arith.constant 0.000000e+00 : f32
    %10 = vector.broadcast %cst_12 : f32 to vector<64x8xf32>
    %c0_13 = arith.constant 0 : index
    %c7 = arith.constant 7 : index
    %c0_14 = arith.constant 0 : index
    %11 = vector.load %arg9[%c0_13, %c7, %c0_14] : memref<10x24x8xf32, #tpu.memory_space<vmem>>, vector<8x8x8xf32>
    %12 = vector.shape_cast %11 : vector<8x8x8xf32> to vector<64x8xf32>
    %13 = arith.truncf %12 : vector<64x8xf32> to vector<64x8xbf16>
    %c0_15 = arith.constant 0 : index
    %c0_16 = arith.constant 0 : index
    %c0_17 = arith.constant 0 : index
    %c0_18 = arith.constant 0 : index
    %14 = vector.load %arg3[%c0_15, %c0_16, %c0_17, %c0_18] : memref<1x9x8x8xbf16, #tpu.memory_space<vmem>>, vector<1x1x8x8xbf16>
    %15 = vector.shape_cast %14 : vector<1x1x8x8xbf16> to vector<8x8xbf16>
    %cst_19 = arith.constant dense<0.000000e+00> : vector<64x8xf32>
    %16 = tpu.matmul %13, %15, %cst_19 {dimension_numbers = #tpu.dot_dimension_numbers<[1], [0], [0], [1], [0, 0, 1, 1], [], []>} : vector<64x8xbf16>, vector<8x8xbf16>, vector<64x8xf32> -> vector<64x8xf32>
    %17 = arith.addf %10, %16 : vector<64x8xf32>
    %c0_20 = arith.constant 0 : index
    %c8_21 = arith.constant 8 : index
    %c0_22 = arith.constant 0 : index
    %18 = vector.load %arg9[%c0_20, %c8_21, %c0_22] : memref<10x24x8xf32, #tpu.memory_space<vmem>>, vector<8x8x8xf32>
    %19 = vector.shape_cast %18 : vector<8x8x8xf32> to vector<64x8xf32>
    %20 = arith.truncf %19 : vector<64x8xf32> to vector<64x8xbf16>
    %c0_23 = arith.constant 0 : index
    %c1_24 = arith.constant 1 : index
    %c0_25 = arith.constant 0 : index
    %c0_26 = arith.constant 0 : index
    %21 = vector.load %arg3[%c0_23, %c1_24, %c0_25, %c0_26] : memref<1x9x8x8xbf16, #tpu.memory_space<vmem>>, vector<1x1x8x8xbf16>
    %22 = vector.shape_cast %21 : vector<1x1x8x8xbf16> to vector<8x8xbf16>
    %cst_27 = arith.constant dense<0.000000e+00> : vector<64x8xf32>
    %23 = tpu.matmul %20, %22, %cst_27 {dimension_numbers = #tpu.dot_dimension_numbers<[1], [0], [0], [1], [0, 0, 1, 1], [], []>} : vector<64x8xbf16>, vector<8x8xbf16>, vector<64x8xf32> -> vector<64x8xf32>
    %24 = arith.addf %17, %23 : vector<64x8xf32>
    %c0_28 = arith.constant 0 : index
    %c9 = arith.constant 9 : index
    %c0_29 = arith.constant 0 : index
    %25 = vector.load %arg9[%c0_28, %c9, %c0_29] : memref<10x24x8xf32, #tpu.memory_space<vmem>>, vector<8x8x8xf32>
    %26 = vector.shape_cast %25 : vector<8x8x8xf32> to vector<64x8xf32>
    %27 = arith.truncf %26 : vector<64x8xf32> to vector<64x8xbf16>
    %c0_30 = arith.constant 0 : index
    %c2 = arith.constant 2 : index
    %c0_31 = arith.constant 0 : index
    %c0_32 = arith.constant 0 : index
    %28 = vector.load %arg3[%c0_30, %c2, %c0_31, %c0_32] : memref<1x9x8x8xbf16, #tpu.memory_space<vmem>>, vector<1x1x8x8xbf16>
    %29 = vector.shape_cast %28 : vector<1x1x8x8xbf16> to vector<8x8xbf16>
    %cst_33 = arith.constant dense<0.000000e+00> : vector<64x8xf32>
    %30 = tpu.matmul %27, %29, %cst_33 {dimension_numbers = #tpu.dot_dimension_numbers<[1], [0], [0], [1], [0, 0, 1, 1], [], []>} : vector<64x8xbf16>, vector<8x8xbf16>, vector<64x8xf32> -> vector<64x8xf32>
    %31 = arith.addf %24, %30 : vector<64x8xf32>
    %c1_34 = arith.constant 1 : index
    %c7_35 = arith.constant 7 : index
    %c0_36 = arith.constant 0 : index
    %32 = vector.load %arg9[%c1_34, %c7_35, %c0_36] : memref<10x24x8xf32, #tpu.memory_space<vmem>>, vector<8x8x8xf32>
    %33 = vector.shape_cast %32 : vector<8x8x8xf32> to vector<64x8xf32>
    %34 = arith.truncf %33 : vector<64x8xf32> to vector<64x8xbf16>
    %c0_37 = arith.constant 0 : index
    %c3 = arith.constant 3 : index
    %c0_38 = arith.constant 0 : index
    %c0_39 = arith.constant 0 : index
    %35 = vector.load %arg3[%c0_37, %c3, %c0_38, %c0_39] : memref<1x9x8x8xbf16, #tpu.memory_space<vmem>>, vector<1x1x8x8xbf16>
    %36 = vector.shape_cast %35 : vector<1x1x8x8xbf16> to vector<8x8xbf16>
    %cst_40 = arith.constant dense<0.000000e+00> : vector<64x8xf32>
    %37 = tpu.matmul %34, %36, %cst_40 {dimension_numbers = #tpu.dot_dimension_numbers<[1], [0], [0], [1], [0, 0, 1, 1], [], []>} : vector<64x8xbf16>, vector<8x8xbf16>, vector<64x8xf32> -> vector<64x8xf32>
    %38 = arith.addf %31, %37 : vector<64x8xf32>
    %c1_41 = arith.constant 1 : index
    %c8_42 = arith.constant 8 : index
    %c0_43 = arith.constant 0 : index
    %39 = vector.load %arg9[%c1_41, %c8_42, %c0_43] : memref<10x24x8xf32, #tpu.memory_space<vmem>>, vector<8x8x8xf32>
    %40 = vector.shape_cast %39 : vector<8x8x8xf32> to vector<64x8xf32>
    %41 = arith.truncf %40 : vector<64x8xf32> to vector<64x8xbf16>
    %c0_44 = arith.constant 0 : index
    %c4 = arith.constant 4 : index
    %c0_45 = arith.constant 0 : index
    %c0_46 = arith.constant 0 : index
    %42 = vector.load %arg3[%c0_44, %c4, %c0_45, %c0_46] : memref<1x9x8x8xbf16, #tpu.memory_space<vmem>>, vector<1x1x8x8xbf16>
    %43 = vector.shape_cast %42 : vector<1x1x8x8xbf16> to vector<8x8xbf16>
    %cst_47 = arith.constant dense<0.000000e+00> : vector<64x8xf32>
    %44 = tpu.matmul %41, %43, %cst_47 {dimension_numbers = #tpu.dot_dimension_numbers<[1], [0], [0], [1], [0, 0, 1, 1], [], []>} : vector<64x8xbf16>, vector<8x8xbf16>, vector<64x8xf32> -> vector<64x8xf32>
    %45 = arith.addf %38, %44 : vector<64x8xf32>
    %c1_48 = arith.constant 1 : index
    %c9_49 = arith.constant 9 : index
    %c0_50 = arith.constant 0 : index
    %46 = vector.load %arg9[%c1_48, %c9_49, %c0_50] : memref<10x24x8xf32, #tpu.memory_space<vmem>>, vector<8x8x8xf32>
    %47 = vector.shape_cast %46 : vector<8x8x8xf32> to vector<64x8xf32>
    %48 = arith.truncf %47 : vector<64x8xf32> to vector<64x8xbf16>
    %c0_51 = arith.constant 0 : index
    %c5 = arith.constant 5 : index
    %c0_52 = arith.constant 0 : index
    %c0_53 = arith.constant 0 : index
    %49 = vector.load %arg3[%c0_51, %c5, %c0_52, %c0_53] : memref<1x9x8x8xbf16, #tpu.memory_space<vmem>>, vector<1x1x8x8xbf16>
    %50 = vector.shape_cast %49 : vector<1x1x8x8xbf16> to vector<8x8xbf16>
    %cst_54 = arith.constant dense<0.000000e+00> : vector<64x8xf32>
    %51 = tpu.matmul %48, %50, %cst_54 {dimension_numbers = #tpu.dot_dimension_numbers<[1], [0], [0], [1], [0, 0, 1, 1], [], []>} : vector<64x8xbf16>, vector<8x8xbf16>, vector<64x8xf32> -> vector<64x8xf32>
    %52 = arith.addf %45, %51 : vector<64x8xf32>
    %c2_55 = arith.constant 2 : index
    %c7_56 = arith.constant 7 : index
    %c0_57 = arith.constant 0 : index
    %53 = vector.load %arg9[%c2_55, %c7_56, %c0_57] : memref<10x24x8xf32, #tpu.memory_space<vmem>>, vector<8x8x8xf32>
    %54 = vector.shape_cast %53 : vector<8x8x8xf32> to vector<64x8xf32>
    %55 = arith.truncf %54 : vector<64x8xf32> to vector<64x8xbf16>
    %c0_58 = arith.constant 0 : index
    %c6 = arith.constant 6 : index
    %c0_59 = arith.constant 0 : index
    %c0_60 = arith.constant 0 : index
    %56 = vector.load %arg3[%c0_58, %c6, %c0_59, %c0_60] : memref<1x9x8x8xbf16, #tpu.memory_space<vmem>>, vector<1x1x8x8xbf16>
    %57 = vector.shape_cast %56 : vector<1x1x8x8xbf16> to vector<8x8xbf16>
    %cst_61 = arith.constant dense<0.000000e+00> : vector<64x8xf32>
    %58 = tpu.matmul %55, %57, %cst_61 {dimension_numbers = #tpu.dot_dimension_numbers<[1], [0], [0], [1], [0, 0, 1, 1], [], []>} : vector<64x8xbf16>, vector<8x8xbf16>, vector<64x8xf32> -> vector<64x8xf32>
    %59 = arith.addf %52, %58 : vector<64x8xf32>
    %c2_62 = arith.constant 2 : index
    %c8_63 = arith.constant 8 : index
    %c0_64 = arith.constant 0 : index
    %60 = vector.load %arg9[%c2_62, %c8_63, %c0_64] : memref<10x24x8xf32, #tpu.memory_space<vmem>>, vector<8x8x8xf32>
    %61 = vector.shape_cast %60 : vector<8x8x8xf32> to vector<64x8xf32>
    %62 = arith.truncf %61 : vector<64x8xf32> to vector<64x8xbf16>
    %c0_65 = arith.constant 0 : index
    %c7_66 = arith.constant 7 : index
    %c0_67 = arith.constant 0 : index
    %c0_68 = arith.constant 0 : index
    %63 = vector.load %arg3[%c0_65, %c7_66, %c0_67, %c0_68] : memref<1x9x8x8xbf16, #tpu.memory_space<vmem>>, vector<1x1x8x8xbf16>
    %64 = vector.shape_cast %63 : vector<1x1x8x8xbf16> to vector<8x8xbf16>
    %cst_69 = arith.constant dense<0.000000e+00> : vector<64x8xf32>
    %65 = tpu.matmul %62, %64, %cst_69 {dimension_numbers = #tpu.dot_dimension_numbers<[1], [0], [0], [1], [0, 0, 1, 1], [], []>} : vector<64x8xbf16>, vector<8x8xbf16>, vector<64x8xf32> -> vector<64x8xf32>
    %66 = arith.addf %59, %65 : vector<64x8xf32>
    %c2_70 = arith.constant 2 : index
    %c9_71 = arith.constant 9 : index
    %c0_72 = arith.constant 0 : index
    %67 = vector.load %arg9[%c2_70, %c9_71, %c0_72] : memref<10x24x8xf32, #tpu.memory_space<vmem>>, vector<8x8x8xf32>
    %68 = vector.shape_cast %67 : vector<8x8x8xf32> to vector<64x8xf32>
    %69 = arith.truncf %68 : vector<64x8xf32> to vector<64x8xbf16>
    %c0_73 = arith.constant 0 : index
    %c8_74 = arith.constant 8 : index
    %c0_75 = arith.constant 0 : index
    %c0_76 = arith.constant 0 : index
    %70 = vector.load %arg3[%c0_73, %c8_74, %c0_75, %c0_76] : memref<1x9x8x8xbf16, #tpu.memory_space<vmem>>, vector<1x1x8x8xbf16>
    %71 = vector.shape_cast %70 : vector<1x1x8x8xbf16> to vector<8x8xbf16>
    %cst_77 = arith.constant dense<0.000000e+00> : vector<64x8xf32>
    %72 = tpu.matmul %69, %71, %cst_77 {dimension_numbers = #tpu.dot_dimension_numbers<[1], [0], [0], [1], [0, 0, 1, 1], [], []>} : vector<64x8xbf16>, vector<8x8xbf16>, vector<64x8xf32> -> vector<64x8xf32>
    %73 = arith.addf %66, %72 : vector<64x8xf32>
    %c0_78 = arith.constant 0 : index
    %c0_79 = arith.constant 0 : index
    %c0_80 = arith.constant 0 : index
    %74 = vector.load %arg4[%c0_78, %c0_79, %c0_80] : memref<1x1x8xf32, #tpu.memory_space<vmem>>, vector<1x1x8xf32>
    %75 = vector.shape_cast %74 : vector<1x1x8xf32> to vector<1x8xf32>
    %76 = vector.broadcast %75 : vector<1x8xf32> to vector<64x8xf32>
    %77 = arith.mulf %73, %76 : vector<64x8xf32>
    %c0_81 = arith.constant 0 : index
    %c0_82 = arith.constant 0 : index
    %c0_83 = arith.constant 0 : index
    %78 = vector.load %arg5[%c0_81, %c0_82, %c0_83] : memref<1x1x8xf32, #tpu.memory_space<vmem>>, vector<1x1x8xf32>
    %79 = vector.shape_cast %78 : vector<1x1x8xf32> to vector<1x8xf32>
    %80 = vector.broadcast %79 : vector<1x8xf32> to vector<64x8xf32>
    %81 = arith.addf %77, %80 : vector<64x8xf32>
    %cst_84 = arith.constant 0.000000e+00 : f32
    %82 = vector.broadcast %cst_84 : f32 to vector<64x8xf32>
    %83 = arith.maximumf %81, %82 : vector<64x8xf32>
    %84 = vector.shape_cast %83 : vector<64x8xf32> to vector<8x8x8xf32>
    %c1_85 = arith.constant 1 : index
    %c8_86 = arith.constant 8 : index
    %c0_87 = arith.constant 0 : index
    %85 = vector.load %arg9[%c1_85, %c8_86, %c0_87] : memref<10x24x8xf32, #tpu.memory_space<vmem>>, vector<8x8x8xf32>
    tpu.vector_store %arg9[%c1_85, %c8_86, %c0_87], %84 {strides = array<i32>} : memref<10x24x8xf32, #tpu.memory_space<vmem>>, vector<8x8x8xf32>,
    %cst_88 = arith.constant 0.000000e+00 : f32
    %86 = vector.broadcast %cst_88 : f32 to vector<64x8xf32>
    %c0_89 = arith.constant 0 : index
    %c7_90 = arith.constant 7 : index
    %c0_91 = arith.constant 0 : index
    %87 = vector.load %arg9[%c0_89, %c7_90, %c0_91] : memref<10x24x8xf32, #tpu.memory_space<vmem>>, vector<8x8x8xf32>
    %88 = vector.shape_cast %87 : vector<8x8x8xf32> to vector<64x8xf32>
    %89 = arith.truncf %88 : vector<64x8xf32> to vector<64x8xbf16>
    %c0_92 = arith.constant 0 : index
    %c0_93 = arith.constant 0 : index
    %c0_94 = arith.constant 0 : index
    %90 = vector.load %arg6[%c0_92, %c0_93, %c0_94] : memref<9x8x8xbf16, #tpu.memory_space<vmem>>, vector<1x8x8xbf16>
    %91 = vector.shape_cast %90 : vector<1x8x8xbf16> to vector<8x8xbf16>
    %cst_95 = arith.constant dense<0.000000e+00> : vector<64x8xf32>
    %92 = tpu.matmul %89, %91, %cst_95 {dimension_numbers = #tpu.dot_dimension_numbers<[1], [0], [0], [1], [0, 0, 1, 1], [], []>} : vector<64x8xbf16>, vector<8x8xbf16>, vector<64x8xf32> -> vector<64x8xf32>
    %93 = arith.addf %86, %92 : vector<64x8xf32>
    %c0_96 = arith.constant 0 : index
    %c8_97 = arith.constant 8 : index
    %c0_98 = arith.constant 0 : index
    %94 = vector.load %arg9[%c0_96, %c8_97, %c0_98] : memref<10x24x8xf32, #tpu.memory_space<vmem>>, vector<8x8x8xf32>
    %95 = vector.shape_cast %94 : vector<8x8x8xf32> to vector<64x8xf32>
    %96 = arith.truncf %95 : vector<64x8xf32> to vector<64x8xbf16>
    %c1_99 = arith.constant 1 : index
    %c0_100 = arith.constant 0 : index
    %c0_101 = arith.constant 0 : index
    %97 = vector.load %arg6[%c1_99, %c0_100, %c0_101] : memref<9x8x8xbf16, #tpu.memory_space<vmem>>, vector<1x8x8xbf16>
    %98 = vector.shape_cast %97 : vector<1x8x8xbf16> to vector<8x8xbf16>
    %cst_102 = arith.constant dense<0.000000e+00> : vector<64x8xf32>
    %99 = tpu.matmul %96, %98, %cst_102 {dimension_numbers = #tpu.dot_dimension_numbers<[1], [0], [0], [1], [0, 0, 1, 1], [], []>} : vector<64x8xbf16>, vector<8x8xbf16>, vector<64x8xf32> -> vector<64x8xf32>
    %100 = arith.addf %93, %99 : vector<64x8xf32>
    %c0_103 = arith.constant 0 : index
    %c9_104 = arith.constant 9 : index
    %c0_105 = arith.constant 0 : index
    %101 = vector.load %arg9[%c0_103, %c9_104, %c0_105] : memref<10x24x8xf32, #tpu.memory_space<vmem>>, vector<8x8x8xf32>
    %102 = vector.shape_cast %101 : vector<8x8x8xf32> to vector<64x8xf32>
    %103 = arith.truncf %102 : vector<64x8xf32> to vector<64x8xbf16>
    %c2_106 = arith.constant 2 : index
    %c0_107 = arith.constant 0 : index
    %c0_108 = arith.constant 0 : index
    %104 = vector.load %arg6[%c2_106, %c0_107, %c0_108] : memref<9x8x8xbf16, #tpu.memory_space<vmem>>, vector<1x8x8xbf16>
    %105 = vector.shape_cast %104 : vector<1x8x8xbf16> to vector<8x8xbf16>
    %cst_109 = arith.constant dense<0.000000e+00> : vector<64x8xf32>
    %106 = tpu.matmul %103, %105, %cst_109 {dimension_numbers = #tpu.dot_dimension_numbers<[1], [0], [0], [1], [0, 0, 1, 1], [], []>} : vector<64x8xbf16>, vector<8x8xbf16>, vector<64x8xf32> -> vector<64x8xf32>
    %107 = arith.addf %100, %106 : vector<64x8xf32>
    %c1_110 = arith.constant 1 : index
    %c7_111 = arith.constant 7 : index
    %c0_112 = arith.constant 0 : index
    %108 = vector.load %arg9[%c1_110, %c7_111, %c0_112] : memref<10x24x8xf32, #tpu.memory_space<vmem>>, vector<8x8x8xf32>
    %109 = vector.shape_cast %108 : vector<8x8x8xf32> to vector<64x8xf32>
    %110 = arith.truncf %109 : vector<64x8xf32> to vector<64x8xbf16>
    %c3_113 = arith.constant 3 : index
    %c0_114 = arith.constant 0 : index
    %c0_115 = arith.constant 0 : index
    %111 = vector.load %arg6[%c3_113, %c0_114, %c0_115] : memref<9x8x8xbf16, #tpu.memory_space<vmem>>, vector<1x8x8xbf16>
    %112 = vector.shape_cast %111 : vector<1x8x8xbf16> to vector<8x8xbf16>
    %cst_116 = arith.constant dense<0.000000e+00> : vector<64x8xf32>
    %113 = tpu.matmul %110, %112, %cst_116 {dimension_numbers = #tpu.dot_dimension_numbers<[1], [0], [0], [1], [0, 0, 1, 1], [], []>} : vector<64x8xbf16>, vector<8x8xbf16>, vector<64x8xf32> -> vector<64x8xf32>
    %114 = arith.addf %107, %113 : vector<64x8xf32>
    %c1_117 = arith.constant 1 : index
    %c8_118 = arith.constant 8 : index
    %c0_119 = arith.constant 0 : index
    %115 = vector.load %arg9[%c1_117, %c8_118, %c0_119] : memref<10x24x8xf32, #tpu.memory_space<vmem>>, vector<8x8x8xf32>
    %116 = vector.shape_cast %115 : vector<8x8x8xf32> to vector<64x8xf32>
    %117 = arith.truncf %116 : vector<64x8xf32> to vector<64x8xbf16>
    %c4_120 = arith.constant 4 : index
    %c0_121 = arith.constant 0 : index
    %c0_122 = arith.constant 0 : index
    %118 = vector.load %arg6[%c4_120, %c0_121, %c0_122] : memref<9x8x8xbf16, #tpu.memory_space<vmem>>, vector<1x8x8xbf16>
    %119 = vector.shape_cast %118 : vector<1x8x8xbf16> to vector<8x8xbf16>
    %cst_123 = arith.constant dense<0.000000e+00> : vector<64x8xf32>
    %120 = tpu.matmul %117, %119, %cst_123 {dimension_numbers = #tpu.dot_dimension_numbers<[1], [0], [0], [1], [0, 0, 1, 1], [], []>} : vector<64x8xbf16>, vector<8x8xbf16>, vector<64x8xf32> -> vector<64x8xf32>
    %121 = arith.addf %114, %120 : vector<64x8xf32>
    %c1_124 = arith.constant 1 : index
    %c9_125 = arith.constant 9 : index
    %c0_126 = arith.constant 0 : index
    %122 = vector.load %arg9[%c1_124, %c9_125, %c0_126] : memref<10x24x8xf32, #tpu.memory_space<vmem>>, vector<8x8x8xf32>
    %123 = vector.shape_cast %122 : vector<8x8x8xf32> to vector<64x8xf32>
    %124 = arith.truncf %123 : vector<64x8xf32> to vector<64x8xbf16>
    %c5_127 = arith.constant 5 : index
    %c0_128 = arith.constant 0 : index
    %c0_129 = arith.constant 0 : index
    %125 = vector.load %arg6[%c5_127, %c0_128, %c0_129] : memref<9x8x8xbf16, #tpu.memory_space<vmem>>, vector<1x8x8xbf16>
    %126 = vector.shape_cast %125 : vector<1x8x8xbf16> to vector<8x8xbf16>
    %cst_130 = arith.constant dense<0.000000e+00> : vector<64x8xf32>
    %127 = tpu.matmul %124, %126, %cst_130 {dimension_numbers = #tpu.dot_dimension_numbers<[1], [0], [0], [1], [0, 0, 1, 1], [], []>} : vector<64x8xbf16>, vector<8x8xbf16>, vector<64x8xf32> -> vector<64x8xf32>
    %128 = arith.addf %121, %127 : vector<64x8xf32>
    %c2_131 = arith.constant 2 : index
    %c7_132 = arith.constant 7 : index
    %c0_133 = arith.constant 0 : index
    %129 = vector.load %arg9[%c2_131, %c7_132, %c0_133] : memref<10x24x8xf32, #tpu.memory_space<vmem>>, vector<8x8x8xf32>
    %130 = vector.shape_cast %129 : vector<8x8x8xf32> to vector<64x8xf32>
    %131 = arith.truncf %130 : vector<64x8xf32> to vector<64x8xbf16>
    %c6_134 = arith.constant 6 : index
    %c0_135 = arith.constant 0 : index
    %c0_136 = arith.constant 0 : index
    %132 = vector.load %arg6[%c6_134, %c0_135, %c0_136] : memref<9x8x8xbf16, #tpu.memory_space<vmem>>, vector<1x8x8xbf16>
    %133 = vector.shape_cast %132 : vector<1x8x8xbf16> to vector<8x8xbf16>
    %cst_137 = arith.constant dense<0.000000e+00> : vector<64x8xf32>
    %134 = tpu.matmul %131, %133, %cst_137 {dimension_numbers = #tpu.dot_dimension_numbers<[1], [0], [0], [1], [0, 0, 1, 1], [], []>} : vector<64x8xbf16>, vector<8x8xbf16>, vector<64x8xf32> -> vector<64x8xf32>
    %135 = arith.addf %128, %134 : vector<64x8xf32>
    %c2_138 = arith.constant 2 : index
    %c8_139 = arith.constant 8 : index
    %c0_140 = arith.constant 0 : index
    %136 = vector.load %arg9[%c2_138, %c8_139, %c0_140] : memref<10x24x8xf32, #tpu.memory_space<vmem>>, vector<8x8x8xf32>
    %137 = vector.shape_cast %136 : vector<8x8x8xf32> to vector<64x8xf32>
    %138 = arith.truncf %137 : vector<64x8xf32> to vector<64x8xbf16>
    %c7_141 = arith.constant 7 : index
    %c0_142 = arith.constant 0 : index
    %c0_143 = arith.constant 0 : index
    %139 = vector.load %arg6[%c7_141, %c0_142, %c0_143] : memref<9x8x8xbf16, #tpu.memory_space<vmem>>, vector<1x8x8xbf16>
    %140 = vector.shape_cast %139 : vector<1x8x8xbf16> to vector<8x8xbf16>
    %cst_144 = arith.constant dense<0.000000e+00> : vector<64x8xf32>
    %141 = tpu.matmul %138, %140, %cst_144 {dimension_numbers = #tpu.dot_dimension_numbers<[1], [0], [0], [1], [0, 0, 1, 1], [], []>} : vector<64x8xbf16>, vector<8x8xbf16>, vector<64x8xf32> -> vector<64x8xf32>
    %142 = arith.addf %135, %141 : vector<64x8xf32>
    %c2_145 = arith.constant 2 : index
    %c9_146 = arith.constant 9 : index
    %c0_147 = arith.constant 0 : index
    %143 = vector.load %arg9[%c2_145, %c9_146, %c0_147] : memref<10x24x8xf32, #tpu.memory_space<vmem>>, vector<8x8x8xf32>
    %144 = vector.shape_cast %143 : vector<8x8x8xf32> to vector<64x8xf32>
    %145 = arith.truncf %144 : vector<64x8xf32> to vector<64x8xbf16>
    %c8_148 = arith.constant 8 : index
    %c0_149 = arith.constant 0 : index
    %c0_150 = arith.constant 0 : index
    %146 = vector.load %arg6[%c8_148, %c0_149, %c0_150] : memref<9x8x8xbf16, #tpu.memory_space<vmem>>, vector<1x8x8xbf16>
    %147 = vector.shape_cast %146 : vector<1x8x8xbf16> to vector<8x8xbf16>
    %cst_151 = arith.constant dense<0.000000e+00> : vector<64x8xf32>
    %148 = tpu.matmul %145, %147, %cst_151 {dimension_numbers = #tpu.dot_dimension_numbers<[1], [0], [0], [1], [0, 0, 1, 1], [], []>} : vector<64x8xbf16>, vector<8x8xbf16>, vector<64x8xf32> -> vector<64x8xf32>
    %149 = arith.addf %142, %148 : vector<64x8xf32>
    %c0_152 = arith.constant 0 : index
    %c0_153 = arith.constant 0 : index
    %150 = vector.load %arg7[%c0_152, %c0_153] : memref<1x8xf32, #tpu.memory_space<vmem>>, vector<1x8xf32>
    %151 = vector.broadcast %150 : vector<1x8xf32> to vector<64x8xf32>
    %152 = arith.addf %149, %151 : vector<64x8xf32>
    %cst_154 = arith.constant 0.000000e+00 : f32
    %153 = vector.broadcast %cst_154 : f32 to vector<64x8xf32>
    %154 = arith.maximumf %152, %153 : vector<64x8xf32>
    %155 = vector.shape_cast %154 : vector<64x8xf32> to vector<8x8x8xf32>
    %c0_155 = arith.constant 0 : index
    %c0_156 = arith.constant 0 : index
    %c0_157 = arith.constant 0 : index
    %c0_158 = arith.constant 0 : index
    %c0_159 = arith.constant 0 : index
    %156 = vector.load %arg8[%c0_155, %c0_156, %c0_157, %c0_158, %c0_159] : memref<1x1x8x8x8xf32, #tpu.memory_space<vmem>>, vector<1x1x8x8x8xf32>
    %157 = vector.shape_cast %156 : vector<1x1x8x8x8xf32> to vector<8x8x8xf32>
    %158 = vector.shape_cast %155 : vector<8x8x8xf32> to vector<1x1x8x8x8xf32>
    tpu.vector_store %arg8[%c0_155, %c0_156, %c0_157, %c0_158, %c0_159], %158 {strides = array<i32>} : memref<1x1x8x8x8xf32, #tpu.memory_space<vmem>>, vector<1x1x8x8x8xf32>,
    %c0_160 = arith.constant 0 : index
    %c0_161 = arith.constant 0 : index
    %c0_162 = arith.constant 0 : index
    %159 = vector.load %arg10[%c0_160, %c0_161, %c0_162] : memref<8x8x8xf32, #tpu.memory_space<vmem>>, vector<8x8x8xf32>
    tpu.vector_store %arg10[%c0_160, %c0_161, %c0_162], %155 {strides = array<i32>} : memref<8x8x8xf32, #tpu.memory_space<vmem>>, vector<8x8x8xf32>,
    return
  }
  func.func @transform_0(%arg0: i32, %arg1: i32) -> (i32, i32, i32, i32, i32) {
    %c0_i32 = arith.constant 0 : i32
    %c0_i32_0 = arith.constant 0 : i32
    %c0_i32_1 = arith.constant 0 : i32
    %c0_i32_2 = arith.constant 0 : i32
    return %arg1, %arg0, %c0_i32, %c0_i32_0, %c0_i32_1 : i32, i32, i32, i32, i32
  }
  func.func @transform_1(%arg0: i32, %arg1: i32) -> (i32, i32, i32, i32) {
    %c0_i32 = arith.constant 0 : i32
    %c0_i32_0 = arith.constant 0 : i32
    %c0_i32_1 = arith.constant 0 : i32
    %c0_i32_2 = arith.constant 0 : i32
    return %arg1, %c0_i32, %c0_i32_0, %c0_i32_1 : i32, i32, i32, i32
  }
  func.func @transform_2(%arg0: i32, %arg1: i32) -> (i32, i32, i32) {
    %c0_i32 = arith.constant 0 : i32
    %c0_i32_0 = arith.constant 0 : i32
    %c0_i32_1 = arith.constant 0 : i32
    return %arg1, %c0_i32, %c0_i32_0 : i32, i32, i32
  }
  func.func @transform_3(%arg0: i32, %arg1: i32) -> (i32, i32, i32) {
    %c0_i32 = arith.constant 0 : i32
    %c0_i32_0 = arith.constant 0 : i32
    %c0_i32_1 = arith.constant 0 : i32
    return %arg1, %c0_i32, %c0_i32_0 : i32, i32, i32
  }
  func.func @transform_4(%arg0: i32, %arg1: i32) -> (i32, i32, i32) {
    %c0_i32 = arith.constant 0 : i32
    %c0_i32_0 = arith.constant 0 : i32
    %c0_i32_1 = arith.constant 0 : i32
    %c0_i32_2 = arith.constant 0 : i32
    return %c0_i32, %c0_i32_0, %c0_i32_1 : i32, i32, i32
  }
  func.func @transform_5(%arg0: i32, %arg1: i32) -> (i32, i32) {
    %c0_i32 = arith.constant 0 : i32
    %c0_i32_0 = arith.constant 0 : i32
    %c0_i32_1 = arith.constant 0 : i32
    return %c0_i32, %c0_i32_0 : i32, i32
  }
  func.func @transform_6(%arg0: i32, %arg1: i32) -> (i32, i32, i32, i32, i32) {
    %c0_i32 = arith.constant 0 : i32
    %c0_i32_0 = arith.constant 0 : i32
    %c0_i32_1 = arith.constant 0 : i32
    %c0_i32_2 = arith.constant 0 : i32
    return %arg1, %arg0, %c0_i32, %c0_i32_0, %c0_i32_1 : i32, i32, i32, i32, i32
  }
}

</mosaic_0001>

<llo_original>
// kernel: ms_coder_forward.3
$region0: #{ms_coder_forward.3}
  #allocation0 [shape = 'u32[]', space=smem, size = 0x4, offset = 0x4, fixed_abs, tag = 'smem constant byte address 0x4 - core index']
  #allocation1 [shape = 'u32[72,128]{1,0:T(1,128)}', space=vmem, size = 0x9000, scoped, tag = 'internal scratch']
  %s0 = inlined_call_operand.vmem [shape: f32[128,8], index: 0, kind: input, shape index: {}]
  %s1 = inlined_call_operand.vmem [shape: bf16[4,8,8], index: 1, kind: input, shape index: {}]
  %s2 = inlined_call_operand.vmem [shape: f32[4,1,8], index: 2, kind: input, shape index: {}]
  %s3 = inlined_call_operand.vmem [shape: f32[4,1,8], index: 3, kind: input, shape index: {}]
  %s4 = inlined_call_operand.vmem [shape: f32[4,128,8], index: 4, kind: output, shape index: {}]
  %s5 = sld [smem:[#allocation0]]
  $region26: #{ms_coder_forward.3} parent=0
    _
  %s7 = ssub.s32 1, %s5
  %s8 = scalar_select 0, %s7, %s5
  // Predicated region
  $region2: #{ms_coder_forward.3} parent=0 // pred_check
    _
  $region3: #{ms_coder_forward.3} parent=0 // pred_check_branch
    %10 = sbr.rel (0) target = $region5
  $region4: #{ms_coder_forward.3} parent=0 // pred_region
    _
  $region5: #{ms_coder_forward.3} parent=0 // pred_fallthru
    _
  // Predicated region
  $region6: #{ms_coder_forward.3} parent=0 // pred_check
    _
  $region7: #{ms_coder_forward.3} parent=0 // pred_check_branch
    %12 = sbr.rel (0) target = $region9
  $region8: #{ms_coder_forward.3} parent=0 // pred_region
    _
  $region9: #{ms_coder_forward.3} parent=0 // pred_fallthru
    _
  // Predicated region
  $region10: #{ms_coder_forward.3} parent=0 // pred_check
    _
  $region11: #{ms_coder_forward.3} parent=0 // pred_check_branch
    %14 = sbr.rel (0) target = $region13
  $region12: #{ms_coder_forward.3} parent=0 // pred_region
    _
  $region13: #{ms_coder_forward.3} parent=0 // pred_fallthru
    _
  // Predicated region
  $region14: #{ms_coder_forward.3} parent=0 // pred_check
    _
  $region15: #{ms_coder_forward.3} parent=0 // pred_check_branch
    %16 = sbr.rel (0) target = $region17
  $region16: #{ms_coder_forward.3} parent=0 // pred_region
    _
  $region17: #{ms_coder_forward.3} parent=0 // pred_fallthru
    _
  %v18 = vld [vmem:[%s0] sm:$0xff]
  %v19 = vld [vmem:[%s0 + $0x8] sm:$0xff]
  %v20 = vld [vmem:[%s0 + $0x10] sm:$0xff]
  %v21 = vld [vmem:[%s0 + $0x18] sm:$0xff]
  %v22 = vld [vmem:[%s0 + $0x20] sm:$0xff]
  %v23 = vld [vmem:[%s0 + $0x28] sm:$0xff]
  %v24 = vld [vmem:[%s0 + $0x30] sm:$0xff]
  %v25 = vld [vmem:[%s0 + $0x38] sm:$0xff]
  %v26 = vld [vmem:[%s0 + $0x40] sm:$0xff]
  %v27 = vld [vmem:[%s0 + $0x48] sm:$0xff]
  %v28 = vld [vmem:[%s0 + $0x50] sm:$0xff]
  %v29 = vld [vmem:[%s0 + $0x58] sm:$0xff]
  %v30 = vld [vmem:[%s0 + $0x60] sm:$0xff]
  %v31 = vld [vmem:[%s0 + $0x68] sm:$0xff]
  %v32 = vld [vmem:[%s0 + $0x70] sm:$0xff]
  %v33 = vld [vmem:[%s0 + $0x78] sm:$0xff]
  %v34 = vpack.c.bf16 %v19, %v18
  %v35 = vpack.c.bf16 %v21, %v20
  %v36 = vpack.c.bf16 %v23, %v22
  %v37 = vpack.c.bf16 %v25, %v24
  %v38 = vpack.c.bf16 %v27, %v26
  %v39 = vpack.c.bf16 %v29, %v28
  %v40 = vpack.c.bf16 %v31, %v30
  %v41 = vpack.c.bf16 %v33, %v32
  %v42 = vld [vmem:[%s1] sm:$0xf]
  %vm43 = vcmask 64512
  %v45 = vsel %vm43, %v34, 0
  %v48 = vsel %vm43, %v35, 0
  %v51 = vsel %vm43, %v36, 0
  %v54 = vsel %vm43, %v37, 0
  %v57 = vsel %vm43, %v38, 0
  %v60 = vsel %vm43, %v39, 0
  %v63 = vsel %vm43, %v40, 0
  %v66 = vsel %vm43, %v41, 0
  %vm68 = vcmask 1043456
  %v70 = vsel %vm68, %v42, 0
  %72 = vmatpush.bf16.msra.mxu0 0
  %73 = vmatpush.bf16.msra.mxu0 0
  %74 = vmatpush.bf16.msra.mxu0 0
  %75 = vmatpush.bf16.msra.mxu0 0
  %76 = vmatpush.bf16.msra.mxu0 0
  %77 = vmatpush.bf16.msra.mxu0 0
  %78 = vmatpush.bf16.msra.mxu0 0
  %79 = vmatpush.bf16.msra.mxu0 %v70
  %80 = vmatmul.bf16.gmra.mxu0 %v45
  %v81 = vpop.f32.mrf.mxu0
  %v82 = vadd.f32 0.0, %v81
  %v83 = vpop.f32.mrf.mxu0
  %v84 = vadd.f32 0.0, %v83
  %85 = vmatmul.bf16.gmra.mxu0 %v48
  %v86 = vpop.f32.mrf.mxu0
  %v87 = vadd.f32 0.0, %v86
  %v88 = vpop.f32.mrf.mxu0
  %v89 = vadd.f32 0.0, %v88
  %90 = vmatmul.bf16.gmra.mxu0 %v51
  %v91 = vpop.f32.mrf.mxu0
  %v92 = vadd.f32 0.0, %v91
  %v93 = vpop.f32.mrf.mxu0
  %v94 = vadd.f32 0.0, %v93
  %95 = vmatmul.bf16.gmra.mxu0 %v54
  %v96 = vpop.f32.mrf.mxu0
  %v97 = vadd.f32 0.0, %v96
  %v98 = vpop.f32.mrf.mxu0
  %v99 = vadd.f32 0.0, %v98
  %100 = vmatmul.bf16.gmra.mxu0 %v57
  %v101 = vpop.f32.mrf.mxu0
  %v102 = vadd.f32 0.0, %v101
  %v103 = vpop.f32.mrf.mxu0
  %v104 = vadd.f32 0.0, %v103
  %105 = vmatmul.bf16.gmra.mxu0 %v60
  %v106 = vpop.f32.mrf.mxu0
  %v107 = vadd.f32 0.0, %v106
  %v108 = vpop.f32.mrf.mxu0
  %v109 = vadd.f32 0.0, %v108
  %110 = vmatmul.bf16.gmra.mxu0 %v63
  %v111 = vpop.f32.mrf.mxu0
  %v112 = vadd.f32 0.0, %v111
  %v113 = vpop.f32.mrf.mxu0
  %v114 = vadd.f32 0.0, %v113
  %115 = vmatmul.bf16.gmra.mxu0 %v66
  %v116 = vpop.f32.mrf.mxu0
  %v117 = vadd.f32 0.0, %v116
  %v118 = vpop.f32.mrf.mxu0
  %v119 = vadd.f32 0.0, %v118
  %120 = vdwg.mxu0
  %v121 = vld [vmem:[%s2] sm:$0x1]
  %v123 = vperm.slane %v121, 0
  %v125 = vmul.f32 %v82, %v123
  %v126 = vmul.f32 %v84, %v123
  %v127 = vmul.f32 %v87, %v123
  %v128 = vmul.f32 %v89, %v123
  %v129 = vmul.f32 %v92, %v123
  %v130 = vmul.f32 %v94, %v123
  %v131 = vmul.f32 %v97, %v123
  %v132 = vmul.f32 %v99, %v123
  %v133 = vmul.f32 %v102, %v123
  %v134 = vmul.f32 %v104, %v123
  %v135 = vmul.f32 %v107, %v123
  %v136 = vmul.f32 %v109, %v123
  %v137 = vmul.f32 %v112, %v123
  %v138 = vmul.f32 %v114, %v123
  %v139 = vmul.f32 %v117, %v123
  %v140 = vmul.f32 %v119, %v123
  %v141 = vld [vmem:[%s3] sm:$0x1]
  %v143 = vperm.slane %v141, 0
  %v145 = vadd.f32 %v125, %v143
  %v146 = vadd.f32 %v126, %v143
  %v147 = vadd.f32 %v127, %v143
  %v148 = vadd.f32 %v128, %v143
  %v149 = vadd.f32 %v129, %v143
  %v150 = vadd.f32 %v130, %v143
  %v151 = vadd.f32 %v131, %v143
  %v152 = vadd.f32 %v132, %v143
  %v153 = vadd.f32 %v133, %v143
  %v154 = vadd.f32 %v134, %v143
  %v155 = vadd.f32 %v135, %v143
  %v156 = vadd.f32 %v136, %v143
  %v157 = vadd.f32 %v137, %v143
  %v158 = vadd.f32 %v138, %v143
  %v159 = vadd.f32 %v139, %v143
  %v160 = vadd.f32 %v140, %v143
  %v161 = vmax.f32 %v145, 0.0
  %v162 = vmax.f32 %v146, 0.0
  %v163 = vmax.f32 %v147, 0.0
  %v164 = vmax.f32 %v148, 0.0
  %v165 = vmax.f32 %v149, 0.0
  %v166 = vmax.f32 %v150, 0.0
  %v167 = vmax.f32 %v151, 0.0
  %v168 = vmax.f32 %v152, 0.0
  %v169 = vmax.f32 %v153, 0.0
  %v170 = vmax.f32 %v154, 0.0
  %v171 = vmax.f32 %v155, 0.0
  %v172 = vmax.f32 %v156, 0.0
  %v173 = vmax.f32 %v157, 0.0
  %v174 = vmax.f32 %v158, 0.0
  %v175 = vmax.f32 %v159, 0.0
  %v176 = vmax.f32 %v160, 0.0
  %177 = vst.msk [vmem:[%s4] sm:$0xff] %vm43, %v161
  %178 = vst.msk [vmem:[%s4 + $0x8] sm:$0xff] %vm43, %v162
  %179 = vst.msk [vmem:[%s4 + $0x10] sm:$0xff] %vm43, %v163
  %180 = vst.msk [vmem:[%s4 + $0x18] sm:$0xff] %vm43, %v164
  %181 = vst.msk [vmem:[%s4 + $0x20] sm:$0xff] %vm43, %v165
  %182 = vst.msk [vmem:[%s4 + $0x28] sm:$0xff] %vm43, %v166
  %183 = vst.msk [vmem:[%s4 + $0x30] sm:$0xff] %vm43, %v167
  %184 = vst.msk [vmem:[%s4 + $0x38] sm:$0xff] %vm43, %v168
  %185 = vst.msk [vmem:[%s4 + $0x40] sm:$0xff] %vm43, %v169
  %186 = vst.msk [vmem:[%s4 + $0x48] sm:$0xff] %vm43, %v170
  %187 = vst.msk [vmem:[%s4 + $0x50] sm:$0xff] %vm43, %v171
  %188 = vst.msk [vmem:[%s4 + $0x58] sm:$0xff] %vm43, %v172
  %189 = vst.msk [vmem:[%s4 + $0x60] sm:$0xff] %vm43, %v173
  %190 = vst.msk [vmem:[%s4 + $0x68] sm:$0xff] %vm43, %v174
  %191 = vst.msk [vmem:[%s4 + $0x70] sm:$0xff] %vm43, %v175
  %192 = vst.msk [vmem:[%s4 + $0x78] sm:$0xff] %vm43, %v176
  %s193 = scalar_lea.vmem %s1, 4
  %v194 = vld [vmem:[%s193] sm:$0xf]
  %v196 = vsel %vm68, %v194, 0
  %198 = vmatpush.bf16.msra.mxu0 0
  %199 = vmatpush.bf16.msra.mxu0 0
  %200 = vmatpush.bf16.msra.mxu0 0
  %201 = vmatpush.bf16.msra.mxu0 0
  %202 = vmatpush.bf16.msra.mxu0 0
  %203 = vmatpush.bf16.msra.mxu0 0
  %204 = vmatpush.bf16.msra.mxu0 0
  %205 = vmatpush.bf16.msra.mxu0 %v196
  %206 = vmatmul.bf16.gmra.mxu0 %v45
  %v207 = vpop.f32.mrf.mxu0
  %v208 = vadd.f32 0.0, %v207
  %v209 = vpop.f32.mrf.mxu0
  %v210 = vadd.f32 0.0, %v209
  %211 = vmatmul.bf16.gmra.mxu0 %v48
  %v212 = vpop.f32.mrf.mxu0
  %v213 = vadd.f32 0.0, %v212
  %v214 = vpop.f32.mrf.mxu0
  %v215 = vadd.f32 0.0, %v214
  %216 = vmatmul.bf16.gmra.mxu0 %v51
  %v217 = vpop.f32.mrf.mxu0
  %v218 = vadd.f32 0.0, %v217
  %v219 = vpop.f32.mrf.mxu0
  %v220 = vadd.f32 0.0, %v219
  %221 = vmatmul.bf16.gmra.mxu0 %v54
  %v222 = vpop.f32.mrf.mxu0
  %v223 = vadd.f32 0.0, %v222
  %v224 = vpop.f32.mrf.mxu0
  %v225 = vadd.f32 0.0, %v224
  %226 = vmatmul.bf16.gmra.mxu0 %v57
  %v227 = vpop.f32.mrf.mxu0
  %v228 = vadd.f32 0.0, %v227
  %v229 = vpop.f32.mrf.mxu0
  %v230 = vadd.f32 0.0, %v229
  %231 = vmatmul.bf16.gmra.mxu0 %v60
  %v232 = vpop.f32.mrf.mxu0
  %v233 = vadd.f32 0.0, %v232
  %v234 = vpop.f32.mrf.mxu0
  %v235 = vadd.f32 0.0, %v234
  %236 = vmatmul.bf16.gmra.mxu0 %v63
  %v237 = vpop.f32.mrf.mxu0
  %v238 = vadd.f32 0.0, %v237
  %v239 = vpop.f32.mrf.mxu0
  %v240 = vadd.f32 0.0, %v239
  %241 = vmatmul.bf16.gmra.mxu0 %v66
  %v242 = vpop.f32.mrf.mxu0
  %v243 = vadd.f32 0.0, %v242
  %v244 = vpop.f32.mrf.mxu0
  %v245 = vadd.f32 0.0, %v244
  %246 = vdwg.mxu0
  %s247 = scalar_lea.vmem %s2, 1
  %v248 = vld [vmem:[%s247] sm:$0x1]
  %v250 = vperm.slane %v248, 0
  %v252 = vmul.f32 %v208, %v250
  %v253 = vmul.f32 %v210, %v250
  %v254 = vmul.f32 %v213, %v250
  %v255 = vmul.f32 %v215, %v250
  %v256 = vmul.f32 %v218, %v250
  %v257 = vmul.f32 %v220, %v250
  %v258 = vmul.f32 %v223, %v250
  %v259 = vmul.f32 %v225, %v250
  %v260 = vmul.f32 %v228, %v250
  %v261 = vmul.f32 %v230, %v250
  %v262 = vmul.f32 %v233, %v250
  %v263 = vmul.f32 %v235, %v250
  %v264 = vmul.f32 %v238, %v250
  %v265 = vmul.f32 %v240, %v250
  %v266 = vmul.f32 %v243, %v250
  %v267 = vmul.f32 %v245, %v250
  %s268 = scalar_lea.vmem %s3, 1
  %v269 = vld [vmem:[%s268] sm:$0x1]
  %v271 = vperm.slane %v269, 0
  %v273 = vadd.f32 %v252, %v271
  %v274 = vadd.f32 %v253, %v271
  %v275 = vadd.f32 %v254, %v271
  %v276 = vadd.f32 %v255, %v271
  %v277 = vadd.f32 %v256, %v271
  %v278 = vadd.f32 %v257, %v271
  %v279 = vadd.f32 %v258, %v271
  %v280 = vadd.f32 %v259, %v271
  %v281 = vadd.f32 %v260, %v271
  %v282 = vadd.f32 %v261, %v271
  %v283 = vadd.f32 %v262, %v271
  %v284 = vadd.f32 %v263, %v271
  %v285 = vadd.f32 %v264, %v271
  %v286 = vadd.f32 %v265, %v271
  %v287 = vadd.f32 %v266, %v271
  %v288 = vadd.f32 %v267, %v271
  %v289 = vmax.f32 %v273, 0.0
  %v290 = vmax.f32 %v274, 0.0
  %v291 = vmax.f32 %v275, 0.0
  %v292 = vmax.f32 %v276, 0.0
  %v293 = vmax.f32 %v277, 0.0
  %v294 = vmax.f32 %v278, 0.0
  %v295 = vmax.f32 %v279, 0.0
  %v296 = vmax.f32 %v280, 0.0
  %v297 = vmax.f32 %v281, 0.0
  %v298 = vmax.f32 %v282, 0.0
  %v299 = vmax.f32 %v283, 0.0
  %v300 = vmax.f32 %v284, 0.0
  %v301 = vmax.f32 %v285, 0.0
  %v302 = vmax.f32 %v286, 0.0
  %v303 = vmax.f32 %v287, 0.0
  %v304 = vmax.f32 %v288, 0.0
  %s305 = scalar_lea.vmem %s4, 128
  %306 = vst.msk [vmem:[%s305] sm:$0xff] %vm43, %v289
  %307 = vst.msk [vmem:[%s305 + $0x8] sm:$0xff] %vm43, %v290
  %308 = vst.msk [vmem:[%s305 + $0x10] sm:$0xff] %vm43, %v291
  %309 = vst.msk [vmem:[%s305 + $0x18] sm:$0xff] %vm43, %v292
  %310 = vst.msk [vmem:[%s305 + $0x20] sm:$0xff] %vm43, %v293
  %311 = vst.msk [vmem:[%s305 + $0x28] sm:$0xff] %vm43, %v294
  %312 = vst.msk [vmem:[%s305 + $0x30] sm:$0xff] %vm43, %v295
  %313 = vst.msk [vmem:[%s305 + $0x38] sm:$0xff] %vm43, %v296
  %314 = vst.msk [vmem:[%s305 + $0x40] sm:$0xff] %vm43, %v297
  %315 = vst.msk [vmem:[%s305 + $0x48] sm:$0xff] %vm43, %v298
  %316 = vst.msk [vmem:[%s305 + $0x50] sm:$0xff] %vm43, %v299
  %317 = vst.msk [vmem:[%s305 + $0x58] sm:$0xff] %vm43, %v300
  %318 = vst.msk [vmem:[%s305 + $0x60] sm:$0xff] %vm43, %v301
  %319 = vst.msk [vmem:[%s305 + $0x68] sm:$0xff] %vm43, %v302
  %320 = vst.msk [vmem:[%s305 + $0x70] sm:$0xff] %vm43, %v303
  %321 = vst.msk [vmem:[%s305 + $0x78] sm:$0xff] %vm43, %v304
  %s322 = scalar_lea.vmem %s1, 8
  %v323 = vld [vmem:[%s322] sm:$0xf]
  %v325 = vsel %vm68, %v323, 0
  %327 = vmatpush.bf16.msra.mxu0 0
  %328 = vmatpush.bf16.msra.mxu0 0
  %329 = vmatpush.bf16.msra.mxu0 0
  %330 = vmatpush.bf16.msra.mxu0 0
  %331 = vmatpush.bf16.msra.mxu0 0
  %332 = vmatpush.bf16.msra.mxu0 0
  %333 = vmatpush.bf16.msra.mxu0 0
  %334 = vmatpush.bf16.msra.mxu0 %v325
  %335 = vmatmul.bf16.gmra.mxu0 %v45
  %v336 = vpop.f32.mrf.mxu0
  %v337 = vadd.f32 0.0, %v336
  %v338 = vpop.f32.mrf.mxu0
  %v339 = vadd.f32 0.0, %v338
  %340 = vmatmul.bf16.gmra.mxu0 %v48
  %v341 = vpop.f32.mrf.mxu0
  %v342 = vadd.f32 0.0, %v341
  %v343 = vpop.f32.mrf.mxu0
  %v344 = vadd.f32 0.0, %v343
  %345 = vmatmul.bf16.gmra.mxu0 %v51
  %v346 = vpop.f32.mrf.mxu0
  %v347 = vadd.f32 0.0, %v346
  %v348 = vpop.f32.mrf.mxu0
  %v349 = vadd.f32 0.0, %v348
  %350 = vmatmul.bf16.gmra.mxu0 %v54
  %v351 = vpop.f32.mrf.mxu0
  %v352 = vadd.f32 0.0, %v351
  %v353 = vpop.f32.mrf.mxu0
  %v354 = vadd.f32 0.0, %v353
  %355 = vmatmul.bf16.gmra.mxu0 %v57
  %v356 = vpop.f32.mrf.mxu0
  %v357 = vadd.f32 0.0, %v356
  %v358 = vpop.f32.mrf.mxu0
  %v359 = vadd.f32 0.0, %v358
  %360 = vmatmul.bf16.gmra.mxu0 %v60
  %v361 = vpop.f32.mrf.mxu0
  %v362 = vadd.f32 0.0, %v361
  %v363 = vpop.f32.mrf.mxu0
  %v364 = vadd.f32 0.0, %v363
  %365 = vmatmul.bf16.gmra.mxu0 %v63
  %v366 = vpop.f32.mrf.mxu0
  %v367 = vadd.f32 0.0, %v366
  %v368 = vpop.f32.mrf.mxu0
  %v369 = vadd.f32 0.0, %v368
  %370 = vmatmul.bf16.gmra.mxu0 %v66
  %v371 = vpop.f32.mrf.mxu0
  %v372 = vadd.f32 0.0, %v371
  %v373 = vpop.f32.mrf.mxu0
  %v374 = vadd.f32 0.0, %v373
  %375 = vdwg.mxu0
  %s376 = scalar_lea.vmem %s2, 2
  %v377 = vld [vmem:[%s376] sm:$0x1]
  %v379 = vperm.slane %v377, 0
  %v381 = vmul.f32 %v337, %v379
  %v382 = vmul.f32 %v339, %v379
  %v383 = vmul.f32 %v342, %v379
  %v384 = vmul.f32 %v344, %v379
  %v385 = vmul.f32 %v347, %v379
  %v386 = vmul.f32 %v349, %v379
  %v387 = vmul.f32 %v352, %v379
  %v388 = vmul.f32 %v354, %v379
  %v389 = vmul.f32 %v357, %v379
  %v390 = vmul.f32 %v359, %v379
  %v391 = vmul.f32 %v362, %v379
  %v392 = vmul.f32 %v364, %v379
  %v393 = vmul.f32 %v367, %v379
  %v394 = vmul.f32 %v369, %v379
  %v395 = vmul.f32 %v372, %v379
  %v396 = vmul.f32 %v374, %v379
  %s397 = scalar_lea.vmem %s3, 2
  %v398 = vld [vmem:[%s397] sm:$0x1]
  %v400 = vperm.slane %v398, 0
  %v402 = vadd.f32 %v381, %v400
  %v403 = vadd.f32 %v382, %v400
  %v404 = vadd.f32 %v383, %v400
  %v405 = vadd.f32 %v384, %v400
  %v406 = vadd.f32 %v385, %v400
  %v407 = vadd.f32 %v386, %v400
  %v408 = vadd.f32 %v387, %v400
  %v409 = vadd.f32 %v388, %v400
  %v410 = vadd.f32 %v389, %v400
  %v411 = vadd.f32 %v390, %v400
  %v412 = vadd.f32 %v391, %v400
  %v413 = vadd.f32 %v392, %v400
  %v414 = vadd.f32 %v393, %v400
  %v415 = vadd.f32 %v394, %v400
  %v416 = vadd.f32 %v395, %v400
  %v417 = vadd.f32 %v396, %v400
  %v418 = vmax.f32 %v402, 0.0
  %v419 = vmax.f32 %v403, 0.0
  %v420 = vmax.f32 %v404, 0.0
  %v421 = vmax.f32 %v405, 0.0
  %v422 = vmax.f32 %v406, 0.0
  %v423 = vmax.f32 %v407, 0.0
  %v424 = vmax.f32 %v408, 0.0
  %v425 = vmax.f32 %v409, 0.0
  %v426 = vmax.f32 %v410, 0.0
  %v427 = vmax.f32 %v411, 0.0
  %v428 = vmax.f32 %v412, 0.0
  %v429 = vmax.f32 %v413, 0.0
  %v430 = vmax.f32 %v414, 0.0
  %v431 = vmax.f32 %v415, 0.0
  %v432 = vmax.f32 %v416, 0.0
  %v433 = vmax.f32 %v417, 0.0
  %s434 = scalar_lea.vmem %s4, 256
  %435 = vst.msk [vmem:[%s434] sm:$0xff] %vm43, %v418
  %436 = vst.msk [vmem:[%s434 + $0x8] sm:$0xff] %vm43, %v419
  %437 = vst.msk [vmem:[%s434 + $0x10] sm:$0xff] %vm43, %v420
  %438 = vst.msk [vmem:[%s434 + $0x18] sm:$0xff] %vm43, %v421
  %439 = vst.msk [vmem:[%s434 + $0x20] sm:$0xff] %vm43, %v422
  %440 = vst.msk [vmem:[%s434 + $0x28] sm:$0xff] %vm43, %v423
  %441 = vst.msk [vmem:[%s434 + $0x30] sm:$0xff] %vm43, %v424
  %442 = vst.msk [vmem:[%s434 + $0x38] sm:$0xff] %vm43, %v425
  %443 = vst.msk [vmem:[%s434 + $0x40] sm:$0xff] %vm43, %v426
  %444 = vst.msk [vmem:[%s434 + $0x48] sm:$0xff] %vm43, %v427
  %445 = vst.msk [vmem:[%s434 + $0x50] sm:$0xff] %vm43, %v428
  %446 = vst.msk [vmem:[%s434 + $0x58] sm:$0xff] %vm43, %v429
  %447 = vst.msk [vmem:[%s434 + $0x60] sm:$0xff] %vm43, %v430
  %448 = vst.msk [vmem:[%s434 + $0x68] sm:$0xff] %vm43, %v431
  %449 = vst.msk [vmem:[%s434 + $0x70] sm:$0xff] %vm43, %v432
  %450 = vst.msk [vmem:[%s434 + $0x78] sm:$0xff] %vm43, %v433
  %s451 = scalar_lea.vmem %s1, 12
  %v452 = vld [vmem:[%s451] sm:$0xf]
  %v454 = vsel %vm68, %v452, 0
  %456 = vmatpush.bf16.msra.mxu0 0
  %457 = vmatpush.bf16.msra.mxu0 0
  %458 = vmatpush.bf16.msra.mxu0 0
  %459 = vmatpush.bf16.msra.mxu0 0
  %460 = vmatpush.bf16.msra.mxu0 0
  %461 = vmatpush.bf16.msra.mxu0 0
  %462 = vmatpush.bf16.msra.mxu0 0
  %463 = vmatpush.bf16.msra.mxu0 %v454
  %464 = vmatmul.bf16.gmra.mxu0 %v45
  %v465 = vpop.f32.mrf.mxu0
  %v466 = vadd.f32 0.0, %v465
  %v467 = vpop.f32.mrf.mxu0
  %v468 = vadd.f32 0.0, %v467
  %469 = vmatmul.bf16.gmra.mxu0 %v48
  %v470 = vpop.f32.mrf.mxu0
  %v471 = vadd.f32 0.0, %v470
  %v472 = vpop.f32.mrf.mxu0
  %v473 = vadd.f32 0.0, %v472
  %474 = vmatmul.bf16.gmra.mxu0 %v51
  %v475 = vpop.f32.mrf.mxu0
  %v476 = vadd.f32 0.0, %v475
  %v477 = vpop.f32.mrf.mxu0
  %v478 = vadd.f32 0.0, %v477
  %479 = vmatmul.bf16.gmra.mxu0 %v54
  %v480 = vpop.f32.mrf.mxu0
  %v481 = vadd.f32 0.0, %v480
  %v482 = vpop.f32.mrf.mxu0
  %v483 = vadd.f32 0.0, %v482
  %484 = vmatmul.bf16.gmra.mxu0 %v57
  %v485 = vpop.f32.mrf.mxu0
  %v486 = vadd.f32 0.0, %v485
  %v487 = vpop.f32.mrf.mxu0
  %v488 = vadd.f32 0.0, %v487
  %489 = vmatmul.bf16.gmra.mxu0 %v60
  %v490 = vpop.f32.mrf.mxu0
  %v491 = vadd.f32 0.0, %v490
  %v492 = vpop.f32.mrf.mxu0
  %v493 = vadd.f32 0.0, %v492
  %494 = vmatmul.bf16.gmra.mxu0 %v63
  %v495 = vpop.f32.mrf.mxu0
  %v496 = vadd.f32 0.0, %v495
  %v497 = vpop.f32.mrf.mxu0
  %v498 = vadd.f32 0.0, %v497
  %499 = vmatmul.bf16.gmra.mxu0 %v66
  %v500 = vpop.f32.mrf.mxu0
  %v501 = vadd.f32 0.0, %v500
  %v502 = vpop.f32.mrf.mxu0
  %v503 = vadd.f32 0.0, %v502
  %504 = vdwg.mxu0
  %s505 = scalar_lea.vmem %s2, 3
  %v506 = vld [vmem:[%s505] sm:$0x1]
  %v508 = vperm.slane %v506, 0
  %v510 = vmul.f32 %v466, %v508
  %v511 = vmul.f32 %v468, %v508
  %v512 = vmul.f32 %v471, %v508
  %v513 = vmul.f32 %v473, %v508
  %v514 = vmul.f32 %v476, %v508
  %v515 = vmul.f32 %v478, %v508
  %v516 = vmul.f32 %v481, %v508
  %v517 = vmul.f32 %v483, %v508
  %v518 = vmul.f32 %v486, %v508
  %v519 = vmul.f32 %v488, %v508
  %v520 = vmul.f32 %v491, %v508
  %v521 = vmul.f32 %v493, %v508
  %v522 = vmul.f32 %v496, %v508
  %v523 = vmul.f32 %v498, %v508
  %v524 = vmul.f32 %v501, %v508
  %v525 = vmul.f32 %v503, %v508
  %s526 = scalar_lea.vmem %s3, 3
  %v527 = vld [vmem:[%s526] sm:$0x1]
  %v529 = vperm.slane %v527, 0
  %v531 = vadd.f32 %v510, %v529
  %v532 = vadd.f32 %v511, %v529
  %v533 = vadd.f32 %v512, %v529
  %v534 = vadd.f32 %v513, %v529
  %v535 = vadd.f32 %v514, %v529
  %v536 = vadd.f32 %v515, %v529
  %v537 = vadd.f32 %v516, %v529
  %v538 = vadd.f32 %v517, %v529
  %v539 = vadd.f32 %v518, %v529
  %v540 = vadd.f32 %v519, %v529
  %v541 = vadd.f32 %v520, %v529
  %v542 = vadd.f32 %v521, %v529
  %v543 = vadd.f32 %v522, %v529
  %v544 = vadd.f32 %v523, %v529
  %v545 = vadd.f32 %v524, %v529
  %v546 = vadd.f32 %v525, %v529
  %v547 = vmax.f32 %v531, 0.0
  %v548 = vmax.f32 %v532, 0.0
  %v549 = vmax.f32 %v533, 0.0
  %v550 = vmax.f32 %v534, 0.0
  %v551 = vmax.f32 %v535, 0.0
  %v552 = vmax.f32 %v536, 0.0
  %v553 = vmax.f32 %v537, 0.0
  %v554 = vmax.f32 %v538, 0.0
  %v555 = vmax.f32 %v539, 0.0
  %v556 = vmax.f32 %v540, 0.0
  %v557 = vmax.f32 %v541, 0.0
  %v558 = vmax.f32 %v542, 0.0
  %v559 = vmax.f32 %v543, 0.0
  %v560 = vmax.f32 %v544, 0.0
  %v561 = vmax.f32 %v545, 0.0
  %v562 = vmax.f32 %v546, 0.0
  %s563 = scalar_lea.vmem %s4, 384
  %564 = vst.msk [vmem:[%s563] sm:$0xff] %vm43, %v547
  %565 = vst.msk [vmem:[%s563 + $0x8] sm:$0xff] %vm43, %v548
  %566 = vst.msk [vmem:[%s563 + $0x10] sm:$0xff] %vm43, %v549
  %567 = vst.msk [vmem:[%s563 + $0x18] sm:$0xff] %vm43, %v550
  %568 = vst.msk [vmem:[%s563 + $0x20] sm:$0xff] %vm43, %v551
  %569 = vst.msk [vmem:[%s563 + $0x28] sm:$0xff] %vm43, %v552
  %570 = vst.msk [vmem:[%s563 + $0x30] sm:$0xff] %vm43, %v553
  %571 = vst.msk [vmem:[%s563 + $0x38] sm:$0xff] %vm43, %v554
  %572 = vst.msk [vmem:[%s563 + $0x40] sm:$0xff] %vm43, %v555
  %573 = vst.msk [vmem:[%s563 + $0x48] sm:$0xff] %vm43, %v556
  %574 = vst.msk [vmem:[%s563 + $0x50] sm:$0xff] %vm43, %v557
  %575 = vst.msk [vmem:[%s563 + $0x58] sm:$0xff] %vm43, %v558
  %576 = vst.msk [vmem:[%s563 + $0x60] sm:$0xff] %vm43, %v559
  %577 = vst.msk [vmem:[%s563 + $0x68] sm:$0xff] %vm43, %v560
  %578 = vst.msk [vmem:[%s563 + $0x70] sm:$0xff] %vm43, %v561
  %579 = vst.msk [vmem:[%s563 + $0x78] sm:$0xff] %vm43, %v562
  // Predicated region
  $region18: #{ms_coder_forward.3} parent=0 // pred_check
    _
  $region19: #{ms_coder_forward.3} parent=0 // pred_check_branch
    %581 = sbr.rel (0) target = $region21
  $region20: #{ms_coder_forward.3} parent=0 // pred_region
    _
  $region21: #{ms_coder_forward.3} parent=0 // pred_fallthru
    _
  // Predicated region
  $region22: #{ms_coder_forward.3} parent=0 // pred_check
    _
  $region23: #{ms_coder_forward.3} parent=0 // pred_check_branch
    %583 = sbr.rel (0) target = $region25
  $region24: #{ms_coder_forward.3} parent=0 // pred_region
    _
  $region25: #{ms_coder_forward.3} parent=0 // pred_fallthru
    _

// kernel: ms_coder_forward.5
$region0: #{ms_coder_forward.5}
  #allocation0 [shape = 'u32[]', space=smem, size = 0x4, offset = 0x4, fixed_abs, tag = 'smem constant byte address 0x4 - core index']
  #allocation1 [shape = 'u32[72,128]{1,0:T(1,128)}', space=vmem, size = 0x9000, scoped, tag = 'internal scratch']
  %s0 = inlined_call_operand.vmem [shape: f32[4,128,8], index: 0, kind: input, shape index: {}]
  %s1 = inlined_call_operand.vmem [shape: bf16[4,8,16], index: 1, kind: input, shape index: {}]
  %s2 = inlined_call_operand.vmem [shape: f32[1,16], index: 2, kind: input, shape index: {}]
  %s3 = inlined_call_operand.vmem [shape: f32[1,16], index: 3, kind: input, shape index: {}]
  %s4 = inlined_call_operand.hbm [shape: f32[128,16], index: 4, kind: output, shape index: {}]
  %s5 = sld [smem:[#allocation0]]
  $region26: #{ms_coder_forward.5} parent=0
    _
  %s7 = ssub.s32 1, %s5
  %s8 = scalar_select 0, %s7, %s5
  $region1: #{ms_coder_forward.5} parent=0
    #allocation2 [shape = 'u8[65536]{0}', space=vmem, size = 0x10000, scoped, tag = 'output window, operand 0, single buffered']
    #allocation3 [shape = 's32[1]{0}', space=sflag, size = 0x4, scoped, tag = 'scoped memory for ms_coder_forward.5']
    %9 = vsyncpa [#allocation3], 0
    // Predicated region
    $region2: #{ms_coder_forward.5} parent=1 // pred_check
      _
    $region3: #{ms_coder_forward.5} parent=1 // pred_check_branch
      %11 = sbr.rel (0) target = $region5
    $region4: #{ms_coder_forward.5} parent=1 // pred_region
      _
    $region5: #{ms_coder_forward.5} parent=1 // pred_fallthru
      _
    // Predicated region
    $region6: #{ms_coder_forward.5} parent=1 // pred_check
      _
    $region7: #{ms_coder_forward.5} parent=1 // pred_check_branch
      %13 = sbr.rel (0) target = $region9
    $region8: #{ms_coder_forward.5} parent=1 // pred_region
      _
    $region9: #{ms_coder_forward.5} parent=1 // pred_fallthru
      _
    // Predicated region
    $region10: #{ms_coder_forward.5} parent=1 // pred_check
      _
    $region11: #{ms_coder_forward.5} parent=1 // pred_check_branch
      %15 = sbr.rel (0) target = $region13
    $region12: #{ms_coder_forward.5} parent=1 // pred_region
      _
    $region13: #{ms_coder_forward.5} parent=1 // pred_fallthru
      _
    // Predicated region
    $region14: #{ms_coder_forward.5} parent=1 // pred_check
      _
    $region15: #{ms_coder_forward.5} parent=1 // pred_check_branch
      %17 = sbr.rel (0) target = $region17
    $region16: #{ms_coder_forward.5} parent=1 // pred_region
      _
    $region17: #{ms_coder_forward.5} parent=1 // pred_fallthru
      _
    %v19 = vld [vmem:[%s0] sm:$0xff]
    %v20 = vld [vmem:[%s0 + $0x8] sm:$0xff]
    %v21 = vld [vmem:[%s0 + $0x10] sm:$0xff]
    %v22 = vld [vmem:[%s0 + $0x18] sm:$0xff]
    %v23 = vld [vmem:[%s0 + $0x20] sm:$0xff]
    %v24 = vld [vmem:[%s0 + $0x28] sm:$0xff]
    %v25 = vld [vmem:[%s0 + $0x30] sm:$0xff]
    %v26 = vld [vmem:[%s0 + $0x38] sm:$0xff]
    %v27 = vld [vmem:[%s0 + $0x40] sm:$0xff]
    %v28 = vld [vmem:[%s0 + $0x48] sm:$0xff]
    %v29 = vld [vmem:[%s0 + $0x50] sm:$0xff]
    %v30 = vld [vmem:[%s0 + $0x58] sm:$0xff]
    %v31 = vld [vmem:[%s0 + $0x60] sm:$0xff]
    %v32 = vld [vmem:[%s0 + $0x68] sm:$0xff]
    %v33 = vld [vmem:[%s0 + $0x70] sm:$0xff]
    %v34 = vld [vmem:[%s0 + $0x78] sm:$0xff]
    %v35 = vpack.c.bf16 %v20, %v19
    %v36 = vpack.c.bf16 %v22, %v21
    %v37 = vpack.c.bf16 %v24, %v23
    %v38 = vpack.c.bf16 %v26, %v25
    %v39 = vpack.c.bf16 %v28, %v27
    %v40 = vpack.c.bf16 %v30, %v29
    %v41 = vpack.c.bf16 %v32, %v31
    %v42 = vpack.c.bf16 %v34, %v33
    %v43 = vld [vmem:[%s1] sm:$0xf]
    %s44 = scalar_lea.vmem %s0, 128
    %v45 = vld [vmem:[%s44] sm:$0xff]
    %v46 = vld [vmem:[%s44 + $0x8] sm:$0xff]
    %v47 = vld [vmem:[%s44 + $0x10] sm:$0xff]
    %v48 = vld [vmem:[%s44 + $0x18] sm:$0xff]
    %v49 = vld [vmem:[%s44 + $0x20] sm:$0xff]
    %v50 = vld [vmem:[%s44 + $0x28] sm:$0xff]
    %v51 = vld [vmem:[%s44 + $0x30] sm:$0xff]
    %v52 = vld [vmem:[%s44 + $0x38] sm:$0xff]
    %v53 = vld [vmem:[%s44 + $0x40] sm:$0xff]
    %v54 = vld [vmem:[%s44 + $0x48] sm:$0xff]
    %v55 = vld [vmem:[%s44 + $0x50] sm:$0xff]
    %v56 = vld [vmem:[%s44 + $0x58] sm:$0xff]
    %v57 = vld [vmem:[%s44 + $0x60] sm:$0xff]
    %v58 = vld [vmem:[%s44 + $0x68] sm:$0xff]
    %v59 = vld [vmem:[%s44 + $0x70] sm:$0xff]
    %v60 = vld [vmem:[%s44 + $0x78] sm:$0xff]
    %v61 = vpack.c.bf16 %v46, %v45
    %v62 = vpack.c.bf16 %v48, %v47
    %v63 = vpack.c.bf16 %v50, %v49
    %v64 = vpack.c.bf16 %v52, %v51
    %v65 = vpack.c.bf16 %v54, %v53
    %v66 = vpack.c.bf16 %v56, %v55
    %v67 = vpack.c.bf16 %v58, %v57
    %v68 = vpack.c.bf16 %v60, %v59
    %s69 = scalar_lea.vmem %s1, 4
    %v70 = vld [vmem:[%s69] sm:$0xf]
    %vm71 = vcmask 64512
    %v73 = vsel %vm71, %v61, 0
    %v76 = vsel %vm71, %v62, 0
    %v79 = vsel %vm71, %v63, 0
    %v82 = vsel %vm71, %v64, 0
    %v85 = vsel %vm71, %v65, 0
    %v88 = vsel %vm71, %v66, 0
    %v91 = vsel %vm71, %v67, 0
    %v94 = vsel %vm71, %v68, 0
    %vm96 = vcmask 1043456
    %v98 = vsel %vm96, %v70, 0
    %100 = vmatpush.bf16.msra.mxu0 0
    %101 = vmatpush.bf16.msra.mxu0 0
    %102 = vmatpush.bf16.msra.mxu0 0
    %103 = vmatpush.bf16.msra.mxu0 0
    %104 = vmatpush.bf16.msra.mxu0 0
    %105 = vmatpush.bf16.msra.mxu0 0
    %106 = vmatpush.bf16.msra.mxu0 0
    %107 = vmatpush.bf16.msra.mxu0 %v98
    %108 = vmatmul.bf16.gmra.mxu0 %v73
    %v109 = vpop.f32.mrf.mxu0
    %v110 = vadd.f32 0.0, %v109
    %v111 = vpop.f32.mrf.mxu0
    %v112 = vadd.f32 0.0, %v111
    %113 = vmatmul.bf16.gmra.mxu0 %v76
    %v114 = vpop.f32.mrf.mxu0
    %v115 = vadd.f32 0.0, %v114
    %v116 = vpop.f32.mrf.mxu0
    %v117 = vadd.f32 0.0, %v116
    %118 = vmatmul.bf16.gmra.mxu0 %v79
    %v119 = vpop.f32.mrf.mxu0
    %v120 = vadd.f32 0.0, %v119
    %v121 = vpop.f32.mrf.mxu0
    %v122 = vadd.f32 0.0, %v121
    %123 = vmatmul.bf16.gmra.mxu0 %v82
    %v124 = vpop.f32.mrf.mxu0
    %v125 = vadd.f32 0.0, %v124
    %v126 = vpop.f32.mrf.mxu0
    %v127 = vadd.f32 0.0, %v126
    %128 = vmatmul.bf16.gmra.mxu0 %v85
    %v129 = vpop.f32.mrf.mxu0
    %v130 = vadd.f32 0.0, %v129
    %v131 = vpop.f32.mrf.mxu0
    %v132 = vadd.f32 0.0, %v131
    %133 = vmatmul.bf16.gmra.mxu0 %v88
    %v134 = vpop.f32.mrf.mxu0
    %v135 = vadd.f32 0.0, %v134
    %v136 = vpop.f32.mrf.mxu0
    %v137 = vadd.f32 0.0, %v136
    %138 = vmatmul.bf16.gmra.mxu0 %v91
    %v139 = vpop.f32.mrf.mxu0
    %v140 = vadd.f32 0.0, %v139
    %v141 = vpop.f32.mrf.mxu0
    %v142 = vadd.f32 0.0, %v141
    %143 = vmatmul.bf16.gmra.mxu0 %v94
    %v144 = vpop.f32.mrf.mxu0
    %v145 = vadd.f32 0.0, %v144
    %v146 = vpop.f32.mrf.mxu0
    %v147 = vadd.f32 0.0, %v146
    %148 = vdwg.mxu0
    %v150 = vsel %vm71, %v35, 0
    %v153 = vsel %vm71, %v36, 0
    %v156 = vsel %vm71, %v37, 0
    %v159 = vsel %vm71, %v38, 0
    %v162 = vsel %vm71, %v39, 0
    %v165 = vsel %vm71, %v40, 0
    %v168 = vsel %vm71, %v41, 0
    %v171 = vsel %vm71, %v42, 0
    %v174 = vsel %vm96, %v43, 0
    %176 = vmatpush.bf16.msra.mxu0 0
    %177 = vmatpush.bf16.msra.mxu0 0
    %178 = vmatpush.bf16.msra.mxu0 0
    %179 = vmatpush.bf16.msra.mxu0 0
    %180 = vmatpush.bf16.msra.mxu0 0
    %181 = vmatpush.bf16.msra.mxu0 0
    %182 = vmatpush.bf16.msra.mxu0 0
    %183 = vmatpush.bf16.msra.mxu0 %v174
    %184 = vmatmul.bf16.gmra.mxu0 %v150
    %v185 = vpop.f32.mrf.mxu0
    %v186 = vadd.f32 %v110, %v185
    %v187 = vpop.f32.mrf.mxu0
    %v188 = vadd.f32 %v112, %v187
    %189 = vmatmul.bf16.gmra.mxu0 %v153
    %v190 = vpop.f32.mrf.mxu0
    %v191 = vadd.f32 %v115, %v190
    %v192 = vpop.f32.mrf.mxu0
    %v193 = vadd.f32 %v117, %v192
    %194 = vmatmul.bf16.gmra.mxu0 %v156
    %v195 = vpop.f32.mrf.mxu0
    %v196 = vadd.f32 %v120, %v195
    %v197 = vpop.f32.mrf.mxu0
    %v198 = vadd.f32 %v122, %v197
    %199 = vmatmul.bf16.gmra.mxu0 %v159
    %v200 = vpop.f32.mrf.mxu0
    %v201 = vadd.f32 %v125, %v200
    %v202 = vpop.f32.mrf.mxu0
    %v203 = vadd.f32 %v127, %v202
    %204 = vmatmul.bf16.gmra.mxu0 %v162
    %v205 = vpop.f32.mrf.mxu0
    %v206 = vadd.f32 %v130, %v205
    %v207 = vpop.f32.mrf.mxu0
    %v208 = vadd.f32 %v132, %v207
    %209 = vmatmul.bf16.gmra.mxu0 %v165
    %v210 = vpop.f32.mrf.mxu0
    %v211 = vadd.f32 %v135, %v210
    %v212 = vpop.f32.mrf.mxu0
    %v213 = vadd.f32 %v137, %v212
    %214 = vmatmul.bf16.gmra.mxu0 %v168
    %v215 = vpop.f32.mrf.mxu0
    %v216 = vadd.f32 %v140, %v215
    %v217 = vpop.f32.mrf.mxu0
    %v218 = vadd.f32 %v142, %v217
    %219 = vmatmul.bf16.gmra.mxu0 %v171
    %v220 = vpop.f32.mrf.mxu0
    %v221 = vadd.f32 %v145, %v220
    %v222 = vpop.f32.mrf.mxu0
    %v223 = vadd.f32 %v147, %v222
    %224 = vdwg.mxu0
    %s225 = scalar_lea.vmem %s0, 256
    %v226 = vld [vmem:[%s225] sm:$0xff]
    %v227 = vld [vmem:[%s225 + $0x8] sm:$0xff]
    %v228 = vld [vmem:[%s225 + $0x10] sm:$0xff]
    %v229 = vld [vmem:[%s225 + $0x18] sm:$0xff]
    %v230 = vld [vmem:[%s225 + $0x20] sm:$0xff]
    %v231 = vld [vmem:[%s225 + $0x28] sm:$0xff]
    %v232 = vld [vmem:[%s225 + $0x30] sm:$0xff]
    %v233 = vld [vmem:[%s225 + $0x38] sm:$0xff]
    %v234 = vld [vmem:[%s225 + $0x40] sm:$0xff]
    %v235 = vld [vmem:[%s225 + $0x48] sm:$0xff]
    %v236 = vld [vmem:[%s225 + $0x50] sm:$0xff]
    %v237 = vld [vmem:[%s225 + $0x58] sm:$0xff]
    %v238 = vld [vmem:[%s225 + $0x60] sm:$0xff]
    %v239 = vld [vmem:[%s225 + $0x68] sm:$0xff]
    %v240 = vld [vmem:[%s225 + $0x70] sm:$0xff]
    %v241 = vld [vmem:[%s225 + $0x78] sm:$0xff]
    %v242 = vpack.c.bf16 %v227, %v226
    %v243 = vpack.c.bf16 %v229, %v228
    %v244 = vpack.c.bf16 %v231, %v230
    %v245 = vpack.c.bf16 %v233, %v232
    %v246 = vpack.c.bf16 %v235, %v234
    %v247 = vpack.c.bf16 %v237, %v236
    %v248 = vpack.c.bf16 %v239, %v238
    %v249 = vpack.c.bf16 %v241, %v240
    %s250 = scalar_lea.vmem %s1, 8
    %v251 = vld [vmem:[%s250] sm:$0xf]
    %v253 = vsel %vm71, %v242, 0
    %v256 = vsel %vm71, %v243, 0
    %v259 = vsel %vm71, %v244, 0
    %v262 = vsel %vm71, %v245, 0
    %v265 = vsel %vm71, %v246, 0
    %v268 = vsel %vm71, %v247, 0
    %v271 = vsel %vm71, %v248, 0
    %v274 = vsel %vm71, %v249, 0
    %v277 = vsel %vm96, %v251, 0
    %279 = vmatpush.bf16.msra.mxu0 0
    %280 = vmatpush.bf16.msra.mxu0 0
    %281 = vmatpush.bf16.msra.mxu0 0
    %282 = vmatpush.bf16.msra.mxu0 0
    %283 = vmatpush.bf16.msra.mxu0 0
    %284 = vmatpush.bf16.msra.mxu0 0
    %285 = vmatpush.bf16.msra.mxu0 0
    %286 = vmatpush.bf16.msra.mxu0 %v277
    %287 = vmatmul.bf16.gmra.mxu0 %v253
    %v288 = vpop.f32.mrf.mxu0
    %v289 = vadd.f32 0.0, %v288
    %v290 = vpop.f32.mrf.mxu0
    %v291 = vadd.f32 0.0, %v290
    %292 = vmatmul.bf16.gmra.mxu0 %v256
    %v293 = vpop.f32.mrf.mxu0
    %v294 = vadd.f32 0.0, %v293
    %v295 = vpop.f32.mrf.mxu0
    %v296 = vadd.f32 0.0, %v295
    %297 = vmatmul.bf16.gmra.mxu0 %v259
    %v298 = vpop.f32.mrf.mxu0
    %v299 = vadd.f32 0.0, %v298
    %v300 = vpop.f32.mrf.mxu0
    %v301 = vadd.f32 0.0, %v300
    %302 = vmatmul.bf16.gmra.mxu0 %v262
    %v303 = vpop.f32.mrf.mxu0
    %v304 = vadd.f32 0.0, %v303
    %v305 = vpop.f32.mrf.mxu0
    %v306 = vadd.f32 0.0, %v305
    %307 = vmatmul.bf16.gmra.mxu0 %v265
    %v308 = vpop.f32.mrf.mxu0
    %v309 = vadd.f32 0.0, %v308
    %v310 = vpop.f32.mrf.mxu0
    %v311 = vadd.f32 0.0, %v310
    %312 = vmatmul.bf16.gmra.mxu0 %v268
    %v313 = vpop.f32.mrf.mxu0
    %v314 = vadd.f32 0.0, %v313
    %v315 = vpop.f32.mrf.mxu0
    %v316 = vadd.f32 0.0, %v315
    %317 = vmatmul.bf16.gmra.mxu0 %v271
    %v318 = vpop.f32.mrf.mxu0
    %v319 = vadd.f32 0.0, %v318
    %v320 = vpop.f32.mrf.mxu0
    %v321 = vadd.f32 0.0, %v320
    %322 = vmatmul.bf16.gmra.mxu0 %v274
    %v323 = vpop.f32.mrf.mxu0
    %v324 = vadd.f32 0.0, %v323
    %v325 = vpop.f32.mrf.mxu0
    %v326 = vadd.f32 0.0, %v325
    %327 = vdwg.mxu0
    %v328 = vadd.f32 %v186, %v289
    %v329 = vadd.f32 %v188, %v291
    %v330 = vadd.f32 %v191, %v294
    %v331 = vadd.f32 %v193, %v296
    %v332 = vadd.f32 %v196, %v299
    %v333 = vadd.f32 %v198, %v301
    %v334 = vadd.f32 %v201, %v304
    %v335 = vadd.f32 %v203, %v306
    %v336 = vadd.f32 %v206, %v309
    %v337 = vadd.f32 %v208, %v311
    %v338 = vadd.f32 %v211, %v314
    %v339 = vadd.f32 %v213, %v316
    %v340 = vadd.f32 %v216, %v319
    %v341 = vadd.f32 %v218, %v321
    %v342 = vadd.f32 %v221, %v324
    %v343 = vadd.f32 %v223, %v326
    %s344 = scalar_lea.vmem %s0, 384
    %v345 = vld [vmem:[%s344] sm:$0xff]
    %v346 = vld [vmem:[%s344 + $0x8] sm:$0xff]
    %v347 = vld [vmem:[%s344 + $0x10] sm:$0xff]
    %v348 = vld [vmem:[%s344 + $0x18] sm:$0xff]
    %v349 = vld [vmem:[%s344 + $0x20] sm:$0xff]
    %v350 = vld [vmem:[%s344 + $0x28] sm:$0xff]
    %v351 = vld [vmem:[%s344 + $0x30] sm:$0xff]
    %v352 = vld [vmem:[%s344 + $0x38] sm:$0xff]
    %v353 = vld [vmem:[%s344 + $0x40] sm:$0xff]
    %v354 = vld [vmem:[%s344 + $0x48] sm:$0xff]
    %v355 = vld [vmem:[%s344 + $0x50] sm:$0xff]
    %v356 = vld [vmem:[%s344 + $0x58] sm:$0xff]
    %v357 = vld [vmem:[%s344 + $0x60] sm:$0xff]
    %v358 = vld [vmem:[%s344 + $0x68] sm:$0xff]
    %v359 = vld [vmem:[%s344 + $0x70] sm:$0xff]
    %v360 = vld [vmem:[%s344 + $0x78] sm:$0xff]
    %v361 = vpack.c.bf16 %v346, %v345
    %v362 = vpack.c.bf16 %v348, %v347
    %v363 = vpack.c.bf16 %v350, %v349
    %v364 = vpack.c.bf16 %v352, %v351
    %v365 = vpack.c.bf16 %v354, %v353
    %v366 = vpack.c.bf16 %v356, %v355
    %v367 = vpack.c.bf16 %v358, %v357
    %v368 = vpack.c.bf16 %v360, %v359
    %s369 = scalar_lea.vmem %s1, 12
    %v370 = vld [vmem:[%s369] sm:$0xf]
    %v372 = vsel %vm71, %v361, 0
    %v375 = vsel %vm71, %v362, 0
    %v378 = vsel %vm71, %v363, 0
    %v381 = vsel %vm71, %v364, 0
    %v384 = vsel %vm71, %v365, 0
    %v387 = vsel %vm71, %v366, 0
    %v390 = vsel %vm71, %v367, 0
    %v393 = vsel %vm71, %v368, 0
    %v396 = vsel %vm96, %v370, 0
    %398 = vmatpush.bf16.msra.mxu0 0
    %399 = vmatpush.bf16.msra.mxu0 0
    %400 = vmatpush.bf16.msra.mxu0 0
    %401 = vmatpush.bf16.msra.mxu0 0
    %402 = vmatpush.bf16.msra.mxu0 0
    %403 = vmatpush.bf16.msra.mxu0 0
    %404 = vmatpush.bf16.msra.mxu0 0
    %405 = vmatpush.bf16.msra.mxu0 %v396
    %406 = vmatmul.bf16.gmra.mxu0 %v372
    %v407 = vpop.f32.mrf.mxu0
    %v408 = vadd.f32 0.0, %v407
    %v409 = vpop.f32.mrf.mxu0
    %v410 = vadd.f32 0.0, %v409
    %411 = vmatmul.bf16.gmra.mxu0 %v375
    %v412 = vpop.f32.mrf.mxu0
    %v413 = vadd.f32 0.0, %v412
    %v414 = vpop.f32.mrf.mxu0
    %v415 = vadd.f32 0.0, %v414
    %416 = vmatmul.bf16.gmra.mxu0 %v378
    %v417 = vpop.f32.mrf.mxu0
    %v418 = vadd.f32 0.0, %v417
    %v419 = vpop.f32.mrf.mxu0
    %v420 = vadd.f32 0.0, %v419
    %421 = vmatmul.bf16.gmra.mxu0 %v381
    %v422 = vpop.f32.mrf.mxu0
    %v423 = vadd.f32 0.0, %v422
    %v424 = vpop.f32.mrf.mxu0
    %v425 = vadd.f32 0.0, %v424
    %426 = vmatmul.bf16.gmra.mxu0 %v384
    %v427 = vpop.f32.mrf.mxu0
    %v428 = vadd.f32 0.0, %v427
    %v429 = vpop.f32.mrf.mxu0
    %v430 = vadd.f32 0.0, %v429
    %431 = vmatmul.bf16.gmra.mxu0 %v387
    %v432 = vpop.f32.mrf.mxu0
    %v433 = vadd.f32 0.0, %v432
    %v434 = vpop.f32.mrf.mxu0
    %v435 = vadd.f32 0.0, %v434
    %436 = vmatmul.bf16.gmra.mxu0 %v390
    %v437 = vpop.f32.mrf.mxu0
    %v438 = vadd.f32 0.0, %v437
    %v439 = vpop.f32.mrf.mxu0
    %v440 = vadd.f32 0.0, %v439
    %441 = vmatmul.bf16.gmra.mxu0 %v393
    %v442 = vpop.f32.mrf.mxu0
    %v443 = vadd.f32 0.0, %v442
    %v444 = vpop.f32.mrf.mxu0
    %v445 = vadd.f32 0.0, %v444
    %446 = vdwg.mxu0
    %v447 = vadd.f32 %v328, %v408
    %v448 = vadd.f32 %v329, %v410
    %v449 = vadd.f32 %v330, %v413
    %v450 = vadd.f32 %v331, %v415
    %v451 = vadd.f32 %v332, %v418
    %v452 = vadd.f32 %v333, %v420
    %v453 = vadd.f32 %v334, %v423
    %v454 = vadd.f32 %v335, %v425
    %v455 = vadd.f32 %v336, %v428
    %v456 = vadd.f32 %v337, %v430
    %v457 = vadd.f32 %v338, %v433
    %v458 = vadd.f32 %v339, %v435
    %v459 = vadd.f32 %v340, %v438
    %v460 = vadd.f32 %v341, %v440
    %v461 = vadd.f32 %v342, %v443
    %v462 = vadd.f32 %v343, %v445
    %v463 = vld [vmem:[%s2] sm:$0x1]
    %v465 = vperm.slane %v463, 0
    %v467 = vmul.f32 %v447, %v465
    %v468 = vmul.f32 %v448, %v465
    %v469 = vmul.f32 %v449, %v465
    %v470 = vmul.f32 %v450, %v465
    %v471 = vmul.f32 %v451, %v465
    %v472 = vmul.f32 %v452, %v465
    %v473 = vmul.f32 %v453, %v465
    %v474 = vmul.f32 %v454, %v465
    %v475 = vmul.f32 %v455, %v465
    %v476 = vmul.f32 %v456, %v465
    %v477 = vmul.f32 %v457, %v465
    %v478 = vmul.f32 %v458, %v465
    %v479 = vmul.f32 %v459, %v465
    %v480 = vmul.f32 %v460, %v465
    %v481 = vmul.f32 %v461, %v465
    %v482 = vmul.f32 %v462, %v465
    %v483 = vld [vmem:[%s3] sm:$0x1]
    %v485 = vperm.slane %v483, 0
    %v487 = vadd.f32 %v467, %v485
    %v488 = vadd.f32 %v468, %v485
    %v489 = vadd.f32 %v469, %v485
    %v490 = vadd.f32 %v470, %v485
    %v491 = vadd.f32 %v471, %v485
    %v492 = vadd.f32 %v472, %v485
    %v493 = vadd.f32 %v473, %v485
    %v494 = vadd.f32 %v474, %v485
    %v495 = vadd.f32 %v475, %v485
    %v496 = vadd.f32 %v476, %v485
    %v497 = vadd.f32 %v477, %v485
    %v498 = vadd.f32 %v478, %v485
    %v499 = vadd.f32 %v479, %v485
    %v500 = vadd.f32 %v480, %v485
    %v501 = vadd.f32 %v481, %v485
    %v502 = vadd.f32 %v482, %v485
    %v503 = vmax.f32 %v487, 0.0
    %v504 = vmax.f32 %v488, 0.0
    %v505 = vmax.f32 %v489, 0.0
    %v506 = vmax.f32 %v490, 0.0
    %v507 = vmax.f32 %v491, 0.0
    %v508 = vmax.f32 %v492, 0.0
    %v509 = vmax.f32 %v493, 0.0
    %v510 = vmax.f32 %v494, 0.0
    %v511 = vmax.f32 %v495, 0.0
    %v512 = vmax.f32 %v496, 0.0
    %v513 = vmax.f32 %v497, 0.0
    %v514 = vmax.f32 %v498, 0.0
    %v515 = vmax.f32 %v499, 0.0
    %v516 = vmax.f32 %v500, 0.0
    %v517 = vmax.f32 %v501, 0.0
    %v518 = vmax.f32 %v502, 0.0
    %vm519 = vcmask 130048
    %520 = vst.msk [vmem:[#allocation2] sm:$0xff] %vm519, %v503
    %521 = vst.msk [vmem:[#allocation2 + $0x8] sm:$0xff] %vm519, %v504
    %522 = vst.msk [vmem:[#allocation2 + $0x10] sm:$0xff] %vm519, %v505
    %523 = vst.msk [vmem:[#allocation2 + $0x18] sm:$0xff] %vm519, %v506
    %524 = vst.msk [vmem:[#allocation2 + $0x20] sm:$0xff] %vm519, %v507
    %525 = vst.msk [vmem:[#allocation2 + $0x28] sm:$0xff] %vm519, %v508
    %526 = vst.msk [vmem:[#allocation2 + $0x30] sm:$0xff] %vm519, %v509
    %527 = vst.msk [vmem:[#allocation2 + $0x38] sm:$0xff] %vm519, %v510
    %528 = vst.msk [vmem:[#allocation2 + $0x40] sm:$0xff] %vm519, %v511
    %529 = vst.msk [vmem:[#allocation2 + $0x48] sm:$0xff] %vm519, %v512
    %530 = vst.msk [vmem:[#allocation2 + $0x50] sm:$0xff] %vm519, %v513
    %531 = vst.msk [vmem:[#allocation2 + $0x58] sm:$0xff] %vm519, %v514
    %532 = vst.msk [vmem:[#allocation2 + $0x60] sm:$0xff] %vm519, %v515
    %533 = vst.msk [vmem:[#allocation2 + $0x68] sm:$0xff] %vm519, %v516
    %534 = vst.msk [vmem:[#allocation2 + $0x70] sm:$0xff] %vm519, %v517
    %535 = vst.msk [vmem:[#allocation2 + $0x78] sm:$0xff] %vm519, %v518
    // Predicated region
    $region18: #{ms_coder_forward.5} parent=1 // pred_check
      _
    $region19: #{ms_coder_forward.5} parent=1 // pred_check_branch
      %537 = sbr.rel (0) target = $region21
    $region20: #{ms_coder_forward.5} parent=1 // pred_region
      %539 = vsyncadd [#allocation3], 0
      %s540 = sshll.u32 [#allocation2], 4
      %s541 = int_to_ptr.vmem [resolvable:$true] %s540
      %s542 = sshll.u32 %s4, 4
      %s543 = int_to_ptr.hbm [resolvable:$true] %s542
      %548 = dma.vmem_to_hbm [thread:$0]  %s541, 2048, %s543, [#allocation3], 128, 128, 8
    $region21: #{ms_coder_forward.5} parent=1 // pred_fallthru
      _
    // Predicated region
    $region22: #{ms_coder_forward.5} parent=1 // pred_check
      _
    $region23: #{ms_coder_forward.5} parent=1 // pred_check_branch
      %550 = sbr.rel (0) target = $region25
    $region24: #{ms_coder_forward.5} parent=1 // pred_region
      %552 = dma.done [#allocation3], 2048
    $region25: #{ms_coder_forward.5} parent=1 // pred_fallthru
      _
    %553 = vsyncpa [#allocation3], 1

// kernel: ms_coder_forward.4
$region0: #{ms_coder_forward.4}
  #allocation0 [shape = 'u32[]', space=smem, size = 0x4, offset = 0x4, fixed_abs, tag = 'smem constant byte address 0x4 - core index']
  #allocation1 [shape = 'u32[72,128]{1,0:T(1,128)}', space=vmem, size = 0x9000, scoped, tag = 'internal scratch']
  #allocation2 [shape = 'f32[10,24,8]{2,1,0:T(8,128)}', space=vmem, size = 0x1e000, scoped, tag = 'scratch operand']
  #allocation3 [shape = 'f32[8,8,8]{2,1,0:T(8,128)}', space=vmem, size = 0x8000, scoped, tag = 'scratch operand']
  %s0 = inlined_call_operand.vmem [shape: f32[4,2,8,8,8], index: 0, kind: input, shape index: {}]
  %s1 = inlined_call_operand.vmem [shape: bf16[4,9,8,8], index: 1, kind: input, shape index: {}]
  %s2 = inlined_call_operand.vmem [shape: f32[4,1,8], index: 2, kind: input, shape index: {}]
  %s3 = inlined_call_operand.vmem [shape: f32[4,1,8], index: 3, kind: input, shape index: {}]
  %s4 = inlined_call_operand.vmem [shape: bf16[9,8,8], index: 4, kind: input, shape index: {}]
  %s5 = inlined_call_operand.vmem [shape: f32[1,8], index: 5, kind: input, shape index: {}]
  %s6 = inlined_call_operand.vmem [shape: f32[4,2,8,8,8], index: 6, kind: output, shape index: {}]
  %s7 = sld [smem:[#allocation0]]
  $region61: #{ms_coder_forward.4} parent=0
    _
  %s9 = ssub.s32 1, %s7
  %s10 = scalar_select 0, %s9, %s7
  loop: start=0, step=1, limit=10
  $region2: #{ms_coder_forward.4} parent=0 // loop_pre_header
    _
  $region3: #{ms_coder_forward.4} parent=0 // loop_header
    %s12 = sphi 0, %s16
    %p13 = scmp.ge.s32.totalorder %s12, 10
    %s19 = sphi 0, %s31
    %s20 = sphi 0, %s27
    %s21 = sphi 0, %s19
    %s22 = sphi 0, %s20
    %s23 = sphi 0, %s21
    %s24 = sphi 0, %s22
    %s36 = sphi 0, %s38
    %s39 = sphi 0, %s36
    %s40 = sphi 0, %s39
    %s56 = sphi 0, %s40
    %s62 = sphi 0, %s64
    %s65 = sphi 0, %s62
    %s66 = sphi 0, %s65
    %s82 = sphi 0, %s66
    %s88 = sphi 0, %s90
    %s91 = sphi 0, %s88
    %s92 = sphi 0, %s91
    %s108 = sphi 0, %s92
    %s114 = sphi 0, %s116
    %s117 = sphi 0, %s114
    %s118 = sphi 0, %s117
    %s134 = sphi 0, %s118
    %s138 = sphi 0, %s138
    %s140 = sphi 0, %s138
    %s141 = sphi 0, %s140
    %s155 = sphi 0, %s141
    %s159 = sphi 0, %s159
    %s161 = sphi 0, %s159
    %s162 = sphi 0, %s161
    %s176 = sphi 0, %s162
    %s184 = sphi 0, %s186
    %s187 = sphi 0, %s184
    %s188 = sphi 0, %s187
    %s204 = sphi 0, %s188
  $region4: #{ms_coder_forward.4} parent=0 // loop_header_branch
    %15 = sbr.rel (%p13) target = $region8
  $region5: #{ms_coder_forward.4} parent=0 // loop_body
    %s17 = ssub.s32 %s12, 1
    %s18 = ssub.s32 %s12, 2
    %s25 = sadd.s32 1, %s20
    %p26 = scmp.ge.s32.totalorder %s25, 4
    %s27 = scalar_select %p26, 0, %s25
    %s28 = sadd.s32 1, %s19
    %s29 = scalar_select %p26, %s28, %s19
    %p30 = scmp.ge.s32.totalorder %s29, 2
    %s31 = scalar_select %p30, 0, %s29
    %s32 = ssub.s32 %s20, %s27
    %s33 = ssub.s32 %s19, %s31
    %s34 = sor.u32 %s32, %s33
    %p35 = scmp.eq.s32.totalorder %s34, 0
    %s37 = sadd.s32 %s36, 1
    %s38 = scalar_select %p35, %s36, %s37
    %p41 = pneg %p35
    %p42 = scmp.eq.s32.totalorder %s12, 7
    %p43 = por %p41, %p42
    %p44 = scmp.ne.s32.totalorder %s36, %s39
    %p45 = scmp.eq.s32.totalorder %s12, 0
    %p46 = por %p44, %p45
    %p47 = scmp.ne.s32.totalorder %s36, %s39
    %p48 = scmp.eq.s32.totalorder %s17, 7
    %p49 = por %p47, %p48
    %p50 = scmp.ne.s32.totalorder %s39, %s40
    %p51 = scmp.eq.s32.totalorder %s17, 0
    %p52 = por %p50, %p51
    %p53 = scmp.ne.s32.totalorder %s39, %s40
    %p54 = scmp.eq.s32.totalorder %s18, 7
    %p55 = por %p53, %p54
    %p57 = scmp.ne.s32.totalorder %s40, %s56
    %p58 = scmp.eq.s32.totalorder %s18, 0
    %p59 = por %p57, %p58
    %s60 = ssub.s32 %s20, %s27
    %p61 = scmp.eq.s32.totalorder %s60, 0
    %s63 = sadd.s32 %s62, 1
    %s64 = scalar_select %p61, %s62, %s63
    %p67 = pneg %p61
    %p68 = scmp.eq.s32.totalorder %s12, 7
    %p69 = por %p67, %p68
    %p70 = scmp.ne.s32.totalorder %s62, %s65
    %p71 = scmp.eq.s32.totalorder %s12, 0
    %p72 = por %p70, %p71
    %p73 = scmp.ne.s32.totalorder %s62, %s65
    %p74 = scmp.eq.s32.totalorder %s17, 7
    %p75 = por %p73, %p74
    %p76 = scmp.ne.s32.totalorder %s65, %s66
    %p77 = scmp.eq.s32.totalorder %s17, 0
    %p78 = por %p76, %p77
    %p79 = scmp.ne.s32.totalorder %s65, %s66
    %p80 = scmp.eq.s32.totalorder %s18, 7
    %p81 = por %p79, %p80
    %p83 = scmp.ne.s32.totalorder %s66, %s82
    %p84 = scmp.eq.s32.totalorder %s18, 0
    %p85 = por %p83, %p84
    %s86 = ssub.s32 %s20, %s27
    %p87 = scmp.eq.s32.totalorder %s86, 0
    %s89 = sadd.s32 %s88, 1
    %s90 = scalar_select %p87, %s88, %s89
    %p93 = pneg %p87
    %p94 = scmp.eq.s32.totalorder %s12, 7
    %p95 = por %p93, %p94
    %p96 = scmp.ne.s32.totalorder %s88, %s91
    %p97 = scmp.eq.s32.totalorder %s12, 0
    %p98 = por %p96, %p97
    %p99 = scmp.ne.s32.totalorder %s88, %s91
    %p100 = scmp.eq.s32.totalorder %s17, 7
    %p101 = por %p99, %p100
    %p102 = scmp.ne.s32.totalorder %s91, %s92
    %p103 = scmp.eq.s32.totalorder %s17, 0
    %p104 = por %p102, %p103
    %p105 = scmp.ne.s32.totalorder %s91, %s92
    %p106 = scmp.eq.s32.totalorder %s18, 7
    %p107 = por %p105, %p106
    %p109 = scmp.ne.s32.totalorder %s92, %s108
    %p110 = scmp.eq.s32.totalorder %s18, 0
    %p111 = por %p109, %p110
    %s112 = ssub.s32 %s20, %s27
    %p113 = scmp.eq.s32.totalorder %s112, 0
    %s115 = sadd.s32 %s114, 1
    %s116 = scalar_select %p113, %s114, %s115
    %p119 = pneg %p113
    %p120 = scmp.eq.s32.totalorder %s12, 7
    %p121 = por %p119, %p120
    %p122 = scmp.ne.s32.totalorder %s114, %s117
    %p123 = scmp.eq.s32.totalorder %s12, 0
    %p124 = por %p122, %p123
    %p125 = scmp.ne.s32.totalorder %s114, %s117
    %p126 = scmp.eq.s32.totalorder %s17, 7
    %p127 = por %p125, %p126
    %p128 = scmp.ne.s32.totalorder %s117, %s118
    %p129 = scmp.eq.s32.totalorder %s17, 0
    %p130 = por %p128, %p129
    %p131 = scmp.ne.s32.totalorder %s117, %s118
    %p132 = scmp.eq.s32.totalorder %s18, 7
    %p133 = por %p131, %p132
    %p135 = scmp.ne.s32.totalorder %s118, %s134
    %p136 = scmp.eq.s32.totalorder %s18, 0
    %p137 = por %p135, %p136
    %s139 = sadd.s32 %s138, 1
    %p142 = scmp.eq.s32.totalorder %s12, 7
    %p143 = scmp.ne.s32.totalorder %s138, %s140
    %p144 = scmp.eq.s32.totalorder %s12, 0
    %p145 = por %p143, %p144
    %p146 = scmp.ne.s32.totalorder %s138, %s140
    %p147 = scmp.eq.s32.totalorder %s17, 7
    %p148 = por %p146, %p147
    %p149 = scmp.ne.s32.totalorder %s140, %s141
    %p150 = scmp.eq.s32.totalorder %s17, 0
    %p151 = por %p149, %p150
    %p152 = scmp.ne.s32.totalorder %s140, %s141
    %p153 = scmp.eq.s32.totalorder %s18, 7
    %p154 = por %p152, %p153
    %p156 = scmp.ne.s32.totalorder %s141, %s155
    %p157 = scmp.eq.s32.totalorder %s18, 0
    %p158 = por %p156, %p157
    %s160 = sadd.s32 %s159, 1
    %p163 = scmp.eq.s32.totalorder %s12, 7
    %p164 = scmp.ne.s32.totalorder %s159, %s161
    %p165 = scmp.eq.s32.totalorder %s12, 0
    %p166 = por %p164, %p165
    %p167 = scmp.ne.s32.totalorder %s159, %s161
    %p168 = scmp.eq.s32.totalorder %s17, 7
    %p169 = por %p167, %p168
    %p170 = scmp.ne.s32.totalorder %s161, %s162
    %p171 = scmp.eq.s32.totalorder %s17, 0
    %p172 = por %p170, %p171
    %p173 = scmp.ne.s32.totalorder %s161, %s162
    %p174 = scmp.eq.s32.totalorder %s18, 7
    %p175 = por %p173, %p174
    %p177 = scmp.ne.s32.totalorder %s162, %s176
    %p178 = scmp.eq.s32.totalorder %s18, 0
    %p179 = por %p177, %p178
    %s180 = ssub.s32 %s20, %s27
    %s181 = ssub.s32 %s19, %s31
    %s182 = sor.u32 %s180, %s181
    %p183 = scmp.eq.s32.totalorder %s182, 0
    %s185 = sadd.s32 %s184, 1
    %s186 = scalar_select %p183, %s184, %s185
    %p189 = pneg %p183
    %p190 = scmp.eq.s32.totalorder %s12, 7
    %p191 = por %p189, %p190
    %p192 = scmp.ne.s32.totalorder %s184, %s187
    %p193 = scmp.eq.s32.totalorder %s12, 0
    %p194 = por %p192, %p193
    %p195 = scmp.ne.s32.totalorder %s184, %s187
    %p196 = scmp.eq.s32.totalorder %s17, 7
    %p197 = por %p195, %p196
    %p198 = scmp.ne.s32.totalorder %s187, %s188
    %p199 = scmp.eq.s32.totalorder %s17, 0
    %p200 = por %p198, %p199
    %p201 = scmp.ne.s32.totalorder %s187, %s188
    %p202 = scmp.eq.s32.totalorder %s18, 7
    %p203 = por %p201, %p202
    %p205 = scmp.ne.s32.totalorder %s188, %s204
    %p206 = scmp.eq.s32.totalorder %s18, 0
    %p207 = por %p205, %p206
    %p208 = scmp.le.s32.totalorder 1, %s12
    %p209 = scmp.lt.s32.totalorder %s12, 9
    %p210 = pnand %p208, %p209
    %p211 = pneg %p210
    // Predicated region
    $region9: #{ms_coder_forward.4} parent=5 // pred_check
      _
    $region10: #{ms_coder_forward.4} parent=5 // pred_check_branch
      %213 = sbr.rel (%p210) target = $region12
    $region11: #{ms_coder_forward.4} parent=5 // pred_region
      %s214 = ssub.s32 %s12, 1
      // Predicated region
      $region13: #{ms_coder_forward.4} parent=11 // pred_check
        %p215 = pneg %p151
      $region14: #{ms_coder_forward.4} parent=11 // pred_check_branch
        %217 = sbr.rel (%p215) target = $region16
      $region15: #{ms_coder_forward.4} parent=11 // pred_region
        _
      $region16: #{ms_coder_forward.4} parent=11 // pred_fallthru
        _
      // Predicated region
      $region17: #{ms_coder_forward.4} parent=11 // pred_check
        %p218 = pneg %p172
      $region18: #{ms_coder_forward.4} parent=11 // pred_check_branch
        %220 = sbr.rel (%p218) target = $region20
      $region19: #{ms_coder_forward.4} parent=11 // pred_region
        _
      $region20: #{ms_coder_forward.4} parent=11 // pred_fallthru
        _
    $region12: #{ms_coder_forward.4} parent=5 // pred_fallthru
      _
    %p221 = scmp.lt.s32.totalorder %s12, 8
    // Predicated region
    $region21: #{ms_coder_forward.4} parent=5 // pred_check
      %p222 = pneg %p221
    $region22: #{ms_coder_forward.4} parent=5 // pred_check_branch
      %224 = sbr.rel (%p222) target = $region24
    $region23: #{ms_coder_forward.4} parent=5 // pred_region
      // Predicated region
      $region25: #{ms_coder_forward.4} parent=23 // pred_check
        %p225 = pneg %p46
      $region26: #{ms_coder_forward.4} parent=23 // pred_check_branch
        %227 = sbr.rel (%p225) target = $region28
      $region27: #{ms_coder_forward.4} parent=23 // pred_region
        %p228 = scmp.lt.s32.totalorder %s20, 3
        %s229 = scalar_select %p228, %s20, 3
        %p230 = scmp.lt.s32.totalorder %s19, 1
        %s231 = scalar_select %p230, %s19, 1
        %s232 = smul.addr %s231, 8
        %s233 = smul.addr %s229, 16
        %s234 = sadd.s32 %s232, %s233
        %s235 = smul.addr %s234, 8
        %s236 = scalar_lea.vmem %s0, %s235
      $region28: #{ms_coder_forward.4} parent=23 // pred_fallthru
        _
      // Predicated region
      $region29: #{ms_coder_forward.4} parent=23 // pred_check
        %p237 = pneg %p72
      $region30: #{ms_coder_forward.4} parent=23 // pred_check_branch
        %239 = sbr.rel (%p237) target = $region32
      $region31: #{ms_coder_forward.4} parent=23 // pred_region
        %p240 = scmp.lt.s32.totalorder %s20, 3
        %s241 = scalar_select %p240, %s20, 3
        %s242 = smul.addr %s241, 9
        %s243 = smul.addr %s242, 4
        %s244 = scalar_lea.vmem %s1, %s243
      $region32: #{ms_coder_forward.4} parent=23 // pred_fallthru
        _
      // Predicated region
      $region33: #{ms_coder_forward.4} parent=23 // pred_check
        %p245 = pneg %p98
      $region34: #{ms_coder_forward.4} parent=23 // pred_check_branch
        %247 = sbr.rel (%p245) target = $region36
      $region35: #{ms_coder_forward.4} parent=23 // pred_region
        %p248 = scmp.lt.s32.totalorder %s20, 3
        %s249 = scalar_select %p248, %s20, 3
        %s250 = scalar_lea.vmem %s2, %s249
      $region36: #{ms_coder_forward.4} parent=23 // pred_fallthru
        _
      // Predicated region
      $region37: #{ms_coder_forward.4} parent=23 // pred_check
        %p251 = pneg %p124
      $region38: #{ms_coder_forward.4} parent=23 // pred_check_branch
        %253 = sbr.rel (%p251) target = $region40
      $region39: #{ms_coder_forward.4} parent=23 // pred_region
        %p254 = scmp.lt.s32.totalorder %s20, 3
        %s255 = scalar_select %p254, %s20, 3
        %s256 = scalar_lea.vmem %s3, %s255
      $region40: #{ms_coder_forward.4} parent=23 // pred_fallthru
        _
    $region24: #{ms_coder_forward.4} parent=5 // pred_fallthru
      _
    %p257 = scmp.le.s32.totalorder 1, %s12
    %p258 = scmp.lt.s32.totalorder %s12, 9
    %p259 = pnand %p257, %p258
    %p260 = pneg %p259
    // Predicated region
    $region41: #{ms_coder_forward.4} parent=5 // pred_check
      _
    $region42: #{ms_coder_forward.4} parent=5 // pred_check_branch
      %262 = sbr.rel (%p259) target = $region44
    $region43: #{ms_coder_forward.4} parent=5 // pred_region
      %s263 = ssub.s32 %s12, 1
      %p264 = scmp.lt.s32.totalorder %s22, 3
      %s265 = scalar_select %p264, %s22, 3
      %p266 = scmp.lt.s32.totalorder %s21, 1
      %s267 = scalar_select %p266, %s21, 1
      %s268 = smul.addr %s267, 8
      %s269 = smul.addr %s265, 16
      %s270 = sadd.s32 %s268, %s269
      %s271 = smul.addr %s270, 8
      %s272 = scalar_lea.vmem %s0, %s271
      %p273 = pneg %p52
      %p274 = pneg %p49
      %p275 = scmp.lt.s32.totalorder %s22, 3
      %s276 = scalar_select %p275, %s22, 3
      %s277 = smul.addr %s276, 9
      %s278 = smul.addr %s277, 4
      %s279 = scalar_lea.vmem %s1, %s278
      %p280 = pneg %p78
      %p281 = pneg %p75
      %p282 = scmp.lt.s32.totalorder %s22, 3
      %s283 = scalar_select %p282, %s22, 3
      %s284 = scalar_lea.vmem %s2, %s283
      %p285 = pneg %p104
      %p286 = pneg %p101
      %p287 = scmp.lt.s32.totalorder %s22, 3
      %s288 = scalar_select %p287, %s22, 3
      %s289 = scalar_lea.vmem %s3, %s288
      %p290 = pneg %p130
      %p291 = pneg %p127
      %p292 = pneg %p151
      %p293 = pneg %p148
      %p294 = pneg %p172
      %p295 = pneg %p169
      %p296 = pneg %p200
      %p297 = pneg %p197
      %p298 = scmp.lt.s32.totalorder %s22, 3
      %s299 = scalar_select %p298, %s22, 3
      %p300 = scmp.lt.s32.totalorder %s21, 1
      %s301 = scalar_select %p300, %s21, 1
      %s302 = smul.addr %s301, 8
      %s303 = smul.addr %s299, 16
      %s304 = sadd.s32 %s302, %s303
      %s305 = smul.addr %s304, 8
      %s306 = scalar_lea.vmem %s6, %s305
      %p307 = scmp.lt.s32.totalorder %s22, 3
      %s308 = scalar_select %p307, %s22, 3
      %p309 = scmp.lt.s32.totalorder %s21, 1
      %s310 = scalar_select %p309, %s21, 1
      %s311 = smul.addr %s310, 8
      %s312 = smul.addr %s308, 16
      %s313 = sadd.s32 %s311, %s312
      %s314 = smul.addr %s313, 8
      %s315 = scalar_lea.vmem %s0, %s314
      %p316 = scmp.lt.s32.totalorder %s22, 3
      %s317 = scalar_select %p316, %s22, 3
      %s318 = smul.addr %s317, 9
      %s319 = smul.addr %s318, 4
      %s320 = scalar_lea.vmem %s1, %s319
      %p321 = scmp.lt.s32.totalorder %s22, 3
      %s322 = scalar_select %p321, %s22, 3
      %s323 = scalar_lea.vmem %s2, %s322
      %p324 = scmp.lt.s32.totalorder %s22, 3
      %s325 = scalar_select %p324, %s22, 3
      %s326 = scalar_lea.vmem %s3, %s325
      %p327 = scmp.lt.s32.totalorder %s22, 3
      %s328 = scalar_select %p327, %s22, 3
      %p329 = scmp.lt.s32.totalorder %s21, 1
      %s330 = scalar_select %p329, %s21, 1
      %s331 = smul.addr %s330, 8
      %s332 = smul.addr %s328, 16
      %s333 = sadd.s32 %s331, %s332
      %s334 = smul.addr %s333, 8
      %s335 = scalar_lea.vmem %s6, %s334
      %vm337 = vcmask 64512
      %338 = vst.msk [vmem:[#allocation2] sm:$0xff] %vm337, 0.0
      %339 = vst.msk [vmem:[#allocation2 + $0x8] sm:$0xff] %vm337, 0.0
      %340 = vst.msk [vmem:[#allocation2 + $0x10] sm:$0xff] %vm337, 0.0
      %341 = vst.msk [vmem:[#allocation2 + $0x18] sm:$0xff] %vm337, 0.0
      %342 = vst.msk [vmem:[#allocation2 + $0x20] sm:$0xff] %vm337, 0.0
      %343 = vst.msk [vmem:[#allocation2 + $0x28] sm:$0xff] %vm337, 0.0
      %344 = vst.msk [vmem:[#allocation2 + $0x30] sm:$0xff] %vm337, 0.0
      %345 = vst.msk [vmem:[#allocation2 + $0x38] sm:$0xff] %vm337, 0.0
      %346 = vst.msk [vmem:[#allocation2 + $0x40] sm:$0xff] %vm337, 0.0
      %347 = vst.msk [vmem:[#allocation2 + $0x48] sm:$0xff] %vm337, 0.0
      %348 = vst.msk [vmem:[#allocation2 + $0x50] sm:$0xff] %vm337, 0.0
      %349 = vst.msk [vmem:[#allocation2 + $0x58] sm:$0xff] %vm337, 0.0
      %350 = vst.msk [vmem:[#allocation2 + $0x60] sm:$0xff] %vm337, 0.0
      %351 = vst.msk [vmem:[#allocation2 + $0x68] sm:$0xff] %vm337, 0.0
      %352 = vst.msk [vmem:[#allocation2 + $0x70] sm:$0xff] %vm337, 0.0
      %353 = vst.msk [vmem:[#allocation2 + $0x78] sm:$0xff] %vm337, 0.0
      %354 = vst.msk [vmem:[#allocation2 + $0x80] sm:$0xff] %vm337, 0.0
      %355 = vst.msk [vmem:[#allocation2 + $0x88] sm:$0xff] %vm337, 0.0
      %356 = vst.msk [vmem:[#allocation2 + $0x90] sm:$0xff] %vm337, 0.0
      %357 = vst.msk [vmem:[#allocation2 + $0x98] sm:$0xff] %vm337, 0.0
      %358 = vst.msk [vmem:[#allocation2 + $0xa0] sm:$0xff] %vm337, 0.0
      %359 = vst.msk [vmem:[#allocation2 + $0xa8] sm:$0xff] %vm337, 0.0
      %360 = vst.msk [vmem:[#allocation2 + $0xb0] sm:$0xff] %vm337, 0.0
      %361 = vst.msk [vmem:[#allocation2 + $0xb8] sm:$0xff] %vm337, 0.0
      %362 = vst.msk [vmem:[#allocation2 + $0xc0] sm:$0xff] %vm337, 0.0
      %363 = vst.msk [vmem:[#allocation2 + $0xc8] sm:$0xff] %vm337, 0.0
      %364 = vst.msk [vmem:[#allocation2 + $0xd0] sm:$0xff] %vm337, 0.0
      %365 = vst.msk [vmem:[#allocation2 + $0xd8] sm:$0xff] %vm337, 0.0
      %366 = vst.msk [vmem:[#allocation2 + $0xe0] sm:$0xff] %vm337, 0.0
      %367 = vst.msk [vmem:[#allocation2 + $0xe8] sm:$0xff] %vm337, 0.0
      %v368 = vld [vmem:[%s315] sm:$0xff]
      %v369 = vld [vmem:[%s315 + $0x8] sm:$0xff]
      %v370 = vld [vmem:[%s315 + $0x10] sm:$0xff]
      %v371 = vld [vmem:[%s315 + $0x18] sm:$0xff]
      %v372 = vld [vmem:[%s315 + $0x20] sm:$0xff]
      %v373 = vld [vmem:[%s315 + $0x28] sm:$0xff]
      %v374 = vld [vmem:[%s315 + $0x30] sm:$0xff]
      %v375 = vld [vmem:[%s315 + $0x38] sm:$0xff]
      %p376 = scmp.eq.s32.totalorder %s22, 0
      // Predicated region
      $region45: #{ms_coder_forward.4} parent=43 // pred_check
        %p377 = pneg %p376
      $region46: #{ms_coder_forward.4} parent=43 // pred_check_branch
        %379 = sbr.rel (%p377) target = $region48
      $region47: #{ms_coder_forward.4} parent=43 // pred_region
        %380 = vst.msk [vmem:[#allocation3] sm:$0xff] %vm337, 0.0
        %381 = vst.msk [vmem:[#allocation3 + $0x8] sm:$0xff] %vm337, 0.0
        %382 = vst.msk [vmem:[#allocation3 + $0x10] sm:$0xff] %vm337, 0.0
        %383 = vst.msk [vmem:[#allocation3 + $0x18] sm:$0xff] %vm337, 0.0
        %384 = vst.msk [vmem:[#allocation3 + $0x20] sm:$0xff] %vm337, 0.0
        %385 = vst.msk [vmem:[#allocation3 + $0x28] sm:$0xff] %vm337, 0.0
        %386 = vst.msk [vmem:[#allocation3 + $0x30] sm:$0xff] %vm337, 0.0
        %387 = vst.msk [vmem:[#allocation3 + $0x38] sm:$0xff] %vm337, 0.0
      $region48: #{ms_coder_forward.4} parent=43 // pred_fallthru
        _
      %v388 = vld [vmem:[#allocation3] sm:$0xff]
      %v389 = vld [vmem:[#allocation3 + $0x8] sm:$0xff]
      %v390 = vld [vmem:[#allocation3 + $0x10] sm:$0xff]
      %v391 = vld [vmem:[#allocation3 + $0x18] sm:$0xff]
      %v392 = vld [vmem:[#allocation3 + $0x20] sm:$0xff]
      %v393 = vld [vmem:[#allocation3 + $0x28] sm:$0xff]
      %v394 = vld [vmem:[#allocation3 + $0x30] sm:$0xff]
      %v395 = vld [vmem:[#allocation3 + $0x38] sm:$0xff]
      %v396 = vadd.f32 %v368, %v388
      %v397 = vadd.f32 %v369, %v389
      %v398 = vadd.f32 %v370, %v390
      %v399 = vadd.f32 %v371, %v391
      %v400 = vadd.f32 %v372, %v392
      %v401 = vadd.f32 %v373, %v393
      %v402 = vadd.f32 %v374, %v394
      %v403 = vadd.f32 %v375, %v395
      %s404 = scalar_lea.vmem [#allocation2], 24
      %405 = vst.msk [vmem:[%s404 + $0x8] sm:$0xff] %vm337, %v396
      %406 = vst.msk [vmem:[%s404 + $0x20] sm:$0xff] %vm337, %v397
      %407 = vst.msk [vmem:[%s404 + $0x38] sm:$0xff] %vm337, %v398
      %408 = vst.msk [vmem:[%s404 + $0x50] sm:$0xff] %vm337, %v399
      %409 = vst.msk [vmem:[%s404 + $0x68] sm:$0xff] %vm337, %v400
      %410 = vst.msk [vmem:[%s404 + $0x80] sm:$0xff] %vm337, %v401
      %411 = vst.msk [vmem:[%s404 + $0x98] sm:$0xff] %vm337, %v402
      %412 = vst.msk [vmem:[%s404 + $0xb0] sm:$0xff] %vm337, %v403
      %v413 = vld [vmem:[#allocation2 + $0x7] sm:$0xff]
      %v414 = vld [vmem:[#allocation2 + $0x1f] sm:$0xff]
      %v415 = vld [vmem:[#allocation2 + $0x37] sm:$0xff]
      %v416 = vld [vmem:[#allocation2 + $0x4f] sm:$0xff]
      %v417 = vld [vmem:[#allocation2 + $0x67] sm:$0xff]
      %v418 = vld [vmem:[#allocation2 + $0x7f] sm:$0xff]
      %v419 = vld [vmem:[#allocation2 + $0x97] sm:$0xff]
      %v420 = vld [vmem:[#allocation2 + $0xaf] sm:$0xff]
      %v421 = vpack.c.bf16 %v414, %v413
      %v422 = vpack.c.bf16 %v416, %v415
      %v423 = vpack.c.bf16 %v418, %v417
      %v424 = vpack.c.bf16 %v420, %v419
      %v425 = vld [vmem:[%s320] sm:$0xf]
      %v426 = vld [vmem:[#allocation2 + $0x8] sm:$0xff]
      %v427 = vld [vmem:[#allocation2 + $0x20] sm:$0xff]
      %v428 = vld [vmem:[#allocation2 + $0x38] sm:$0xff]
      %v429 = vld [vmem:[#allocation2 + $0x50] sm:$0xff]
      %v430 = vld [vmem:[#allocation2 + $0x68] sm:$0xff]
      %v431 = vld [vmem:[#allocation2 + $0x80] sm:$0xff]
      %v432 = vld [vmem:[#allocation2 + $0x98] sm:$0xff]
      %v433 = vld [vmem:[#allocation2 + $0xb0] sm:$0xff]
      %v434 = vpack.c.bf16 %v427, %v426
      %v435 = vpack.c.bf16 %v429, %v428
      %v436 = vpack.c.bf16 %v431, %v430
      %v437 = vpack.c.bf16 %v433, %v432
      %s438 = scalar_lea.vmem %s320, 4
      %v439 = vld [vmem:[%s438] sm:$0xf]
      %v441 = vsel %vm337, %v434, 0
      %v444 = vsel %vm337, %v435, 0
      %v447 = vsel %vm337, %v436, 0
      %v450 = vsel %vm337, %v437, 0
      %vm452 = vcmask 1043456
      %v454 = vsel %vm452, %v439, 0
      %456 = vmatpush.bf16.msra.mxu0 0
      %457 = vmatpush.bf16.msra.mxu0 0
      %458 = vmatpush.bf16.msra.mxu0 0
      %459 = vmatpush.bf16.msra.mxu0 0
      %460 = vmatpush.bf16.msra.mxu0 0
      %461 = vmatpush.bf16.msra.mxu0 0
      %462 = vmatpush.bf16.msra.mxu0 0
      %463 = vmatpush.bf16.msra.mxu0 %v454
      %464 = vmatmul.bf16.gmra.mxu0 %v441
      %v465 = vpop.f32.mrf.mxu0
      %v466 = vadd.f32 0.0, %v465
      %v467 = vpop.f32.mrf.mxu0
      %v468 = vadd.f32 0.0, %v467
      %469 = vmatmul.bf16.gmra.mxu0 %v444
      %v470 = vpop.f32.mrf.mxu0
      %v471 = vadd.f32 0.0, %v470
      %v472 = vpop.f32.mrf.mxu0
      %v473 = vadd.f32 0.0, %v472
      %474 = vmatmul.bf16.gmra.mxu0 %v447
      %v475 = vpop.f32.mrf.mxu0
      %v476 = vadd.f32 0.0, %v475
      %v477 = vpop.f32.mrf.mxu0
      %v478 = vadd.f32 0.0, %v477
      %479 = vmatmul.bf16.gmra.mxu0 %v450
      %v480 = vpop.f32.mrf.mxu0
      %v481 = vadd.f32 0.0, %v480
      %v482 = vpop.f32.mrf.mxu0
      %v483 = vadd.f32 0.0, %v482
      %484 = vdwg.mxu0
      %v486 = vsel %vm337, %v421, 0
      %v489 = vsel %vm337, %v422, 0
      %v492 = vsel %vm337, %v423, 0
      %v495 = vsel %vm337, %v424, 0
      %v498 = vsel %vm452, %v425, 0
      %500 = vmatpush.bf16.msra.mxu0 0
      %501 = vmatpush.bf16.msra.mxu0 0
      %502 = vmatpush.bf16.msra.mxu0 0
      %503 = vmatpush.bf16.msra.mxu0 0
      %504 = vmatpush.bf16.msra.mxu0 0
      %505 = vmatpush.bf16.msra.mxu0 0
      %506 = vmatpush.bf16.msra.mxu0 0
      %507 = vmatpush.bf16.msra.mxu0 %v498
      %508 = vmatmul.bf16.gmra.mxu0 %v486
      %v509 = vpop.f32.mrf.mxu0
      %v510 = vadd.f32 %v466, %v509
      %v511 = vpop.f32.mrf.mxu0
      %v512 = vadd.f32 %v468, %v511
      %513 = vmatmul.bf16.gmra.mxu0 %v489
      %v514 = vpop.f32.mrf.mxu0
      %v515 = vadd.f32 %v471, %v514
      %v516 = vpop.f32.mrf.mxu0
      %v517 = vadd.f32 %v473, %v516
      %518 = vmatmul.bf16.gmra.mxu0 %v492
      %v519 = vpop.f32.mrf.mxu0
      %v520 = vadd.f32 %v476, %v519
      %v521 = vpop.f32.mrf.mxu0
      %v522 = vadd.f32 %v478, %v521
      %523 = vmatmul.bf16.gmra.mxu0 %v495
      %v524 = vpop.f32.mrf.mxu0
      %v525 = vadd.f32 %v481, %v524
      %v526 = vpop.f32.mrf.mxu0
      %v527 = vadd.f32 %v483, %v526
      %528 = vdwg.mxu0
      %v529 = vld [vmem:[#allocation2 + $0x9] sm:$0xff]
      %v530 = vld [vmem:[#allocation2 + $0x21] sm:$0xff]
      %v531 = vld [vmem:[#allocation2 + $0x39] sm:$0xff]
      %v532 = vld [vmem:[#allocation2 + $0x51] sm:$0xff]
      %v533 = vld [vmem:[#allocation2 + $0x69] sm:$0xff]
      %v534 = vld [vmem:[#allocation2 + $0x81] sm:$0xff]
      %v535 = vld [vmem:[#allocation2 + $0x99] sm:$0xff]
      %v536 = vld [vmem:[#allocation2 + $0xb1] sm:$0xff]
      %v537 = vpack.c.bf16 %v530, %v529
      %v538 = vpack.c.bf16 %v532, %v531
      %v539 = vpack.c.bf16 %v534, %v533
      %v540 = vpack.c.bf16 %v536, %v535
      %s541 = scalar_lea.vmem %s320, 8
      %v542 = vld [vmem:[%s541] sm:$0xf]
      %v544 = vsel %vm337, %v537, 0
      %v547 = vsel %vm337, %v538, 0
      %v550 = vsel %vm337, %v539, 0
      %v553 = vsel %vm337, %v540, 0
      %v556 = vsel %vm452, %v542, 0
      %558 = vmatpush.bf16.msra.mxu0 0
      %559 = vmatpush.bf16.msra.mxu0 0
      %560 = vmatpush.bf16.msra.mxu0 0
      %561 = vmatpush.bf16.msra.mxu0 0
      %562 = vmatpush.bf16.msra.mxu0 0
      %563 = vmatpush.bf16.msra.mxu0 0
      %564 = vmatpush.bf16.msra.mxu0 0
      %565 = vmatpush.bf16.msra.mxu0 %v556
      %566 = vmatmul.bf16.gmra.mxu0 %v544
      %v567 = vpop.f32.mrf.mxu0
      %v568 = vadd.f32 0.0, %v567
      %v569 = vpop.f32.mrf.mxu0
      %v570 = vadd.f32 0.0, %v569
      %571 = vmatmul.bf16.gmra.mxu0 %v547
      %v572 = vpop.f32.mrf.mxu0
      %v573 = vadd.f32 0.0, %v572
      %v574 = vpop.f32.mrf.mxu0
      %v575 = vadd.f32 0.0, %v574
      %576 = vmatmul.bf16.gmra.mxu0 %v550
      %v577 = vpop.f32.mrf.mxu0
      %v578 = vadd.f32 0.0, %v577
      %v579 = vpop.f32.mrf.mxu0
      %v580 = vadd.f32 0.0, %v579
      %581 = vmatmul.bf16.gmra.mxu0 %v553
      %v582 = vpop.f32.mrf.mxu0
      %v583 = vadd.f32 0.0, %v582
      %v584 = vpop.f32.mrf.mxu0
      %v585 = vadd.f32 0.0, %v584
      %586 = vdwg.mxu0
      %v587 = vadd.f32 %v510, %v568
      %v588 = vadd.f32 %v512, %v570
      %v589 = vadd.f32 %v515, %v573
      %v590 = vadd.f32 %v517, %v575
      %v591 = vadd.f32 %v520, %v578
      %v592 = vadd.f32 %v522, %v580
      %v593 = vadd.f32 %v525, %v583
      %v594 = vadd.f32 %v527, %v585
      %v595 = vld [vmem:[%s404 + $0x7] sm:$0xff]
      %v596 = vld [vmem:[%s404 + $0x1f] sm:$0xff]
      %v597 = vld [vmem:[%s404 + $0x37] sm:$0xff]
      %v598 = vld [vmem:[%s404 + $0x4f] sm:$0xff]
      %v599 = vld [vmem:[%s404 + $0x67] sm:$0xff]
      %v600 = vld [vmem:[%s404 + $0x7f] sm:$0xff]
      %v601 = vld [vmem:[%s404 + $0x97] sm:$0xff]
      %v602 = vld [vmem:[%s404 + $0xaf] sm:$0xff]
      %v603 = vpack.c.bf16 %v596, %v595
      %v604 = vpack.c.bf16 %v598, %v597
      %v605 = vpack.c.bf16 %v600, %v599
      %v606 = vpack.c.bf16 %v602, %v601
      %s607 = scalar_lea.vmem %s320, 12
      %v608 = vld [vmem:[%s607] sm:$0xf]
      %v610 = vsel %vm337, %v603, 0
      %v613 = vsel %vm337, %v604, 0
      %v616 = vsel %vm337, %v605, 0
      %v619 = vsel %vm337, %v606, 0
      %v622 = vsel %vm452, %v608, 0
      %624 = vmatpush.bf16.msra.mxu0 0
      %625 = vmatpush.bf16.msra.mxu0 0
      %626 = vmatpush.bf16.msra.mxu0 0
      %627 = vmatpush.bf16.msra.mxu0 0
      %628 = vmatpush.bf16.msra.mxu0 0
      %629 = vmatpush.bf16.msra.mxu0 0
      %630 = vmatpush.bf16.msra.mxu0 0
      %631 = vmatpush.bf16.msra.mxu0 %v622
      %632 = vmatmul.bf16.gmra.mxu0 %v610
      %v633 = vpop.f32.mrf.mxu0
      %v634 = vadd.f32 0.0, %v633
      %v635 = vpop.f32.mrf.mxu0
      %v636 = vadd.f32 0.0, %v635
      %637 = vmatmul.bf16.gmra.mxu0 %v613
      %v638 = vpop.f32.mrf.mxu0
      %v639 = vadd.f32 0.0, %v638
      %v640 = vpop.f32.mrf.mxu0
      %v641 = vadd.f32 0.0, %v640
      %642 = vmatmul.bf16.gmra.mxu0 %v616
      %v643 = vpop.f32.mrf.mxu0
      %v644 = vadd.f32 0.0, %v643
      %v645 = vpop.f32.mrf.mxu0
      %v646 = vadd.f32 0.0, %v645
      %647 = vmatmul.bf16.gmra.mxu0 %v619
      %v648 = vpop.f32.mrf.mxu0
      %v649 = vadd.f32 0.0, %v648
      %v650 = vpop.f32.mrf.mxu0
      %v651 = vadd.f32 0.0, %v650
      %652 = vdwg.mxu0
      %v653 = vadd.f32 %v587, %v634
      %v654 = vadd.f32 %v588, %v636
      %v655 = vadd.f32 %v589, %v639
      %v656 = vadd.f32 %v590, %v641
      %v657 = vadd.f32 %v591, %v644
      %v658 = vadd.f32 %v592, %v646
      %v659 = vadd.f32 %v593, %v649
      %v660 = vadd.f32 %v594, %v651
      %v661 = vld [vmem:[%s404 + $0x8] sm:$0xff]
      %v662 = vld [vmem:[%s404 + $0x20] sm:$0xff]
      %v663 = vld [vmem:[%s404 + $0x38] sm:$0xff]
      %v664 = vld [vmem:[%s404 + $0x50] sm:$0xff]
      %v665 = vld [vmem:[%s404 + $0x68] sm:$0xff]
      %v666 = vld [vmem:[%s404 + $0x80] sm:$0xff]
      %v667 = vld [vmem:[%s404 + $0x98] sm:$0xff]
      %v668 = vld [vmem:[%s404 + $0xb0] sm:$0xff]
      %v669 = vpack.c.bf16 %v662, %v661
      %v670 = vpack.c.bf16 %v664, %v663
      %v671 = vpack.c.bf16 %v666, %v665
      %v672 = vpack.c.bf16 %v668, %v667
      %s673 = scalar_lea.vmem %s320, 16
      %v674 = vld [vmem:[%s673] sm:$0xf]
      %v676 = vsel %vm337, %v669, 0
      %v679 = vsel %vm337, %v670, 0
      %v682 = vsel %vm337, %v671, 0
      %v685 = vsel %vm337, %v672, 0
      %v688 = vsel %vm452, %v674, 0
      %690 = vmatpush.bf16.msra.mxu0 0
      %691 = vmatpush.bf16.msra.mxu0 0
      %692 = vmatpush.bf16.msra.mxu0 0
      %693 = vmatpush.bf16.msra.mxu0 0
      %694 = vmatpush.bf16.msra.mxu0 0
      %695 = vmatpush.bf16.msra.mxu0 0
      %696 = vmatpush.bf16.msra.mxu0 0
      %697 = vmatpush.bf16.msra.mxu0 %v688
      %698 = vmatmul.bf16.gmra.mxu0 %v676
      %v699 = vpop.f32.mrf.mxu0
      %v700 = vadd.f32 0.0, %v699
      %v701 = vpop.f32.mrf.mxu0
      %v702 = vadd.f32 0.0, %v701
      %703 = vmatmul.bf16.gmra.mxu0 %v679
      %v704 = vpop.f32.mrf.mxu0
      %v705 = vadd.f32 0.0, %v704
      %v706 = vpop.f32.mrf.mxu0
      %v707 = vadd.f32 0.0, %v706
      %708 = vmatmul.bf16.gmra.mxu0 %v682
      %v709 = vpop.f32.mrf.mxu0
      %v710 = vadd.f32 0.0, %v709
      %v711 = vpop.f32.mrf.mxu0
      %v712 = vadd.f32 0.0, %v711
      %713 = vmatmul.bf16.gmra.mxu0 %v685
      %v714 = vpop.f32.mrf.mxu0
      %v715 = vadd.f32 0.0, %v714
      %v716 = vpop.f32.mrf.mxu0
      %v717 = vadd.f32 0.0, %v716
      %718 = vdwg.mxu0
      %v719 = vadd.f32 %v653, %v700
      %v720 = vadd.f32 %v654, %v702
      %v721 = vadd.f32 %v655, %v705
      %v722 = vadd.f32 %v656, %v707
      %v723 = vadd.f32 %v657, %v710
      %v724 = vadd.f32 %v658, %v712
      %v725 = vadd.f32 %v659, %v715
      %v726 = vadd.f32 %v660, %v717
      %v727 = vld [vmem:[%s404 + $0x9] sm:$0xff]
      %v728 = vld [vmem:[%s404 + $0x21] sm:$0xff]
      %v729 = vld [vmem:[%s404 + $0x39] sm:$0xff]
      %v730 = vld [vmem:[%s404 + $0x51] sm:$0xff]
      %v731 = vld [vmem:[%s404 + $0x69] sm:$0xff]
      %v732 = vld [vmem:[%s404 + $0x81] sm:$0xff]
      %v733 = vld [vmem:[%s404 + $0x99] sm:$0xff]
      %v734 = vld [vmem:[%s404 + $0xb1] sm:$0xff]
      %v735 = vpack.c.bf16 %v728, %v727
      %v736 = vpack.c.bf16 %v730, %v729
      %v737 = vpack.c.bf16 %v732, %v731
      %v738 = vpack.c.bf16 %v734, %v733
      %s739 = scalar_lea.vmem %s320, 20
      %v740 = vld [vmem:[%s739] sm:$0xf]
      %v742 = vsel %vm337, %v735, 0
      %v745 = vsel %vm337, %v736, 0
      %v748 = vsel %vm337, %v737, 0
      %v751 = vsel %vm337, %v738, 0
      %v754 = vsel %vm452, %v740, 0
      %756 = vmatpush.bf16.msra.mxu0 0
      %757 = vmatpush.bf16.msra.mxu0 0
      %758 = vmatpush.bf16.msra.mxu0 0
      %759 = vmatpush.bf16.msra.mxu0 0
      %760 = vmatpush.bf16.msra.mxu0 0
      %761 = vmatpush.bf16.msra.mxu0 0
      %762 = vmatpush.bf16.msra.mxu0 0
      %763 = vmatpush.bf16.msra.mxu0 %v754
      %764 = vmatmul.bf16.gmra.mxu0 %v742
      %v765 = vpop.f32.mrf.mxu0
      %v766 = vadd.f32 0.0, %v765
      %v767 = vpop.f32.mrf.mxu0
      %v768 = vadd.f32 0.0, %v767
      %769 = vmatmul.bf16.gmra.mxu0 %v745
      %v770 = vpop.f32.mrf.mxu0
      %v771 = vadd.f32 0.0, %v770
      %v772 = vpop.f32.mrf.mxu0
      %v773 = vadd.f32 0.0, %v772
      %774 = vmatmul.bf16.gmra.mxu0 %v748
      %v775 = vpop.f32.mrf.mxu0
      %v776 = vadd.f32 0.0, %v775
      %v777 = vpop.f32.mrf.mxu0
      %v778 = vadd.f32 0.0, %v777
      %779 = vmatmul.bf16.gmra.mxu0 %v751
      %v780 = vpop.f32.mrf.mxu0
      %v781 = vadd.f32 0.0, %v780
      %v782 = vpop.f32.mrf.mxu0
      %v783 = vadd.f32 0.0, %v782
      %784 = vdwg.mxu0
      %v785 = vadd.f32 %v719, %v766
      %v786 = vadd.f32 %v720, %v768
      %v787 = vadd.f32 %v721, %v771
      %v788 = vadd.f32 %v722, %v773
      %v789 = vadd.f32 %v723, %v776
      %v790 = vadd.f32 %v724, %v778
      %v791 = vadd.f32 %v725, %v781
      %v792 = vadd.f32 %v726, %v783
      %s793 = scalar_lea.vmem [#allocation2], 48
      %v794 = vld [vmem:[%s793 + $0x7] sm:$0xff]
      %v795 = vld [vmem:[%s793 + $0x1f] sm:$0xff]
      %v796 = vld [vmem:[%s793 + $0x37] sm:$0xff]
      %v797 = vld [vmem:[%s793 + $0x4f] sm:$0xff]
      %v798 = vld [vmem:[%s793 + $0x67] sm:$0xff]
      %v799 = vld [vmem:[%s793 + $0x7f] sm:$0xff]
      %v800 = vld [vmem:[%s793 + $0x97] sm:$0xff]
      %v801 = vld [vmem:[%s793 + $0xaf] sm:$0xff]
      %v802 = vpack.c.bf16 %v795, %v794
      %v803 = vpack.c.bf16 %v797, %v796
      %v804 = vpack.c.bf16 %v799, %v798
      %v805 = vpack.c.bf16 %v801, %v800
      %s806 = scalar_lea.vmem %s320, 24
      %v807 = vld [vmem:[%s806] sm:$0xf]
      %v809 = vsel %vm337, %v802, 0
      %v812 = vsel %vm337, %v803, 0
      %v815 = vsel %vm337, %v804, 0
      %v818 = vsel %vm337, %v805, 0
      %v821 = vsel %vm452, %v807, 0
      %823 = vmatpush.bf16.msra.mxu0 0
      %824 = vmatpush.bf16.msra.mxu0 0
      %825 = vmatpush.bf16.msra.mxu0 0
      %826 = vmatpush.bf16.msra.mxu0 0
      %827 = vmatpush.bf16.msra.mxu0 0
      %828 = vmatpush.bf16.msra.mxu0 0
      %829 = vmatpush.bf16.msra.mxu0 0
      %830 = vmatpush.bf16.msra.mxu0 %v821
      %831 = vmatmul.bf16.gmra.mxu0 %v809
      %v832 = vpop.f32.mrf.mxu0
      %v833 = vadd.f32 0.0, %v832
      %v834 = vpop.f32.mrf.mxu0
      %v835 = vadd.f32 0.0, %v834
      %836 = vmatmul.bf16.gmra.mxu0 %v812
      %v837 = vpop.f32.mrf.mxu0
      %v838 = vadd.f32 0.0, %v837
      %v839 = vpop.f32.mrf.mxu0
      %v840 = vadd.f32 0.0, %v839
      %841 = vmatmul.bf16.gmra.mxu0 %v815
      %v842 = vpop.f32.mrf.mxu0
      %v843 = vadd.f32 0.0, %v842
      %v844 = vpop.f32.mrf.mxu0
      %v845 = vadd.f32 0.0, %v844
      %846 = vmatmul.bf16.gmra.mxu0 %v818
      %v847 = vpop.f32.mrf.mxu0
      %v848 = vadd.f32 0.0, %v847
      %v849 = vpop.f32.mrf.mxu0
      %v850 = vadd.f32 0.0, %v849
      %851 = vdwg.mxu0
      %v852 = vadd.f32 %v785, %v833
      %v853 = vadd.f32 %v786, %v835
      %v854 = vadd.f32 %v787, %v838
      %v855 = vadd.f32 %v788, %v840
      %v856 = vadd.f32 %v789, %v843
      %v857 = vadd.f32 %v790, %v845
      %v858 = vadd.f32 %v791, %v848
      %v859 = vadd.f32 %v792, %v850
      %v860 = vld [vmem:[%s793 + $0x8] sm:$0xff]
      %v861 = vld [vmem:[%s793 + $0x20] sm:$0xff]
      %v862 = vld [vmem:[%s793 + $0x38] sm:$0xff]
      %v863 = vld [vmem:[%s793 + $0x50] sm:$0xff]
      %v864 = vld [vmem:[%s793 + $0x68] sm:$0xff]
      %v865 = vld [vmem:[%s793 + $0x80] sm:$0xff]
      %v866 = vld [vmem:[%s793 + $0x98] sm:$0xff]
      %v867 = vld [vmem:[%s793 + $0xb0] sm:$0xff]
      %v868 = vpack.c.bf16 %v861, %v860
      %v869 = vpack.c.bf16 %v863, %v862
      %v870 = vpack.c.bf16 %v865, %v864
      %v871 = vpack.c.bf16 %v867, %v866
      %s872 = scalar_lea.vmem %s320, 28
      %v873 = vld [vmem:[%s872] sm:$0xf]
      %v875 = vsel %vm337, %v868, 0
      %v878 = vsel %vm337, %v869, 0
      %v881 = vsel %vm337, %v870, 0
      %v884 = vsel %vm337, %v871, 0
      %v887 = vsel %vm452, %v873, 0
      %889 = vmatpush.bf16.msra.mxu0 0
      %890 = vmatpush.bf16.msra.mxu0 0
      %891 = vmatpush.bf16.msra.mxu0 0
      %892 = vmatpush.bf16.msra.mxu0 0
      %893 = vmatpush.bf16.msra.mxu0 0
      %894 = vmatpush.bf16.msra.mxu0 0
      %895 = vmatpush.bf16.msra.mxu0 0
      %896 = vmatpush.bf16.msra.mxu0 %v887
      %897 = vmatmul.bf16.gmra.mxu0 %v875
      %v898 = vpop.f32.mrf.mxu0
      %v899 = vadd.f32 0.0, %v898
      %v900 = vpop.f32.mrf.mxu0
      %v901 = vadd.f32 0.0, %v900
      %902 = vmatmul.bf16.gmra.mxu0 %v878
      %v903 = vpop.f32.mrf.mxu0
      %v904 = vadd.f32 0.0, %v903
      %v905 = vpop.f32.mrf.mxu0
      %v906 = vadd.f32 0.0, %v905
      %907 = vmatmul.bf16.gmra.mxu0 %v881
      %v908 = vpop.f32.mrf.mxu0
      %v909 = vadd.f32 0.0, %v908
      %v910 = vpop.f32.mrf.mxu0
      %v911 = vadd.f32 0.0, %v910
      %912 = vmatmul.bf16.gmra.mxu0 %v884
      %v913 = vpop.f32.mrf.mxu0
      %v914 = vadd.f32 0.0, %v913
      %v915 = vpop.f32.mrf.mxu0
      %v916 = vadd.f32 0.0, %v915
      %917 = vdwg.mxu0
      %v918 = vadd.f32 %v852, %v899
      %v919 = vadd.f32 %v853, %v901
      %v920 = vadd.f32 %v854, %v904
      %v921 = vadd.f32 %v855, %v906
      %v922 = vadd.f32 %v856, %v909
      %v923 = vadd.f32 %v857, %v911
      %v924 = vadd.f32 %v858, %v914
      %v925 = vadd.f32 %v859, %v916
      %v926 = vld [vmem:[%s793 + $0x9] sm:$0xff]
      %v927 = vld [vmem:[%s793 + $0x21] sm:$0xff]
      %v928 = vld [vmem:[%s793 + $0x39] sm:$0xff]
      %v929 = vld [vmem:[%s793 + $0x51] sm:$0xff]
      %v930 = vld [vmem:[%s793 + $0x69] sm:$0xff]
      %v931 = vld [vmem:[%s793 + $0x81] sm:$0xff]
      %v932 = vld [vmem:[%s793 + $0x99] sm:$0xff]
      %v933 = vld [vmem:[%s793 + $0xb1] sm:$0xff]
      %v934 = vpack.c.bf16 %v927, %v926
      %v935 = vpack.c.bf16 %v929, %v928
      %v936 = vpack.c.bf16 %v931, %v930
      %v937 = vpack.c.bf16 %v933, %v932
      %s938 = scalar_lea.vmem %s320, 32
      %v939 = vld [vmem:[%s938] sm:$0xf]
      %v941 = vsel %vm337, %v934, 0
      %v944 = vsel %vm337, %v935, 0
      %v947 = vsel %vm337, %v936, 0
      %v950 = vsel %vm337, %v937, 0
      %v953 = vsel %vm452, %v939, 0
      %955 = vmatpush.bf16.msra.mxu0 0
      %956 = vmatpush.bf16.msra.mxu0 0
      %957 = vmatpush.bf16.msra.mxu0 0
      %958 = vmatpush.bf16.msra.mxu0 0
      %959 = vmatpush.bf16.msra.mxu0 0
      %960 = vmatpush.bf16.msra.mxu0 0
      %961 = vmatpush.bf16.msra.mxu0 0
      %962 = vmatpush.bf16.msra.mxu0 %v953
      %963 = vmatmul.bf16.gmra.mxu0 %v941
      %v964 = vpop.f32.mrf.mxu0
      %v965 = vadd.f32 0.0, %v964
      %v966 = vpop.f32.mrf.mxu0
      %v967 = vadd.f32 0.0, %v966
      %968 = vmatmul.bf16.gmra.mxu0 %v944
      %v969 = vpop.f32.mrf.mxu0
      %v970 = vadd.f32 0.0, %v969
      %v971 = vpop.f32.mrf.mxu0
      %v972 = vadd.f32 0.0, %v971
      %973 = vmatmul.bf16.gmra.mxu0 %v947
      %v974 = vpop.f32.mrf.mxu0
      %v975 = vadd.f32 0.0, %v974
      %v976 = vpop.f32.mrf.mxu0
      %v977 = vadd.f32 0.0, %v976
      %978 = vmatmul.bf16.gmra.mxu0 %v950
      %v979 = vpop.f32.mrf.mxu0
      %v980 = vadd.f32 0.0, %v979
      %v981 = vpop.f32.mrf.mxu0
      %v982 = vadd.f32 0.0, %v981
      %983 = vdwg.mxu0
      %v984 = vadd.f32 %v918, %v965
      %v985 = vadd.f32 %v919, %v967
      %v986 = vadd.f32 %v920, %v970
      %v987 = vadd.f32 %v921, %v972
      %v988 = vadd.f32 %v922, %v975
      %v989 = vadd.f32 %v923, %v977
      %v990 = vadd.f32 %v924, %v980
      %v991 = vadd.f32 %v925, %v982
      %v992 = vld [vmem:[%s323] sm:$0x1]
      %v994 = vperm.slane %v992, 0
      %v996 = vmul.f32 %v984, %v994
      %v997 = vmul.f32 %v985, %v994
      %v998 = vmul.f32 %v986, %v994
      %v999 = vmul.f32 %v987, %v994
      %v1000 = vmul.f32 %v988, %v994
      %v1001 = vmul.f32 %v989, %v994
      %v1002 = vmul.f32 %v990, %v994
      %v1003 = vmul.f32 %v991, %v994
      %v1004 = vld [vmem:[%s326] sm:$0x1]
      %v1006 = vperm.slane %v1004, 0
      %v1008 = vadd.f32 %v996, %v1006
      %v1009 = vadd.f32 %v997, %v1006
      %v1010 = vadd.f32 %v998, %v1006
      %v1011 = vadd.f32 %v999, %v1006
      %v1012 = vadd.f32 %v1000, %v1006
      %v1013 = vadd.f32 %v1001, %v1006
      %v1014 = vadd.f32 %v1002, %v1006
      %v1015 = vadd.f32 %v1003, %v1006
      %v1016 = vmax.f32 %v1008, 0.0
      %v1017 = vmax.f32 %v1009, 0.0
      %v1018 = vmax.f32 %v1010, 0.0
      %v1019 = vmax.f32 %v1011, 0.0
      %v1020 = vmax.f32 %v1012, 0.0
      %v1021 = vmax.f32 %v1013, 0.0
      %v1022 = vmax.f32 %v1014, 0.0
      %v1023 = vmax.f32 %v1015, 0.0
      %1024 = vst.msk [vmem:[%s404 + $0x8] sm:$0xff] %vm337, %v1016
      %1025 = vst.msk [vmem:[%s404 + $0x20] sm:$0xff] %vm337, %v1017
      %1026 = vst.msk [vmem:[%s404 + $0x38] sm:$0xff] %vm337, %v1018
      %1027 = vst.msk [vmem:[%s404 + $0x50] sm:$0xff] %vm337, %v1019
      %1028 = vst.msk [vmem:[%s404 + $0x68] sm:$0xff] %vm337, %v1020
      %1029 = vst.msk [vmem:[%s404 + $0x80] sm:$0xff] %vm337, %v1021
      %1030 = vst.msk [vmem:[%s404 + $0x98] sm:$0xff] %vm337, %v1022
      %1031 = vst.msk [vmem:[%s404 + $0xb0] sm:$0xff] %vm337, %v1023
      %v1032 = vld [vmem:[#allocation2 + $0x7] sm:$0xff]
      %v1033 = vld [vmem:[#allocation2 + $0x1f] sm:$0xff]
      %v1034 = vld [vmem:[#allocation2 + $0x37] sm:$0xff]
      %v1035 = vld [vmem:[#allocation2 + $0x4f] sm:$0xff]
      %v1036 = vld [vmem:[#allocation2 + $0x67] sm:$0xff]
      %v1037 = vld [vmem:[#allocation2 + $0x7f] sm:$0xff]
      %v1038 = vld [vmem:[#allocation2 + $0x97] sm:$0xff]
      %v1039 = vld [vmem:[#allocation2 + $0xaf] sm:$0xff]
      %v1040 = vpack.c.bf16 %v1033, %v1032
      %v1041 = vpack.c.bf16 %v1035, %v1034
      %v1042 = vpack.c.bf16 %v1037, %v1036
      %v1043 = vpack.c.bf16 %v1039, %v1038
      %v1044 = vld [vmem:[%s4] sm:$0xf]
      %v1045 = vld [vmem:[#allocation2 + $0x8] sm:$0xff]
      %v1046 = vld [vmem:[#allocation2 + $0x20] sm:$0xff]
      %v1047 = vld [vmem:[#allocation2 + $0x38] sm:$0xff]
      %v1048 = vld [vmem:[#allocation2 + $0x50] sm:$0xff]
      %v1049 = vld [vmem:[#allocation2 + $0x68] sm:$0xff]
      %v1050 = vld [vmem:[#allocation2 + $0x80] sm:$0xff]
      %v1051 = vld [vmem:[#allocation2 + $0x98] sm:$0xff]
      %v1052 = vld [vmem:[#allocation2 + $0xb0] sm:$0xff]
      %v1053 = vpack.c.bf16 %v1046, %v1045
      %v1054 = vpack.c.bf16 %v1048, %v1047
      %v1055 = vpack.c.bf16 %v1050, %v1049
      %v1056 = vpack.c.bf16 %v1052, %v1051
      %s1057 = scalar_lea.vmem %s4, 4
      %v1058 = vld [vmem:[%s1057] sm:$0xf]
      %v1060 = vsel %vm337, %v1053, 0
      %v1063 = vsel %vm337, %v1054, 0
      %v1066 = vsel %vm337, %v1055, 0
      %v1069 = vsel %vm337, %v1056, 0
      %v1072 = vsel %vm452, %v1058, 0
      %1074 = vmatpush.bf16.msra.mxu0 0
      %1075 = vmatpush.bf16.msra.mxu0 0
      %1076 = vmatpush.bf16.msra.mxu0 0
      %1077 = vmatpush.bf16.msra.mxu0 0
      %1078 = vmatpush.bf16.msra.mxu0 0
      %1079 = vmatpush.bf16.msra.mxu0 0
      %1080 = vmatpush.bf16.msra.mxu0 0
      %1081 = vmatpush.bf16.msra.mxu0 %v1072
      %1082 = vmatmul.bf16.gmra.mxu0 %v1060
      %v1083 = vpop.f32.mrf.mxu0
      %v1084 = vadd.f32 0.0, %v1083
      %v1085 = vpop.f32.mrf.mxu0
      %v1086 = vadd.f32 0.0, %v1085
      %1087 = vmatmul.bf16.gmra.mxu0 %v1063
      %v1088 = vpop.f32.mrf.mxu0
      %v1089 = vadd.f32 0.0, %v1088
      %v1090 = vpop.f32.mrf.mxu0
      %v1091 = vadd.f32 0.0, %v1090
      %1092 = vmatmul.bf16.gmra.mxu0 %v1066
      %v1093 = vpop.f32.mrf.mxu0
      %v1094 = vadd.f32 0.0, %v1093
      %v1095 = vpop.f32.mrf.mxu0
      %v1096 = vadd.f32 0.0, %v1095
      %1097 = vmatmul.bf16.gmra.mxu0 %v1069
      %v1098 = vpop.f32.mrf.mxu0
      %v1099 = vadd.f32 0.0, %v1098
      %v1100 = vpop.f32.mrf.mxu0
      %v1101 = vadd.f32 0.0, %v1100
      %1102 = vdwg.mxu0
      %v1104 = vsel %vm337, %v1040, 0
      %v1107 = vsel %vm337, %v1041, 0
      %v1110 = vsel %vm337, %v1042, 0
      %v1113 = vsel %vm337, %v1043, 0
      %v1116 = vsel %vm452, %v1044, 0
      %1118 = vmatpush.bf16.msra.mxu0 0
      %1119 = vmatpush.bf16.msra.mxu0 0
      %1120 = vmatpush.bf16.msra.mxu0 0
      %1121 = vmatpush.bf16.msra.mxu0 0
      %1122 = vmatpush.bf16.msra.mxu0 0
      %1123 = vmatpush.bf16.msra.mxu0 0
      %1124 = vmatpush.bf16.msra.mxu0 0
      %1125 = vmatpush.bf16.msra.mxu0 %v1116
      %1126 = vmatmul.bf16.gmra.mxu0 %v1104
      %v1127 = vpop.f32.mrf.mxu0
      %v1128 = vadd.f32 %v1084, %v1127
      %v1129 = vpop.f32.mrf.mxu0
      %v1130 = vadd.f32 %v1086, %v1129
      %1131 = vmatmul.bf16.gmra.mxu0 %v1107
      %v1132 = vpop.f32.mrf.mxu0
      %v1133 = vadd.f32 %v1089, %v1132
      %v1134 = vpop.f32.mrf.mxu0
      %v1135 = vadd.f32 %v1091, %v1134
      %1136 = vmatmul.bf16.gmra.mxu0 %v1110
      %v1137 = vpop.f32.mrf.mxu0
      %v1138 = vadd.f32 %v1094, %v1137
      %v1139 = vpop.f32.mrf.mxu0
      %v1140 = vadd.f32 %v1096, %v1139
      %1141 = vmatmul.bf16.gmra.mxu0 %v1113
      %v1142 = vpop.f32.mrf.mxu0
      %v1143 = vadd.f32 %v1099, %v1142
      %v1144 = vpop.f32.mrf.mxu0
      %v1145 = vadd.f32 %v1101, %v1144
      %1146 = vdwg.mxu0
      %v1147 = vld [vmem:[#allocation2 + $0x9] sm:$0xff]
      %v1148 = vld [vmem:[#allocation2 + $0x21] sm:$0xff]
      %v1149 = vld [vmem:[#allocation2 + $0x39] sm:$0xff]
      %v1150 = vld [vmem:[#allocation2 + $0x51] sm:$0xff]
      %v1151 = vld [vmem:[#allocation2 + $0x69] sm:$0xff]
      %v1152 = vld [vmem:[#allocation2 + $0x81] sm:$0xff]
      %v1153 = vld [vmem:[#allocation2 + $0x99] sm:$0xff]
      %v1154 = vld [vmem:[#allocation2 + $0xb1] sm:$0xff]
      %v1155 = vpack.c.bf16 %v1148, %v1147
      %v1156 = vpack.c.bf16 %v1150, %v1149
      %v1157 = vpack.c.bf16 %v1152, %v1151
      %v1158 = vpack.c.bf16 %v1154, %v1153
      %s1159 = scalar_lea.vmem %s4, 8
      %v1160 = vld [vmem:[%s1159] sm:$0xf]
      %v1162 = vsel %vm337, %v1155, 0
      %v1165 = vsel %vm337, %v1156, 0
      %v1168 = vsel %vm337, %v1157, 0
      %v1171 = vsel %vm337, %v1158, 0
      %v1174 = vsel %vm452, %v1160, 0
      %1176 = vmatpush.bf16.msra.mxu0 0
      %1177 = vmatpush.bf16.msra.mxu0 0
      %1178 = vmatpush.bf16.msra.mxu0 0
      %1179 = vmatpush.bf16.msra.mxu0 0
      %1180 = vmatpush.bf16.msra.mxu0 0
      %1181 = vmatpush.bf16.msra.mxu0 0
      %1182 = vmatpush.bf16.msra.mxu0 0
      %1183 = vmatpush.bf16.msra.mxu0 %v1174
      %1184 = vmatmul.bf16.gmra.mxu0 %v1162
      %v1185 = vpop.f32.mrf.mxu0
      %v1186 = vadd.f32 0.0, %v1185
      %v1187 = vpop.f32.mrf.mxu0
      %v1188 = vadd.f32 0.0, %v1187
      %1189 = vmatmul.bf16.gmra.mxu0 %v1165
      %v1190 = vpop.f32.mrf.mxu0
      %v1191 = vadd.f32 0.0, %v1190
      %v1192 = vpop.f32.mrf.mxu0
      %v1193 = vadd.f32 0.0, %v1192
      %1194 = vmatmul.bf16.gmra.mxu0 %v1168
      %v1195 = vpop.f32.mrf.mxu0
      %v1196 = vadd.f32 0.0, %v1195
      %v1197 = vpop.f32.mrf.mxu0
      %v1198 = vadd.f32 0.0, %v1197
      %1199 = vmatmul.bf16.gmra.mxu0 %v1171
      %v1200 = vpop.f32.mrf.mxu0
      %v1201 = vadd.f32 0.0, %v1200
      %v1202 = vpop.f32.mrf.mxu0
      %v1203 = vadd.f32 0.0, %v1202
      %1204 = vdwg.mxu0
      %v1205 = vadd.f32 %v1128, %v1186
      %v1206 = vadd.f32 %v1130, %v1188
      %v1207 = vadd.f32 %v1133, %v1191
      %v1208 = vadd.f32 %v1135, %v1193
      %v1209 = vadd.f32 %v1138, %v1196
      %v1210 = vadd.f32 %v1140, %v1198
      %v1211 = vadd.f32 %v1143, %v1201
      %v1212 = vadd.f32 %v1145, %v1203
      %v1213 = vld [vmem:[%s404 + $0x7] sm:$0xff]
      %v1214 = vld [vmem:[%s404 + $0x1f] sm:$0xff]
      %v1215 = vld [vmem:[%s404 + $0x37] sm:$0xff]
      %v1216 = vld [vmem:[%s404 + $0x4f] sm:$0xff]
      %v1217 = vld [vmem:[%s404 + $0x67] sm:$0xff]
      %v1218 = vld [vmem:[%s404 + $0x7f] sm:$0xff]
      %v1219 = vld [vmem:[%s404 + $0x97] sm:$0xff]
      %v1220 = vld [vmem:[%s404 + $0xaf] sm:$0xff]
      %v1221 = vpack.c.bf16 %v1214, %v1213
      %v1222 = vpack.c.bf16 %v1216, %v1215
      %v1223 = vpack.c.bf16 %v1218, %v1217
      %v1224 = vpack.c.bf16 %v1220, %v1219
      %s1225 = scalar_lea.vmem %s4, 12
      %v1226 = vld [vmem:[%s1225] sm:$0xf]
      %v1228 = vsel %vm337, %v1221, 0
      %v1231 = vsel %vm337, %v1222, 0
      %v1234 = vsel %vm337, %v1223, 0
      %v1237 = vsel %vm337, %v1224, 0
      %v1240 = vsel %vm452, %v1226, 0
      %1242 = vmatpush.bf16.msra.mxu0 0
      %1243 = vmatpush.bf16.msra.mxu0 0
      %1244 = vmatpush.bf16.msra.mxu0 0
      %1245 = vmatpush.bf16.msra.mxu0 0
      %1246 = vmatpush.bf16.msra.mxu0 0
      %1247 = vmatpush.bf16.msra.mxu0 0
      %1248 = vmatpush.bf16.msra.mxu0 0
      %1249 = vmatpush.bf16.msra.mxu0 %v1240
      %1250 = vmatmul.bf16.gmra.mxu0 %v1228
      %v1251 = vpop.f32.mrf.mxu0
      %v1252 = vadd.f32 0.0, %v1251
      %v1253 = vpop.f32.mrf.mxu0
      %v1254 = vadd.f32 0.0, %v1253
      %1255 = vmatmul.bf16.gmra.mxu0 %v1231
      %v1256 = vpop.f32.mrf.mxu0
      %v1257 = vadd.f32 0.0, %v1256
      %v1258 = vpop.f32.mrf.mxu0
      %v1259 = vadd.f32 0.0, %v1258
      %1260 = vmatmul.bf16.gmra.mxu0 %v1234
      %v1261 = vpop.f32.mrf.mxu0
      %v1262 = vadd.f32 0.0, %v1261
      %v1263 = vpop.f32.mrf.mxu0
      %v1264 = vadd.f32 0.0, %v1263
      %1265 = vmatmul.bf16.gmra.mxu0 %v1237
      %v1266 = vpop.f32.mrf.mxu0
      %v1267 = vadd.f32 0.0, %v1266
      %v1268 = vpop.f32.mrf.mxu0
      %v1269 = vadd.f32 0.0, %v1268
      %1270 = vdwg.mxu0
      %v1271 = vadd.f32 %v1205, %v1252
      %v1272 = vadd.f32 %v1206, %v1254
      %v1273 = vadd.f32 %v1207, %v1257
      %v1274 = vadd.f32 %v1208, %v1259
      %v1275 = vadd.f32 %v1209, %v1262
      %v1276 = vadd.f32 %v1210, %v1264
      %v1277 = vadd.f32 %v1211, %v1267
      %v1278 = vadd.f32 %v1212, %v1269
      %v1279 = vld [vmem:[%s404 + $0x8] sm:$0xff]
      %v1280 = vld [vmem:[%s404 + $0x20] sm:$0xff]
      %v1281 = vld [vmem:[%s404 + $0x38] sm:$0xff]
      %v1282 = vld [vmem:[%s404 + $0x50] sm:$0xff]
      %v1283 = vld [vmem:[%s404 + $0x68] sm:$0xff]
      %v1284 = vld [vmem:[%s404 + $0x80] sm:$0xff]
      %v1285 = vld [vmem:[%s404 + $0x98] sm:$0xff]
      %v1286 = vld [vmem:[%s404 + $0xb0] sm:$0xff]
      %v1287 = vpack.c.bf16 %v1280, %v1279
      %v1288 = vpack.c.bf16 %v1282, %v1281
      %v1289 = vpack.c.bf16 %v1284, %v1283
      %v1290 = vpack.c.bf16 %v1286, %v1285
      %s1291 = scalar_lea.vmem %s4, 16
      %v1292 = vld [vmem:[%s1291] sm:$0xf]
      %v1294 = vsel %vm337, %v1287, 0
      %v1297 = vsel %vm337, %v1288, 0
      %v1300 = vsel %vm337, %v1289, 0
      %v1303 = vsel %vm337, %v1290, 0
      %v1306 = vsel %vm452, %v1292, 0
      %1308 = vmatpush.bf16.msra.mxu0 0
      %1309 = vmatpush.bf16.msra.mxu0 0
      %1310 = vmatpush.bf16.msra.mxu0 0
      %1311 = vmatpush.bf16.msra.mxu0 0
      %1312 = vmatpush.bf16.msra.mxu0 0
      %1313 = vmatpush.bf16.msra.mxu0 0
      %1314 = vmatpush.bf16.msra.mxu0 0
      %1315 = vmatpush.bf16.msra.mxu0 %v1306
      %1316 = vmatmul.bf16.gmra.mxu0 %v1294
      %v1317 = vpop.f32.mrf.mxu0
      %v1318 = vadd.f32 0.0, %v1317
      %v1319 = vpop.f32.mrf.mxu0
      %v1320 = vadd.f32 0.0, %v1319
      %1321 = vmatmul.bf16.gmra.mxu0 %v1297
      %v1322 = vpop.f32.mrf.mxu0
      %v1323 = vadd.f32 0.0, %v1322
      %v1324 = vpop.f32.mrf.mxu0
      %v1325 = vadd.f32 0.0, %v1324
      %1326 = vmatmul.bf16.gmra.mxu0 %v1300
      %v1327 = vpop.f32.mrf.mxu0
      %v1328 = vadd.f32 0.0, %v1327
      %v1329 = vpop.f32.mrf.mxu0
      %v1330 = vadd.f32 0.0, %v1329
      %1331 = vmatmul.bf16.gmra.mxu0 %v1303
      %v1332 = vpop.f32.mrf.mxu0
      %v1333 = vadd.f32 0.0, %v1332
      %v1334 = vpop.f32.mrf.mxu0
      %v1335 = vadd.f32 0.0, %v1334
      %1336 = vdwg.mxu0
      %v1337 = vadd.f32 %v1271, %v1318
      %v1338 = vadd.f32 %v1272, %v1320
      %v1339 = vadd.f32 %v1273, %v1323
      %v1340 = vadd.f32 %v1274, %v1325
      %v1341 = vadd.f32 %v1275, %v1328
      %v1342 = vadd.f32 %v1276, %v1330
      %v1343 = vadd.f32 %v1277, %v1333
      %v1344 = vadd.f32 %v1278, %v1335
      %v1345 = vld [vmem:[%s404 + $0x9] sm:$0xff]
      %v1346 = vld [vmem:[%s404 + $0x21] sm:$0xff]
      %v1347 = vld [vmem:[%s404 + $0x39] sm:$0xff]
      %v1348 = vld [vmem:[%s404 + $0x51] sm:$0xff]
      %v1349 = vld [vmem:[%s404 + $0x69] sm:$0xff]
      %v1350 = vld [vmem:[%s404 + $0x81] sm:$0xff]
      %v1351 = vld [vmem:[%s404 + $0x99] sm:$0xff]
      %v1352 = vld [vmem:[%s404 + $0xb1] sm:$0xff]
      %v1353 = vpack.c.bf16 %v1346, %v1345
      %v1354 = vpack.c.bf16 %v1348, %v1347
      %v1355 = vpack.c.bf16 %v1350, %v1349
      %v1356 = vpack.c.bf16 %v1352, %v1351
      %s1357 = scalar_lea.vmem %s4, 20
      %v1358 = vld [vmem:[%s1357] sm:$0xf]
      %v1360 = vsel %vm337, %v1353, 0
      %v1363 = vsel %vm337, %v1354, 0
      %v1366 = vsel %vm337, %v1355, 0
      %v1369 = vsel %vm337, %v1356, 0
      %v1372 = vsel %vm452, %v1358, 0
      %1374 = vmatpush.bf16.msra.mxu0 0
      %1375 = vmatpush.bf16.msra.mxu0 0
      %1376 = vmatpush.bf16.msra.mxu0 0
      %1377 = vmatpush.bf16.msra.mxu0 0
      %1378 = vmatpush.bf16.msra.mxu0 0
      %1379 = vmatpush.bf16.msra.mxu0 0
      %1380 = vmatpush.bf16.msra.mxu0 0
      %1381 = vmatpush.bf16.msra.mxu0 %v1372
      %1382 = vmatmul.bf16.gmra.mxu0 %v1360
      %v1383 = vpop.f32.mrf.mxu0
      %v1384 = vadd.f32 0.0, %v1383
      %v1385 = vpop.f32.mrf.mxu0
      %v1386 = vadd.f32 0.0, %v1385
      %1387 = vmatmul.bf16.gmra.mxu0 %v1363
      %v1388 = vpop.f32.mrf.mxu0
      %v1389 = vadd.f32 0.0, %v1388
      %v1390 = vpop.f32.mrf.mxu0
      %v1391 = vadd.f32 0.0, %v1390
      %1392 = vmatmul.bf16.gmra.mxu0 %v1366
      %v1393 = vpop.f32.mrf.mxu0
      %v1394 = vadd.f32 0.0, %v1393
      %v1395 = vpop.f32.mrf.mxu0
      %v1396 = vadd.f32 0.0, %v1395
      %1397 = vmatmul.bf16.gmra.mxu0 %v1369
      %v1398 = vpop.f32.mrf.mxu0
      %v1399 = vadd.f32 0.0, %v1398
      %v1400 = vpop.f32.mrf.mxu0
      %v1401 = vadd.f32 0.0, %v1400
      %1402 = vdwg.mxu0
      %v1403 = vadd.f32 %v1337, %v1384
      %v1404 = vadd.f32 %v1338, %v1386
      %v1405 = vadd.f32 %v1339, %v1389
      %v1406 = vadd.f32 %v1340, %v1391
      %v1407 = vadd.f32 %v1341, %v1394
      %v1408 = vadd.f32 %v1342, %v1396
      %v1409 = vadd.f32 %v1343, %v1399
      %v1410 = vadd.f32 %v1344, %v1401
      %v1411 = vld [vmem:[%s793 + $0x7] sm:$0xff]
      %v1412 = vld [vmem:[%s793 + $0x1f] sm:$0xff]
      %v1413 = vld [vmem:[%s793 + $0x37] sm:$0xff]
      %v1414 = vld [vmem:[%s793 + $0x4f] sm:$0xff]
      %v1415 = vld [vmem:[%s793 + $0x67] sm:$0xff]
      %v1416 = vld [vmem:[%s793 + $0x7f] sm:$0xff]
      %v1417 = vld [vmem:[%s793 + $0x97] sm:$0xff]
      %v1418 = vld [vmem:[%s793 + $0xaf] sm:$0xff]
      %v1419 = vpack.c.bf16 %v1412, %v1411
      %v1420 = vpack.c.bf16 %v1414, %v1413
      %v1421 = vpack.c.bf16 %v1416, %v1415
      %v1422 = vpack.c.bf16 %v1418, %v1417
      %s1423 = scalar_lea.vmem %s4, 24
      %v1424 = vld [vmem:[%s1423] sm:$0xf]
      %v1426 = vsel %vm337, %v1419, 0
      %v1429 = vsel %vm337, %v1420, 0
      %v1432 = vsel %vm337, %v1421, 0
      %v1435 = vsel %vm337, %v1422, 0
      %v1438 = vsel %vm452, %v1424, 0
      %1440 = vmatpush.bf16.msra.mxu0 0
      %1441 = vmatpush.bf16.msra.mxu0 0
      %1442 = vmatpush.bf16.msra.mxu0 0
      %1443 = vmatpush.bf16.msra.mxu0 0
      %1444 = vmatpush.bf16.msra.mxu0 0
      %1445 = vmatpush.bf16.msra.mxu0 0
      %1446 = vmatpush.bf16.msra.mxu0 0
      %1447 = vmatpush.bf16.msra.mxu0 %v1438
      %1448 = vmatmul.bf16.gmra.mxu0 %v1426
      %v1449 = vpop.f32.mrf.mxu0
      %v1450 = vadd.f32 0.0, %v1449
      %v1451 = vpop.f32.mrf.mxu0
      %v1452 = vadd.f32 0.0, %v1451
      %1453 = vmatmul.bf16.gmra.mxu0 %v1429
      %v1454 = vpop.f32.mrf.mxu0
      %v1455 = vadd.f32 0.0, %v1454
      %v1456 = vpop.f32.mrf.mxu0
      %v1457 = vadd.f32 0.0, %v1456
      %1458 = vmatmul.bf16.gmra.mxu0 %v1432
      %v1459 = vpop.f32.mrf.mxu0
      %v1460 = vadd.f32 0.0, %v1459
      %v1461 = vpop.f32.mrf.mxu0
      %v1462 = vadd.f32 0.0, %v1461
      %1463 = vmatmul.bf16.gmra.mxu0 %v1435
      %v1464 = vpop.f32.mrf.mxu0
      %v1465 = vadd.f32 0.0, %v1464
      %v1466 = vpop.f32.mrf.mxu0
      %v1467 = vadd.f32 0.0, %v1466
      %1468 = vdwg.mxu0
      %v1469 = vadd.f32 %v1403, %v1450
      %v1470 = vadd.f32 %v1404, %v1452
      %v1471 = vadd.f32 %v1405, %v1455
      %v1472 = vadd.f32 %v1406, %v1457
      %v1473 = vadd.f32 %v1407, %v1460
      %v1474 = vadd.f32 %v1408, %v1462
      %v1475 = vadd.f32 %v1409, %v1465
      %v1476 = vadd.f32 %v1410, %v1467
      %v1477 = vld [vmem:[%s793 + $0x8] sm:$0xff]
      %v1478 = vld [vmem:[%s793 + $0x20] sm:$0xff]
      %v1479 = vld [vmem:[%s793 + $0x38] sm:$0xff]
      %v1480 = vld [vmem:[%s793 + $0x50] sm:$0xff]
      %v1481 = vld [vmem:[%s793 + $0x68] sm:$0xff]
      %v1482 = vld [vmem:[%s793 + $0x80] sm:$0xff]
      %v1483 = vld [vmem:[%s793 + $0x98] sm:$0xff]
      %v1484 = vld [vmem:[%s793 + $0xb0] sm:$0xff]
      %v1485 = vpack.c.bf16 %v1478, %v1477
      %v1486 = vpack.c.bf16 %v1480, %v1479
      %v1487 = vpack.c.bf16 %v1482, %v1481
      %v1488 = vpack.c.bf16 %v1484, %v1483
      %s1489 = scalar_lea.vmem %s4, 28
      %v1490 = vld [vmem:[%s1489] sm:$0xf]
      %v1492 = vsel %vm337, %v1485, 0
      %v1495 = vsel %vm337, %v1486, 0
      %v1498 = vsel %vm337, %v1487, 0
      %v1501 = vsel %vm337, %v1488, 0
      %v1504 = vsel %vm452, %v1490, 0
      %1506 = vmatpush.bf16.msra.mxu0 0
      %1507 = vmatpush.bf16.msra.mxu0 0
      %1508 = vmatpush.bf16.msra.mxu0 0
      %1509 = vmatpush.bf16.msra.mxu0 0
      %1510 = vmatpush.bf16.msra.mxu0 0
      %1511 = vmatpush.bf16.msra.mxu0 0
      %1512 = vmatpush.bf16.msra.mxu0 0
      %1513 = vmatpush.bf16.msra.mxu0 %v1504
      %1514 = vmatmul.bf16.gmra.mxu0 %v1492
      %v1515 = vpop.f32.mrf.mxu0
      %v1516 = vadd.f32 0.0, %v1515
      %v1517 = vpop.f32.mrf.mxu0
      %v1518 = vadd.f32 0.0, %v1517
      %1519 = vmatmul.bf16.gmra.mxu0 %v1495
      %v1520 = vpop.f32.mrf.mxu0
      %v1521 = vadd.f32 0.0, %v1520
      %v1522 = vpop.f32.mrf.mxu0
      %v1523 = vadd.f32 0.0, %v1522
      %1524 = vmatmul.bf16.gmra.mxu0 %v1498
      %v1525 = vpop.f32.mrf.mxu0
      %v1526 = vadd.f32 0.0, %v1525
      %v1527 = vpop.f32.mrf.mxu0
      %v1528 = vadd.f32 0.0, %v1527
      %1529 = vmatmul.bf16.gmra.mxu0 %v1501
      %v1530 = vpop.f32.mrf.mxu0
      %v1531 = vadd.f32 0.0, %v1530
      %v1532 = vpop.f32.mrf.mxu0
      %v1533 = vadd.f32 0.0, %v1532
      %1534 = vdwg.mxu0
      %v1535 = vadd.f32 %v1469, %v1516
      %v1536 = vadd.f32 %v1470, %v1518
      %v1537 = vadd.f32 %v1471, %v1521
      %v1538 = vadd.f32 %v1472, %v1523
      %v1539 = vadd.f32 %v1473, %v1526
      %v1540 = vadd.f32 %v1474, %v1528
      %v1541 = vadd.f32 %v1475, %v1531
      %v1542 = vadd.f32 %v1476, %v1533
      %v1543 = vld [vmem:[%s793 + $0x9] sm:$0xff]
      %v1544 = vld [vmem:[%s793 + $0x21] sm:$0xff]
      %v1545 = vld [vmem:[%s793 + $0x39] sm:$0xff]
      %v1546 = vld [vmem:[%s793 + $0x51] sm:$0xff]
      %v1547 = vld [vmem:[%s793 + $0x69] sm:$0xff]
      %v1548 = vld [vmem:[%s793 + $0x81] sm:$0xff]
      %v1549 = vld [vmem:[%s793 + $0x99] sm:$0xff]
      %v1550 = vld [vmem:[%s793 + $0xb1] sm:$0xff]
      %v1551 = vpack.c.bf16 %v1544, %v1543
      %v1552 = vpack.c.bf16 %v1546, %v1545
      %v1553 = vpack.c.bf16 %v1548, %v1547
      %v1554 = vpack.c.bf16 %v1550, %v1549
      %s1555 = scalar_lea.vmem %s4, 32
      %v1556 = vld [vmem:[%s1555] sm:$0xf]
      %v1558 = vsel %vm337, %v1551, 0
      %v1561 = vsel %vm337, %v1552, 0
      %v1564 = vsel %vm337, %v1553, 0
      %v1567 = vsel %vm337, %v1554, 0
      %v1570 = vsel %vm452, %v1556, 0
      %1572 = vmatpush.bf16.msra.mxu0 0
      %1573 = vmatpush.bf16.msra.mxu0 0
      %1574 = vmatpush.bf16.msra.mxu0 0
      %1575 = vmatpush.bf16.msra.mxu0 0
      %1576 = vmatpush.bf16.msra.mxu0 0
      %1577 = vmatpush.bf16.msra.mxu0 0
      %1578 = vmatpush.bf16.msra.mxu0 0
      %1579 = vmatpush.bf16.msra.mxu0 %v1570
      %1580 = vmatmul.bf16.gmra.mxu0 %v1558
      %v1581 = vpop.f32.mrf.mxu0
      %v1582 = vadd.f32 0.0, %v1581
      %v1583 = vpop.f32.mrf.mxu0
      %v1584 = vadd.f32 0.0, %v1583
      %1585 = vmatmul.bf16.gmra.mxu0 %v1561
      %v1586 = vpop.f32.mrf.mxu0
      %v1587 = vadd.f32 0.0, %v1586
      %v1588 = vpop.f32.mrf.mxu0
      %v1589 = vadd.f32 0.0, %v1588
      %1590 = vmatmul.bf16.gmra.mxu0 %v1564
      %v1591 = vpop.f32.mrf.mxu0
      %v1592 = vadd.f32 0.0, %v1591
      %v1593 = vpop.f32.mrf.mxu0
      %v1594 = vadd.f32 0.0, %v1593
      %1595 = vmatmul.bf16.gmra.mxu0 %v1567
      %v1596 = vpop.f32.mrf.mxu0
      %v1597 = vadd.f32 0.0, %v1596
      %v1598 = vpop.f32.mrf.mxu0
      %v1599 = vadd.f32 0.0, %v1598
      %1600 = vdwg.mxu0
      %v1601 = vadd.f32 %v1535, %v1582
      %v1602 = vadd.f32 %v1536, %v1584
      %v1603 = vadd.f32 %v1537, %v1587
      %v1604 = vadd.f32 %v1538, %v1589
      %v1605 = vadd.f32 %v1539, %v1592
      %v1606 = vadd.f32 %v1540, %v1594
      %v1607 = vadd.f32 %v1541, %v1597
      %v1608 = vadd.f32 %v1542, %v1599
      %v1609 = vld [vmem:[%s5] sm:$0x1]
      %v1611 = vperm.slane %v1609, 0
      %v1613 = vadd.f32 %v1601, %v1611
      %v1614 = vadd.f32 %v1602, %v1611
      %v1615 = vadd.f32 %v1603, %v1611
      %v1616 = vadd.f32 %v1604, %v1611
      %v1617 = vadd.f32 %v1605, %v1611
      %v1618 = vadd.f32 %v1606, %v1611
      %v1619 = vadd.f32 %v1607, %v1611
      %v1620 = vadd.f32 %v1608, %v1611
      %v1621 = vmax.f32 %v1613, 0.0
      %v1622 = vmax.f32 %v1614, 0.0
      %v1623 = vmax.f32 %v1615, 0.0
      %v1624 = vmax.f32 %v1616, 0.0
      %v1625 = vmax.f32 %v1617, 0.0
      %v1626 = vmax.f32 %v1618, 0.0
      %v1627 = vmax.f32 %v1619, 0.0
      %v1628 = vmax.f32 %v1620, 0.0
      %1629 = vst.msk [vmem:[%s335] sm:$0xff] %vm337, %v1621
      %1630 = vst.msk [vmem:[%s335 + $0x8] sm:$0xff] %vm337, %v1622
      %1631 = vst.msk [vmem:[%s335 + $0x10] sm:$0xff] %vm337, %v1623
      %1632 = vst.msk [vmem:[%s335 + $0x18] sm:$0xff] %vm337, %v1624
      %1633 = vst.msk [vmem:[%s335 + $0x20] sm:$0xff] %vm337, %v1625
      %1634 = vst.msk [vmem:[%s335 + $0x28] sm:$0xff] %vm337, %v1626
      %1635 = vst.msk [vmem:[%s335 + $0x30] sm:$0xff] %vm337, %v1627
      %1636 = vst.msk [vmem:[%s335 + $0x38] sm:$0xff] %vm337, %v1628
      %1637 = vst.msk [vmem:[#allocation3] sm:$0xff] %vm337, %v1621
      %1638 = vst.msk [vmem:[#allocation3 + $0x8] sm:$0xff] %vm337, %v1622
      %1639 = vst.msk [vmem:[#allocation3 + $0x10] sm:$0xff] %vm337, %v1623
      %1640 = vst.msk [vmem:[#allocation3 + $0x18] sm:$0xff] %vm337, %v1624
      %1641 = vst.msk [vmem:[#allocation3 + $0x20] sm:$0xff] %vm337, %v1625
      %1642 = vst.msk [vmem:[#allocation3 + $0x28] sm:$0xff] %vm337, %v1626
      %1643 = vst.msk [vmem:[#allocation3 + $0x30] sm:$0xff] %vm337, %v1627
      %1644 = vst.msk [vmem:[#allocation3 + $0x38] sm:$0xff] %vm337, %v1628
      %p1645 = scmp.lt.s32.totalorder %s22, 3
      %s1646 = scalar_select %p1645, %s22, 3
      %p1647 = scmp.lt.s32.totalorder %s21, 1
      %s1648 = scalar_select %p1647, %s21, 1
      %s1649 = smul.addr %s1648, 8
      %s1650 = smul.addr %s1646, 16
      %s1651 = sadd.s32 %s1649, %s1650
      %s1652 = smul.addr %s1651, 8
      %s1653 = scalar_lea.vmem %s6, %s1652
      // Predicated region
      $region49: #{ms_coder_forward.4} parent=43 // pred_check
        %p1654 = pneg %p197
      $region50: #{ms_coder_forward.4} parent=43 // pred_check_branch
        %1656 = sbr.rel (%p1654) target = $region52
      $region51: #{ms_coder_forward.4} parent=43 // pred_region
        _
      $region52: #{ms_coder_forward.4} parent=43 // pred_fallthru
        _
    $region44: #{ms_coder_forward.4} parent=5 // pred_fallthru
      _
    %p1657 = scmp.le.s32.totalorder 2, %s12
    // Predicated region
    $region53: #{ms_coder_forward.4} parent=5 // pred_check
      %p1658 = pneg %p1657
    $region54: #{ms_coder_forward.4} parent=5 // pred_check_branch
      %1660 = sbr.rel (%p1658) target = $region56
    $region55: #{ms_coder_forward.4} parent=5 // pred_region
      %s1661 = ssub.s32 %s12, 2
      // Predicated region
      $region57: #{ms_coder_forward.4} parent=55 // pred_check
        %p1662 = pneg %p203
      $region58: #{ms_coder_forward.4} parent=55 // pred_check_branch
        %1664 = sbr.rel (%p1662) target = $region60
      $region59: #{ms_coder_forward.4} parent=55 // pred_region
        %p1665 = scmp.lt.s32.totalorder %s24, 3
        %s1666 = scalar_select %p1665, %s24, 3
        %p1667 = scmp.lt.s32.totalorder %s23, 1
        %s1668 = scalar_select %p1667, %s23, 1
        %s1669 = smul.addr %s1668, 8
        %s1670 = smul.addr %s1666, 16
        %s1671 = sadd.s32 %s1669, %s1670
        %s1672 = smul.addr %s1671, 8
        %s1673 = scalar_lea.vmem %s6, %s1672
      $region60: #{ms_coder_forward.4} parent=55 // pred_fallthru
        _
    $region56: #{ms_coder_forward.4} parent=5 // pred_fallthru
      _
  $region6: #{ms_coder_forward.4} parent=0 // loop_footer
    %s16 = sadd.s32 1, %s12
  $region7: #{ms_coder_forward.4} parent=0 // loop_footer_branch
    %11 = sbr.rel target = $region3
  $region8: #{ms_coder_forward.4} parent=0 // loop_exit
    _

</llo_original>
